<compile_context>
chip_gen: v7x
topology: tpu7x:2x2x1
jax: 0.10.0
libtpu: 0.0.40
codegen_flags: <defaults>
</compile_context>

<pallas_src>
import functools

import jax
import jax.numpy as jnp
from jax import lax
from jax.experimental import pallas as pl
from jax.experimental.pallas import tpu as pltpu


_BATCH_PAD = 8   # padded (sublane-aligned) batch baked into the kernel layout


# ----------------------------------------------------------------------------
# Fused Pallas kernel
# ----------------------------------------------------------------------------

def _fused_forward_kernel(ids_ref, mask_ref, emb_ref,
                          wih1_ref, whh1_ref, b1_ref,
                          wih2_ref, whh2_ref, b2_ref,
                          gamma_ref, beta_ref, clsw_ref, clsb_ref,
                          out_ref, seq1_ref, seq2_ref):
    """Whole forward pass, time-major flat layout (row n = t*BP + b).

    ids_ref:   (T*BP, 1) int32    token ids (padded batch rows are 0)
    mask_ref:  (T*BP, 1) f32      attention mask (padded batch rows are 0)
    emb_ref:   (V, E)             embedding table
    wih*_ref:  (D_in, 8H)         packed input->gate weights, gate order
                                  [i, f, o, g], each gate block = [fwd H|bwd H]
    whh*_ref:  (2H, 8H)           packed block-diag hidden->gate weights
    b*_ref:    (1, 8H)            packed bias (b_ih + b_hh)
    gamma/beta:(1, 2H)            LayerNorm affine
    clsw_ref:  (2H, LP), clsb_ref:(1, LP)   classifier, lane-padded to LP
    out_ref:   (T*BP, LP)         padded logits
    seq*_ref:  (T*BP, 2H) VMEM scratch -- per-step packed hidden states
    """
    TB = ids_ref.shape[0]
    V = emb_ref.shape[0]
    G = whh1_ref.shape[1]          # 8H  (4 gates x 2 directions x H)
    H2 = G // 4                    # 2H
    H = H2 // 2
    BP = _BATCH_PAD
    T = TB // BP

    # ---- embedding gather (one-hot matmul on the VMEM table) + mask ----
    ids = ids_ref[...]                                            # (TB, 1)
    vocab_iota = lax.broadcasted_iota(jnp.int32, (TB, V), 1)
    onehot = (vocab_iota == ids).astype(jnp.float32)              # (TB, V)
    x = jnp.dot(onehot, emb_ref[...],
                preferred_element_type=jnp.float32)               # (TB, E)
    x = x * mask_ref[...]                                         # mask
    # SpatialDropout(p=0.1) / inter-layer LSTM dropout: identity in eval mode.

    # Hoisted static lane masks: within each 2H gate block, lanes [0,H) are
    # forward, lanes [H,2H) are backward.
    lane_g = lax.broadcasted_iota(jnp.int32, (1, G), 1)
    is_fwd_g = (lane_g % H2) < H                                  # (1, 8H)
    lane_h = lax.broadcasted_iota(jnp.int32, (1, H2), 1)
    is_fwd_h = lane_h < H                                         # (1, 2H)

    def time_reverse(v):
        # Reverse the T-blocks of BP rows (sublane-aligned static slices).
        return jnp.concatenate(
            [v[(T - 1 - t) * BP:(T - t) * BP, :] for t in range(T)], axis=0)

    def bilstm_layer(x_flat, wih_ref, whh_ref, b_ref, seq_ref):
        # Hoisted input projection (+ folded bias): all timesteps, both
        # directions, one matmul.
        xp = (jnp.dot(x_flat, wih_ref[...],
                      preferred_element_type=jnp.float32)
              + b_ref[...])                                       # (TB, 8H)
        # Hoisted fwd/bwd time selection: fwd lanes read time t, bwd lanes
        # read time T-1-t; build the whole selected tile once.
        xp_bi = jnp.where(is_fwd_g, xp, time_reverse(xp))         # (TB, 8H)
        whh = whh_ref[...]                                        # (2H, 8H)

        h = jnp.zeros((BP, H2), jnp.float32)   # [h_fwd | h_bwd]
        c = jnp.zeros((BP, H2), jnp.float32)   # [c_fwd | c_bwd]
        for t in range(T):                     # T is static -> fully unrolled
            x_t = xp_bi[t * BP:(t + 1) * BP, :]                   # aligned (BP, 8H)
            gates = x_t + jnp.dot(h, whh,
                                  preferred_element_type=jnp.float32)
            sig = jax.nn.sigmoid(gates[:, :3 * H2])   # gate order [i, f, o, g]
            i_g = sig[:, 0 * H2:1 * H2]
            f_g = sig[:, 1 * H2:2 * H2]
            o_g = sig[:, 2 * H2:3 * H2]
            g_g = jnp.tanh(gates[:, 3 * H2:4 * H2])
            c = f_g * c + i_g * g_g
            h = o_g * jnp.tanh(c)
            seq_ref[t * BP:(t + 1) * BP, :] = h    # aligned scratch store

        # Assemble layer output: fwd lanes are in time order already; bwd
        # lanes were produced in reversed time order -> one reverse + select.
        S = seq_ref[...]                                          # (TB, 2H)
        return jnp.where(is_fwd_h, S, time_reverse(S))            # (TB, 2H)

    h1 = bilstm_layer(x, wih1_ref, whh1_ref, b1_ref, seq1_ref)
    h2 = bilstm_layer(h1, wih2_ref, whh2_ref, b2_ref, seq2_ref)

    # ---- LayerNorm(2H) + Linear(2H -> LP) ----
    mean = jnp.mean(h2, axis=-1, keepdims=True)
    var = jnp.mean((h2 - mean) ** 2, axis=-1, keepdims=True)
    xn = (h2 - mean) * lax.rsqrt(var + 1e-5)          # torch LayerNorm eps
    y = xn * gamma_ref[...] + beta_ref[...]
    out_ref[...] = (jnp.dot(y, clsw_ref[...],
                            preferred_element_type=jnp.float32)
                    + clsb_ref[...])


# ----------------------------------------------------------------------------
# Wrapper
# ----------------------------------------------------------------------------

def _full_spec(shape):
    # whole-array block (full-extent exemption from the (8,128) rule)
    return pl.BlockSpec(shape, lambda i, n=len(shape): (0,) * n)


@functools.partial(jax.jit, static_argnames=("num_labels",))
def model_forward(input_ids, input_mask, params, *, num_labels):
    """Equivalent of BiLstmCRFModel.forward (inference mode)."""
    B, T = input_ids.shape
    BP = _BATCH_PAD
    assert B <= BP
    TB = T * BP

    # Time-major layout, batch padded to BP sublanes (padded rows: id=0, mask=0).
    ids_tm = jnp.zeros((T, BP), jnp.int32).at[:, :B].set(
        input_ids.T.astype(jnp.int32))
    mask_tm = jnp.zeros((T, BP), jnp.float32).at[:, :B].set(
        input_mask.T.astype(jnp.float32))
    ids_flat = ids_tm.reshape(TB, 1)
    mask_flat = mask_tm.reshape(TB, 1)

    p = params
    V, E = p["embedding"].shape
    G = p["whh1"].shape[1]                 # 8H
    H2 = G // 4
    LP = p["cls_w"].shape[1]               # lane-padded label width

    out = pl.pallas_call(
        _fused_forward_kernel,
        grid=(1,),
        in_specs=[_full_spec((TB, 1)),
                  _full_spec((TB, 1)),
                  _full_spec((V, E)),
                  _full_spec((E, G)),
                  _full_spec((H2, G)),
                  _full_spec((1, G)),
                  _full_spec((H2, G)),
                  _full_spec((H2, G)),
                  _full_spec((1, G)),
                  _full_spec((1, H2)),
                  _full_spec((1, H2)),
                  _full_spec((H2, LP)),
                  _full_spec((1, LP))],
        out_specs=_full_spec((TB, LP)),
        out_shape=jax.ShapeDtypeStruct((TB, LP), jnp.float32),
        scratch_shapes=[pltpu.VMEM((TB, H2), jnp.float32),
                        pltpu.VMEM((TB, H2), jnp.float32)],
        compiler_params=pltpu.CompilerParams(
            dimension_semantics=("arbitrary",)),
    )(ids_flat, mask_flat, p["embedding"],
      p["wih1"], p["whh1"], p["b1"],
      p["wih2"], p["whh2"], p["b2"],
      p["ln_gamma"], p["ln_beta"], p["cls_w"], p["cls_b"])

    # Drop padded batch rows / padded label lanes; -> (B, T, L)
    out = out.reshape(T, BP, LP)[:, :B, :num_labels]
    return out.transpose(1, 0, 2)


# ----------------------------------------------------------------------------
# Parameter construction + packing into the fused layout
# ----------------------------------------------------------------------------

def _pack_bidir(wih_f, whh_f, b_f, wih_b, whh_b, b_b, H):
    """Pack one bidirectional LSTM layer into the fused kernel layout.

    Inputs are in PyTorch layout (D_in, 4H) / (H, 4H) / (1, 4H), gate order
    [i, f, g, o].  Output columns are 4 gate blocks of width 2H in KERNEL gate
    order [i, f, o, g]; each block = [fwd H | bwd H]; W_hh is block-diagonal
    over directions.
    """
    D = wih_f.shape[0]
    G = 8 * H
    # kernel gate k -> pytorch gate column block
    src = [0, 1, 3, 2]                     # i, f, o, g  <-  i, f, g, o
    wih = jnp.zeros((D, G), jnp.float32)
    whh = jnp.zeros((2 * H, G), jnp.float32)
    b = jnp.zeros((1, G), jnp.float32)
    for k in range(4):
        s = src[k]
        c0 = k * 2 * H
        wih = wih.at[:, c0:c0 + H].set(wih_f[:, s * H:(s + 1) * H])
        wih = wih.at[:, c0 + H:c0 + 2 * H].set(wih_b[:, s * H:(s + 1) * H])
        whh = whh.at[0:H, c0:c0 + H].set(whh_f[:, s * H:(s + 1) * H])
        whh = whh.at[H:2 * H, c0 + H:c0 + 2 * H].set(whh_b[:, s * H:(s + 1) * H])
        b = b.at[:, c0:c0 + H].set(b_f[:, s * H:(s + 1) * H])
        b = b.at[:, c0 + H:c0 + 2 * H].set(b_b[:, s * H:(s + 1) * H])
    return wih, whh, b


def make_params(key, vocab_size, embedding_size, hidden_size, num_labels):
    keys = jax.random.split(key, 32)
    ki = iter(keys)
    u = lambda k, shape, s: jax.random.uniform(k, shape, jnp.float32, -s, s)

    H = hidden_size
    params = {"embedding": jax.random.normal(next(ki),
                                             (vocab_size, embedding_size),
                                             jnp.float32)}

    in_dim = embedding_size
    scale = 1.0 / jnp.sqrt(H).item()
    for layer in (1, 2):
        wih_f = u(next(ki), (in_dim, 4 * H), scale)
        whh_f = u(next(ki), (H, 4 * H), scale)
        b_f = u(next(ki), (1, 4 * H), scale)      # b_ih + b_hh combined
        wih_b = u(next(ki), (in_dim, 4 * H), scale)
        whh_b = u(next(ki), (H, 4 * H), scale)
        b_b = u(next(ki), (1, 4 * H), scale)
        wih, whh, b = _pack_bidir(wih_f, whh_f, b_f, wih_b, whh_b, b_b, H)
        params[f"wih{layer}"] = wih
        params[f"whh{layer}"] = whh
        params[f"b{layer}"] = b
        in_dim = 2 * H

    params["ln_gamma"] = jnp.ones((1, 2 * H), jnp.float32)
    params["ln_beta"] = jnp.zeros((1, 2 * H), jnp.float32)

    # Classifier, lane-padded to a multiple of 128 for an unmasked final store.
    LP = ((num_labels + 127) // 128) * 128
    cls_scale = 1.0 / jnp.sqrt(2 * H).item()
    cls_w = u(next(ki), (2 * H, num_labels), cls_scale)
    cls_b = u(next(ki), (1, num_labels), cls_scale)
    params["cls_w"] = jnp.zeros((2 * H, LP), jnp.float32).at[:, :num_labels].set(cls_w)
    params["cls_b"] = jnp.zeros((1, LP), jnp.float32).at[:, :num_labels].set(cls_b)
    return params


# ----------------------------------------------------------------------------
# Main
# ----------------------------------------------------------------------------

if __name__ == "__main__":
    vocab_size = 50
    embedding_size = 16
    hidden_size = 32
    label2id = ["O", "B-PER", "I-PER", "B-LOC", "I-LOC", "B-ORG", "I-ORG",
                "B-MISC", "I-MISC"]
    num_labels = len(label2id)
    batch, seq_len = 2, 8

    key = jax.random.PRNGKey(0)
    k_params, k_ids = jax.random.split(key)

    params = make_params(k_params, vocab_size, embedding_size, hidden_size,
                         num_labels)

    input_ids = jax.random.randint(k_ids, (batch, seq_len), 0, vocab_size,
                                   dtype=jnp.int32)
    input_mask = jnp.ones((batch, seq_len), jnp.int32)
    input_mask = input_mask.at[1, 6:].set(0)  # second sequence padded

    features = model_forward(input_ids, input_mask, params,
                             num_labels=num_labels)
    features = jax.block_until_ready(features)

    assert features.shape == (batch, seq_len, num_labels)
    assert features.dtype == jnp.float32
    assert bool(jnp.all(jnp.isfinite(features)))
    print("KERNEL_OK")
</pallas_src>

<mosaic_0001>
module attributes {stable_mosaic.version = 11 : i64} {
  func.func @_fused_forward_kernel(%arg0: i32, %arg1: memref<64x1xi32, #tpu.memory_space<vmem>>, %arg2: memref<64x1xf32, #tpu.memory_space<vmem>>, %arg3: memref<50x16xf32, #tpu.memory_space<vmem>>, %arg4: memref<16x256xf32, #tpu.memory_space<vmem>>, %arg5: memref<64x256xf32, #tpu.memory_space<vmem>>, %arg6: memref<1x256xf32, #tpu.memory_space<vmem>>, %arg7: memref<64x256xf32, #tpu.memory_space<vmem>>, %arg8: memref<64x256xf32, #tpu.memory_space<vmem>>, %arg9: memref<1x256xf32, #tpu.memory_space<vmem>>, %arg10: memref<1x64xf32, #tpu.memory_space<vmem>>, %arg11: memref<1x64xf32, #tpu.memory_space<vmem>>, %arg12: memref<64x128xf32, #tpu.memory_space<vmem>>, %arg13: memref<1x128xf32, #tpu.memory_space<vmem>>, %arg14: memref<64x128xf32, #tpu.memory_space<vmem>>, %arg15: memref<64x64xf32, #tpu.memory_space<vmem>>, %arg16: memref<64x64xf32, #tpu.memory_space<vmem>>) attributes {dimension_semantics = [#tpu.dimension_semantics<arbitrary>], iteration_bounds = array<i64: 1>, scalar_prefetch = 0 : i64, scratch_operands = 2 : i64, tpu.core_type = #tpu.core_type<tc>, window_params = [{pipeline_mode = #tpu.pipeline_mode<synchronous>, transform_indices = @transform_0, window_bounds = array<i64: 64, 1>}, {pipeline_mode = #tpu.pipeline_mode<synchronous>, transform_indices = @transform_1, window_bounds = array<i64: 64, 1>}, {pipeline_mode = #tpu.pipeline_mode<synchronous>, transform_indices = @transform_2, window_bounds = array<i64: 50, 16>}, {pipeline_mode = #tpu.pipeline_mode<synchronous>, transform_indices = @transform_3, window_bounds = array<i64: 16, 256>}, {pipeline_mode = #tpu.pipeline_mode<synchronous>, transform_indices = @transform_4, window_bounds = array<i64: 64, 256>}, {pipeline_mode = #tpu.pipeline_mode<synchronous>, transform_indices = @transform_5, window_bounds = array<i64: 1, 256>}, {pipeline_mode = #tpu.pipeline_mode<synchronous>, transform_indices = @transform_6, window_bounds = array<i64: 64, 256>}, {pipeline_mode = #tpu.pipeline_mode<synchronous>, transform_indices = @transform_7, window_bounds = array<i64: 64, 256>}, {pipeline_mode = #tpu.pipeline_mode<synchronous>, transform_indices = @transform_8, window_bounds = array<i64: 1, 256>}, {pipeline_mode = #tpu.pipeline_mode<synchronous>, transform_indices = @transform_9, window_bounds = array<i64: 1, 64>}, {pipeline_mode = #tpu.pipeline_mode<synchronous>, transform_indices = @transform_10, window_bounds = array<i64: 1, 64>}, {pipeline_mode = #tpu.pipeline_mode<synchronous>, transform_indices = @transform_11, window_bounds = array<i64: 64, 128>}, {pipeline_mode = #tpu.pipeline_mode<synchronous>, transform_indices = @transform_12, window_bounds = array<i64: 1, 128>}, {pipeline_mode = #tpu.pipeline_mode<synchronous>, transform_indices = @transform_13, window_bounds = array<i64: 64, 128>}]} {
    %c0 = arith.constant 0 : index
    %c0_0 = arith.constant 0 : index
    %0 = vector.load %arg1[%c0, %c0_0] : memref<64x1xi32, #tpu.memory_space<vmem>>, vector<64x1xi32>
    %1 = tpu.iota {dimensions = array<i32: 1>} : vector<64x50xi32>
    %2 = vector.broadcast %0 : vector<64x1xi32> to vector<64x50xi32>
    %3 = arith.cmpi eq, %1, %2 : vector<64x50xi32>
    %4 = arith.extui %3 : vector<64x50xi1> to vector<64x50xi32>
    %5 = arith.sitofp %4 : vector<64x50xi32> to vector<64x50xf32>
    %c0_1 = arith.constant 0 : index
    %c0_2 = arith.constant 0 : index
    %6 = vector.load %arg3[%c0_1, %c0_2] : memref<50x16xf32, #tpu.memory_space<vmem>>, vector<50x16xf32>
    %cst = arith.constant dense<0.000000e+00> : vector<64x16xf32>
    %7 = tpu.matmul %5, %6, %cst {dimension_numbers = #tpu.dot_dimension_numbers<[1], [0], [0], [1], [0, 0, 1, 1], [], []>} : vector<64x50xf32>, vector<50x16xf32>, vector<64x16xf32> -> vector<64x16xf32>
    %c0_3 = arith.constant 0 : index
    %c0_4 = arith.constant 0 : index
    %8 = vector.load %arg2[%c0_3, %c0_4] : memref<64x1xf32, #tpu.memory_space<vmem>>, vector<64x1xf32>
    %9 = vector.broadcast %8 : vector<64x1xf32> to vector<64x16xf32>
    %10 = arith.mulf %7, %9 : vector<64x16xf32>
    %11 = tpu.iota {dimensions = array<i32: 1>} : vector<1x256xi32>
    %c64_i32 = arith.constant 64 : i32
    %c0_i32 = arith.constant 0 : i32
    %12 = arith.cmpi eq, %c64_i32, %c0_i32 : i32
    %c1_i32 = arith.constant 1 : i32
    %13 = arith.select %12, %c1_i32, %c64_i32 : i32
    %14 = vector.broadcast %13 : i32 to vector<1x256xi32>
    %15 = arith.remsi %11, %14 : vector<1x256xi32>
    %c0_i32_5 = arith.constant 0 : i32
    %16 = vector.broadcast %c0_i32_5 : i32 to vector<1x256xi32>
    %17 = arith.cmpi ne, %15, %16 : vector<1x256xi32>
    %c0_i32_6 = arith.constant 0 : i32
    %18 = vector.broadcast %c0_i32_6 : i32 to vector<1x256xi32>
    %19 = arith.cmpi slt, %15, %18 : vector<1x256xi32>
    %c0_i32_7 = arith.constant 0 : i32
    %20 = arith.cmpi slt, %13, %c0_i32_7 : i32
    %21 = vector.broadcast %20 : i1 to vector<1x256xi1>
    %22 = vector.broadcast %21 : vector<1x256xi1> to vector<1x256xi1>
    %23 = arith.xori %19, %22 : vector<1x256xi1>
    %24 = arith.andi %23, %17 : vector<1x256xi1>
    %25 = vector.broadcast %13 : i32 to vector<1x256xi32>
    %26 = arith.addi %15, %25 : vector<1x256xi32>
    %27 = arith.select %24, %26, %15 : vector<1x256xi1>, vector<1x256xi32>
    %c32_i32 = arith.constant 32 : i32
    %28 = vector.broadcast %c32_i32 : i32 to vector<1x256xi32>
    %29 = arith.cmpi slt, %27, %28 : vector<1x256xi32>
    %30 = tpu.iota {dimensions = array<i32: 1>} : vector<1x64xi32>
    %c32_i32_8 = arith.constant 32 : i32
    %31 = vector.broadcast %c32_i32_8 : i32 to vector<1x64xi32>
    %32 = arith.cmpi slt, %30, %31 : vector<1x64xi32>
    %c0_9 = arith.constant 0 : index
    %c0_10 = arith.constant 0 : index
    %33 = vector.load %arg4[%c0_9, %c0_10] : memref<16x256xf32, #tpu.memory_space<vmem>>, vector<16x256xf32>
    %cst_11 = arith.constant dense<0.000000e+00> : vector<64x256xf32>
    %34 = tpu.matmul %10, %33, %cst_11 {dimension_numbers = #tpu.dot_dimension_numbers<[1], [0], [0], [1], [0, 0, 1, 1], [], []>} : vector<64x16xf32>, vector<16x256xf32>, vector<64x256xf32> -> vector<64x256xf32>
    %c0_12 = arith.constant 0 : index
    %c0_13 = arith.constant 0 : index
    %35 = vector.load %arg6[%c0_12, %c0_13] : memref<1x256xf32, #tpu.memory_space<vmem>>, vector<1x256xf32>
    %36 = vector.broadcast %35 : vector<1x256xf32> to vector<64x256xf32>
    %37 = arith.addf %34, %36 : vector<64x256xf32>
    %38 = vector.extract_strided_slice %37 {offsets = [56, 0], sizes = [8, 256], strides = [1, 1]} : vector<64x256xf32> to vector<8x256xf32>
    %39 = vector.extract_strided_slice %37 {offsets = [48, 0], sizes = [8, 256], strides = [1, 1]} : vector<64x256xf32> to vector<8x256xf32>
    %40 = vector.extract_strided_slice %37 {offsets = [40, 0], sizes = [8, 256], strides = [1, 1]} : vector<64x256xf32> to vector<8x256xf32>
    %41 = vector.extract_strided_slice %37 {offsets = [32, 0], sizes = [8, 256], strides = [1, 1]} : vector<64x256xf32> to vector<8x256xf32>
    %42 = vector.extract_strided_slice %37 {offsets = [24, 0], sizes = [8, 256], strides = [1, 1]} : vector<64x256xf32> to vector<8x256xf32>
    %43 = vector.extract_strided_slice %37 {offsets = [16, 0], sizes = [8, 256], strides = [1, 1]} : vector<64x256xf32> to vector<8x256xf32>
    %44 = vector.extract_strided_slice %37 {offsets = [8, 0], sizes = [8, 256], strides = [1, 1]} : vector<64x256xf32> to vector<8x256xf32>
    %45 = vector.extract_strided_slice %37 {offsets = [0, 0], sizes = [8, 256], strides = [1, 1]} : vector<64x256xf32> to vector<8x256xf32>
    %46 = tpu.concatenate %38, %39, %40, %41, %42, %43, %44, %45 in 0 : vector<8x256xf32>, vector<8x256xf32>, vector<8x256xf32>, vector<8x256xf32>, vector<8x256xf32>, vector<8x256xf32>, vector<8x256xf32>, vector<8x256xf32> -> vector<64x256xf32>
    %47 = vector.shape_cast %29 : vector<1x256xi1> to vector<1x256xi1>
    %48 = vector.broadcast %47 : vector<1x256xi1> to vector<64x256xi1>
    %49 = arith.select %48, %37, %46 : vector<64x256xi1>, vector<64x256xf32>
    %c0_14 = arith.constant 0 : index
    %c0_15 = arith.constant 0 : index
    %50 = vector.load %arg5[%c0_14, %c0_15] : memref<64x256xf32, #tpu.memory_space<vmem>>, vector<64x256xf32>
    %cst_16 = arith.constant 0.000000e+00 : f32
    %51 = vector.broadcast %cst_16 : f32 to vector<8x64xf32>
    %cst_17 = arith.constant 0.000000e+00 : f32
    %52 = vector.broadcast %cst_17 : f32 to vector<8x64xf32>
    %53 = vector.extract_strided_slice %49 {offsets = [0, 0], sizes = [8, 256], strides = [1, 1]} : vector<64x256xf32> to vector<8x256xf32>
    %cst_18 = arith.constant dense<0.000000e+00> : vector<8x256xf32>
    %54 = tpu.matmul %51, %50, %cst_18 {dimension_numbers = #tpu.dot_dimension_numbers<[1], [0], [0], [1], [0, 0, 1, 1], [], []>} : vector<8x64xf32>, vector<64x256xf32>, vector<8x256xf32> -> vector<8x256xf32>
    %55 = arith.addf %53, %54 : vector<8x256xf32>
    %56 = vector.extract_strided_slice %55 {offsets = [0, 0], sizes = [8, 192], strides = [1, 1]} : vector<8x256xf32> to vector<8x192xf32>
    %57 = arith.negf %56 : vector<8x192xf32>
    %58 = math.exp %57 : vector<8x192xf32>
    %cst_19 = arith.constant 1.000000e+00 : f32
    %59 = vector.broadcast %cst_19 : f32 to vector<8x192xf32>
    %60 = arith.addf %59, %58 : vector<8x192xf32>
    %61 = arith.divf %59, %60 : vector<8x192xf32>
    %62 = vector.extract_strided_slice %61 {offsets = [0, 0], sizes = [8, 64], strides = [1, 1]} : vector<8x192xf32> to vector<8x64xf32>
    %63 = vector.extract_strided_slice %61 {offsets = [0, 64], sizes = [8, 64], strides = [1, 1]} : vector<8x192xf32> to vector<8x64xf32>
    %64 = vector.extract_strided_slice %61 {offsets = [0, 128], sizes = [8, 64], strides = [1, 1]} : vector<8x192xf32> to vector<8x64xf32>
    %65 = vector.extract_strided_slice %55 {offsets = [0, 192], sizes = [8, 64], strides = [1, 1]} : vector<8x256xf32> to vector<8x64xf32>
    %66 = math.tanh %65 : vector<8x64xf32>
    %67 = arith.mulf %63, %52 : vector<8x64xf32>
    %68 = arith.mulf %62, %66 : vector<8x64xf32>
    %69 = arith.addf %67, %68 : vector<8x64xf32>
    %70 = math.tanh %69 : vector<8x64xf32>
    %71 = arith.mulf %64, %70 : vector<8x64xf32>
    %c0_20 = arith.constant 0 : index
    %c0_21 = arith.constant 0 : index
    %72 = vector.load %arg15[%c0_20, %c0_21] : memref<64x64xf32, #tpu.memory_space<vmem>>, vector<8x64xf32>
    tpu.vector_store %arg15[%c0_20, %c0_21], %71 {strides = array<i32>} : memref<64x64xf32, #tpu.memory_space<vmem>>, vector<8x64xf32>,
    %73 = vector.extract_strided_slice %49 {offsets = [8, 0], sizes = [8, 256], strides = [1, 1]} : vector<64x256xf32> to vector<8x256xf32>
    %cst_22 = arith.constant dense<0.000000e+00> : vector<8x256xf32>
    %74 = tpu.matmul %71, %50, %cst_22 {dimension_numbers = #tpu.dot_dimension_numbers<[1], [0], [0], [1], [0, 0, 1, 1], [], []>} : vector<8x64xf32>, vector<64x256xf32>, vector<8x256xf32> -> vector<8x256xf32>
    %75 = arith.addf %73, %74 : vector<8x256xf32>
    %76 = vector.extract_strided_slice %75 {offsets = [0, 0], sizes = [8, 192], strides = [1, 1]} : vector<8x256xf32> to vector<8x192xf32>
    %77 = arith.negf %76 : vector<8x192xf32>
    %78 = math.exp %77 : vector<8x192xf32>
    %cst_23 = arith.constant 1.000000e+00 : f32
    %79 = vector.broadcast %cst_23 : f32 to vector<8x192xf32>
    %80 = arith.addf %79, %78 : vector<8x192xf32>
    %81 = arith.divf %79, %80 : vector<8x192xf32>
    %82 = vector.extract_strided_slice %81 {offsets = [0, 0], sizes = [8, 64], strides = [1, 1]} : vector<8x192xf32> to vector<8x64xf32>
    %83 = vector.extract_strided_slice %81 {offsets = [0, 64], sizes = [8, 64], strides = [1, 1]} : vector<8x192xf32> to vector<8x64xf32>
    %84 = vector.extract_strided_slice %81 {offsets = [0, 128], sizes = [8, 64], strides = [1, 1]} : vector<8x192xf32> to vector<8x64xf32>
    %85 = vector.extract_strided_slice %75 {offsets = [0, 192], sizes = [8, 64], strides = [1, 1]} : vector<8x256xf32> to vector<8x64xf32>
    %86 = math.tanh %85 : vector<8x64xf32>
    %87 = arith.mulf %83, %69 : vector<8x64xf32>
    %88 = arith.mulf %82, %86 : vector<8x64xf32>
    %89 = arith.addf %87, %88 : vector<8x64xf32>
    %90 = math.tanh %89 : vector<8x64xf32>
    %91 = arith.mulf %84, %90 : vector<8x64xf32>
    %c8 = arith.constant 8 : index
    %c0_24 = arith.constant 0 : index
    %92 = vector.load %arg15[%c8, %c0_24] : memref<64x64xf32, #tpu.memory_space<vmem>>, vector<8x64xf32>
    tpu.vector_store %arg15[%c8, %c0_24], %91 {strides = array<i32>} : memref<64x64xf32, #tpu.memory_space<vmem>>, vector<8x64xf32>,
    %93 = vector.extract_strided_slice %49 {offsets = [16, 0], sizes = [8, 256], strides = [1, 1]} : vector<64x256xf32> to vector<8x256xf32>
    %cst_25 = arith.constant dense<0.000000e+00> : vector<8x256xf32>
    %94 = tpu.matmul %91, %50, %cst_25 {dimension_numbers = #tpu.dot_dimension_numbers<[1], [0], [0], [1], [0, 0, 1, 1], [], []>} : vector<8x64xf32>, vector<64x256xf32>, vector<8x256xf32> -> vector<8x256xf32>
    %95 = arith.addf %93, %94 : vector<8x256xf32>
    %96 = vector.extract_strided_slice %95 {offsets = [0, 0], sizes = [8, 192], strides = [1, 1]} : vector<8x256xf32> to vector<8x192xf32>
    %97 = arith.negf %96 : vector<8x192xf32>
    %98 = math.exp %97 : vector<8x192xf32>
    %cst_26 = arith.constant 1.000000e+00 : f32
    %99 = vector.broadcast %cst_26 : f32 to vector<8x192xf32>
    %100 = arith.addf %99, %98 : vector<8x192xf32>
    %101 = arith.divf %99, %100 : vector<8x192xf32>
    %102 = vector.extract_strided_slice %101 {offsets = [0, 0], sizes = [8, 64], strides = [1, 1]} : vector<8x192xf32> to vector<8x64xf32>
    %103 = vector.extract_strided_slice %101 {offsets = [0, 64], sizes = [8, 64], strides = [1, 1]} : vector<8x192xf32> to vector<8x64xf32>
    %104 = vector.extract_strided_slice %101 {offsets = [0, 128], sizes = [8, 64], strides = [1, 1]} : vector<8x192xf32> to vector<8x64xf32>
    %105 = vector.extract_strided_slice %95 {offsets = [0, 192], sizes = [8, 64], strides = [1, 1]} : vector<8x256xf32> to vector<8x64xf32>
    %106 = math.tanh %105 : vector<8x64xf32>
    %107 = arith.mulf %103, %89 : vector<8x64xf32>
    %108 = arith.mulf %102, %106 : vector<8x64xf32>
    %109 = arith.addf %107, %108 : vector<8x64xf32>
    %110 = math.tanh %109 : vector<8x64xf32>
    %111 = arith.mulf %104, %110 : vector<8x64xf32>
    %c16 = arith.constant 16 : index
    %c0_27 = arith.constant 0 : index
    %112 = vector.load %arg15[%c16, %c0_27] : memref<64x64xf32, #tpu.memory_space<vmem>>, vector<8x64xf32>
    tpu.vector_store %arg15[%c16, %c0_27], %111 {strides = array<i32>} : memref<64x64xf32, #tpu.memory_space<vmem>>, vector<8x64xf32>,
    %113 = vector.extract_strided_slice %49 {offsets = [24, 0], sizes = [8, 256], strides = [1, 1]} : vector<64x256xf32> to vector<8x256xf32>
    %cst_28 = arith.constant dense<0.000000e+00> : vector<8x256xf32>
    %114 = tpu.matmul %111, %50, %cst_28 {dimension_numbers = #tpu.dot_dimension_numbers<[1], [0], [0], [1], [0, 0, 1, 1], [], []>} : vector<8x64xf32>, vector<64x256xf32>, vector<8x256xf32> -> vector<8x256xf32>
    %115 = arith.addf %113, %114 : vector<8x256xf32>
    %116 = vector.extract_strided_slice %115 {offsets = [0, 0], sizes = [8, 192], strides = [1, 1]} : vector<8x256xf32> to vector<8x192xf32>
    %117 = arith.negf %116 : vector<8x192xf32>
    %118 = math.exp %117 : vector<8x192xf32>
    %cst_29 = arith.constant 1.000000e+00 : f32
    %119 = vector.broadcast %cst_29 : f32 to vector<8x192xf32>
    %120 = arith.addf %119, %118 : vector<8x192xf32>
    %121 = arith.divf %119, %120 : vector<8x192xf32>
    %122 = vector.extract_strided_slice %121 {offsets = [0, 0], sizes = [8, 64], strides = [1, 1]} : vector<8x192xf32> to vector<8x64xf32>
    %123 = vector.extract_strided_slice %121 {offsets = [0, 64], sizes = [8, 64], strides = [1, 1]} : vector<8x192xf32> to vector<8x64xf32>
    %124 = vector.extract_strided_slice %121 {offsets = [0, 128], sizes = [8, 64], strides = [1, 1]} : vector<8x192xf32> to vector<8x64xf32>
    %125 = vector.extract_strided_slice %115 {offsets = [0, 192], sizes = [8, 64], strides = [1, 1]} : vector<8x256xf32> to vector<8x64xf32>
    %126 = math.tanh %125 : vector<8x64xf32>
    %127 = arith.mulf %123, %109 : vector<8x64xf32>
    %128 = arith.mulf %122, %126 : vector<8x64xf32>
    %129 = arith.addf %127, %128 : vector<8x64xf32>
    %130 = math.tanh %129 : vector<8x64xf32>
    %131 = arith.mulf %124, %130 : vector<8x64xf32>
    %c24 = arith.constant 24 : index
    %c0_30 = arith.constant 0 : index
    %132 = vector.load %arg15[%c24, %c0_30] : memref<64x64xf32, #tpu.memory_space<vmem>>, vector<8x64xf32>
    tpu.vector_store %arg15[%c24, %c0_30], %131 {strides = array<i32>} : memref<64x64xf32, #tpu.memory_space<vmem>>, vector<8x64xf32>,
    %133 = vector.extract_strided_slice %49 {offsets = [32, 0], sizes = [8, 256], strides = [1, 1]} : vector<64x256xf32> to vector<8x256xf32>
    %cst_31 = arith.constant dense<0.000000e+00> : vector<8x256xf32>
    %134 = tpu.matmul %131, %50, %cst_31 {dimension_numbers = #tpu.dot_dimension_numbers<[1], [0], [0], [1], [0, 0, 1, 1], [], []>} : vector<8x64xf32>, vector<64x256xf32>, vector<8x256xf32> -> vector<8x256xf32>
    %135 = arith.addf %133, %134 : vector<8x256xf32>
    %136 = vector.extract_strided_slice %135 {offsets = [0, 0], sizes = [8, 192], strides = [1, 1]} : vector<8x256xf32> to vector<8x192xf32>
    %137 = arith.negf %136 : vector<8x192xf32>
    %138 = math.exp %137 : vector<8x192xf32>
    %cst_32 = arith.constant 1.000000e+00 : f32
    %139 = vector.broadcast %cst_32 : f32 to vector<8x192xf32>
    %140 = arith.addf %139, %138 : vector<8x192xf32>
    %141 = arith.divf %139, %140 : vector<8x192xf32>
    %142 = vector.extract_strided_slice %141 {offsets = [0, 0], sizes = [8, 64], strides = [1, 1]} : vector<8x192xf32> to vector<8x64xf32>
    %143 = vector.extract_strided_slice %141 {offsets = [0, 64], sizes = [8, 64], strides = [1, 1]} : vector<8x192xf32> to vector<8x64xf32>
    %144 = vector.extract_strided_slice %141 {offsets = [0, 128], sizes = [8, 64], strides = [1, 1]} : vector<8x192xf32> to vector<8x64xf32>
    %145 = vector.extract_strided_slice %135 {offsets = [0, 192], sizes = [8, 64], strides = [1, 1]} : vector<8x256xf32> to vector<8x64xf32>
    %146 = math.tanh %145 : vector<8x64xf32>
    %147 = arith.mulf %143, %129 : vector<8x64xf32>
    %148 = arith.mulf %142, %146 : vector<8x64xf32>
    %149 = arith.addf %147, %148 : vector<8x64xf32>
    %150 = math.tanh %149 : vector<8x64xf32>
    %151 = arith.mulf %144, %150 : vector<8x64xf32>
    %c32 = arith.constant 32 : index
    %c0_33 = arith.constant 0 : index
    %152 = vector.load %arg15[%c32, %c0_33] : memref<64x64xf32, #tpu.memory_space<vmem>>, vector<8x64xf32>
    tpu.vector_store %arg15[%c32, %c0_33], %151 {strides = array<i32>} : memref<64x64xf32, #tpu.memory_space<vmem>>, vector<8x64xf32>,
    %153 = vector.extract_strided_slice %49 {offsets = [40, 0], sizes = [8, 256], strides = [1, 1]} : vector<64x256xf32> to vector<8x256xf32>
    %cst_34 = arith.constant dense<0.000000e+00> : vector<8x256xf32>
    %154 = tpu.matmul %151, %50, %cst_34 {dimension_numbers = #tpu.dot_dimension_numbers<[1], [0], [0], [1], [0, 0, 1, 1], [], []>} : vector<8x64xf32>, vector<64x256xf32>, vector<8x256xf32> -> vector<8x256xf32>
    %155 = arith.addf %153, %154 : vector<8x256xf32>
    %156 = vector.extract_strided_slice %155 {offsets = [0, 0], sizes = [8, 192], strides = [1, 1]} : vector<8x256xf32> to vector<8x192xf32>
    %157 = arith.negf %156 : vector<8x192xf32>
    %158 = math.exp %157 : vector<8x192xf32>
    %cst_35 = arith.constant 1.000000e+00 : f32
    %159 = vector.broadcast %cst_35 : f32 to vector<8x192xf32>
    %160 = arith.addf %159, %158 : vector<8x192xf32>
    %161 = arith.divf %159, %160 : vector<8x192xf32>
    %162 = vector.extract_strided_slice %161 {offsets = [0, 0], sizes = [8, 64], strides = [1, 1]} : vector<8x192xf32> to vector<8x64xf32>
    %163 = vector.extract_strided_slice %161 {offsets = [0, 64], sizes = [8, 64], strides = [1, 1]} : vector<8x192xf32> to vector<8x64xf32>
    %164 = vector.extract_strided_slice %161 {offsets = [0, 128], sizes = [8, 64], strides = [1, 1]} : vector<8x192xf32> to vector<8x64xf32>
    %165 = vector.extract_strided_slice %155 {offsets = [0, 192], sizes = [8, 64], strides = [1, 1]} : vector<8x256xf32> to vector<8x64xf32>
    %166 = math.tanh %165 : vector<8x64xf32>
    %167 = arith.mulf %163, %149 : vector<8x64xf32>
    %168 = arith.mulf %162, %166 : vector<8x64xf32>
    %169 = arith.addf %167, %168 : vector<8x64xf32>
    %170 = math.tanh %169 : vector<8x64xf32>
    %171 = arith.mulf %164, %170 : vector<8x64xf32>
    %c40 = arith.constant 40 : index
    %c0_36 = arith.constant 0 : index
    %172 = vector.load %arg15[%c40, %c0_36] : memref<64x64xf32, #tpu.memory_space<vmem>>, vector<8x64xf32>
    tpu.vector_store %arg15[%c40, %c0_36], %171 {strides = array<i32>} : memref<64x64xf32, #tpu.memory_space<vmem>>, vector<8x64xf32>,
    %173 = vector.extract_strided_slice %49 {offsets = [48, 0], sizes = [8, 256], strides = [1, 1]} : vector<64x256xf32> to vector<8x256xf32>
    %cst_37 = arith.constant dense<0.000000e+00> : vector<8x256xf32>
    %174 = tpu.matmul %171, %50, %cst_37 {dimension_numbers = #tpu.dot_dimension_numbers<[1], [0], [0], [1], [0, 0, 1, 1], [], []>} : vector<8x64xf32>, vector<64x256xf32>, vector<8x256xf32> -> vector<8x256xf32>
    %175 = arith.addf %173, %174 : vector<8x256xf32>
    %176 = vector.extract_strided_slice %175 {offsets = [0, 0], sizes = [8, 192], strides = [1, 1]} : vector<8x256xf32> to vector<8x192xf32>
    %177 = arith.negf %176 : vector<8x192xf32>
    %178 = math.exp %177 : vector<8x192xf32>
    %cst_38 = arith.constant 1.000000e+00 : f32
    %179 = vector.broadcast %cst_38 : f32 to vector<8x192xf32>
    %180 = arith.addf %179, %178 : vector<8x192xf32>
    %181 = arith.divf %179, %180 : vector<8x192xf32>
    %182 = vector.extract_strided_slice %181 {offsets = [0, 0], sizes = [8, 64], strides = [1, 1]} : vector<8x192xf32> to vector<8x64xf32>
    %183 = vector.extract_strided_slice %181 {offsets = [0, 64], sizes = [8, 64], strides = [1, 1]} : vector<8x192xf32> to vector<8x64xf32>
    %184 = vector.extract_strided_slice %181 {offsets = [0, 128], sizes = [8, 64], strides = [1, 1]} : vector<8x192xf32> to vector<8x64xf32>
    %185 = vector.extract_strided_slice %175 {offsets = [0, 192], sizes = [8, 64], strides = [1, 1]} : vector<8x256xf32> to vector<8x64xf32>
    %186 = math.tanh %185 : vector<8x64xf32>
    %187 = arith.mulf %183, %169 : vector<8x64xf32>
    %188 = arith.mulf %182, %186 : vector<8x64xf32>
    %189 = arith.addf %187, %188 : vector<8x64xf32>
    %190 = math.tanh %189 : vector<8x64xf32>
    %191 = arith.mulf %184, %190 : vector<8x64xf32>
    %c48 = arith.constant 48 : index
    %c0_39 = arith.constant 0 : index
    %192 = vector.load %arg15[%c48, %c0_39] : memref<64x64xf32, #tpu.memory_space<vmem>>, vector<8x64xf32>
    tpu.vector_store %arg15[%c48, %c0_39], %191 {strides = array<i32>} : memref<64x64xf32, #tpu.memory_space<vmem>>, vector<8x64xf32>,
    %193 = vector.extract_strided_slice %49 {offsets = [56, 0], sizes = [8, 256], strides = [1, 1]} : vector<64x256xf32> to vector<8x256xf32>
    %cst_40 = arith.constant dense<0.000000e+00> : vector<8x256xf32>
    %194 = tpu.matmul %191, %50, %cst_40 {dimension_numbers = #tpu.dot_dimension_numbers<[1], [0], [0], [1], [0, 0, 1, 1], [], []>} : vector<8x64xf32>, vector<64x256xf32>, vector<8x256xf32> -> vector<8x256xf32>
    %195 = arith.addf %193, %194 : vector<8x256xf32>
    %196 = vector.extract_strided_slice %195 {offsets = [0, 0], sizes = [8, 192], strides = [1, 1]} : vector<8x256xf32> to vector<8x192xf32>
    %197 = arith.negf %196 : vector<8x192xf32>
    %198 = math.exp %197 : vector<8x192xf32>
    %cst_41 = arith.constant 1.000000e+00 : f32
    %199 = vector.broadcast %cst_41 : f32 to vector<8x192xf32>
    %200 = arith.addf %199, %198 : vector<8x192xf32>
    %201 = arith.divf %199, %200 : vector<8x192xf32>
    %202 = vector.extract_strided_slice %201 {offsets = [0, 0], sizes = [8, 64], strides = [1, 1]} : vector<8x192xf32> to vector<8x64xf32>
    %203 = vector.extract_strided_slice %201 {offsets = [0, 64], sizes = [8, 64], strides = [1, 1]} : vector<8x192xf32> to vector<8x64xf32>
    %204 = vector.extract_strided_slice %201 {offsets = [0, 128], sizes = [8, 64], strides = [1, 1]} : vector<8x192xf32> to vector<8x64xf32>
    %205 = vector.extract_strided_slice %195 {offsets = [0, 192], sizes = [8, 64], strides = [1, 1]} : vector<8x256xf32> to vector<8x64xf32>
    %206 = math.tanh %205 : vector<8x64xf32>
    %207 = arith.mulf %203, %189 : vector<8x64xf32>
    %208 = arith.mulf %202, %206 : vector<8x64xf32>
    %209 = arith.addf %207, %208 : vector<8x64xf32>
    %210 = math.tanh %209 : vector<8x64xf32>
    %211 = arith.mulf %204, %210 : vector<8x64xf32>
    %c56 = arith.constant 56 : index
    %c0_42 = arith.constant 0 : index
    %212 = vector.load %arg15[%c56, %c0_42] : memref<64x64xf32, #tpu.memory_space<vmem>>, vector<8x64xf32>
    tpu.vector_store %arg15[%c56, %c0_42], %211 {strides = array<i32>} : memref<64x64xf32, #tpu.memory_space<vmem>>, vector<8x64xf32>,
    %c0_43 = arith.constant 0 : index
    %c0_44 = arith.constant 0 : index
    %213 = vector.load %arg15[%c0_43, %c0_44] : memref<64x64xf32, #tpu.memory_space<vmem>>, vector<64x64xf32>
    %214 = vector.extract_strided_slice %213 {offsets = [56, 0], sizes = [8, 64], strides = [1, 1]} : vector<64x64xf32> to vector<8x64xf32>
    %215 = vector.extract_strided_slice %213 {offsets = [48, 0], sizes = [8, 64], strides = [1, 1]} : vector<64x64xf32> to vector<8x64xf32>
    %216 = vector.extract_strided_slice %213 {offsets = [40, 0], sizes = [8, 64], strides = [1, 1]} : vector<64x64xf32> to vector<8x64xf32>
    %217 = vector.extract_strided_slice %213 {offsets = [32, 0], sizes = [8, 64], strides = [1, 1]} : vector<64x64xf32> to vector<8x64xf32>
    %218 = vector.extract_strided_slice %213 {offsets = [24, 0], sizes = [8, 64], strides = [1, 1]} : vector<64x64xf32> to vector<8x64xf32>
    %219 = vector.extract_strided_slice %213 {offsets = [16, 0], sizes = [8, 64], strides = [1, 1]} : vector<64x64xf32> to vector<8x64xf32>
    %220 = vector.extract_strided_slice %213 {offsets = [8, 0], sizes = [8, 64], strides = [1, 1]} : vector<64x64xf32> to vector<8x64xf32>
    %221 = vector.extract_strided_slice %213 {offsets = [0, 0], sizes = [8, 64], strides = [1, 1]} : vector<64x64xf32> to vector<8x64xf32>
    %222 = tpu.concatenate %214, %215, %216, %217, %218, %219, %220, %221 in 0 : vector<8x64xf32>, vector<8x64xf32>, vector<8x64xf32>, vector<8x64xf32>, vector<8x64xf32>, vector<8x64xf32>, vector<8x64xf32>, vector<8x64xf32> -> vector<64x64xf32>
    %223 = vector.shape_cast %32 : vector<1x64xi1> to vector<1x64xi1>
    %224 = vector.broadcast %223 : vector<1x64xi1> to vector<64x64xi1>
    %225 = arith.select %224, %213, %222 : vector<64x64xi1>, vector<64x64xf32>
    %c0_45 = arith.constant 0 : index
    %c0_46 = arith.constant 0 : index
    %226 = vector.load %arg7[%c0_45, %c0_46] : memref<64x256xf32, #tpu.memory_space<vmem>>, vector<64x256xf32>
    %cst_47 = arith.constant dense<0.000000e+00> : vector<64x256xf32>
    %227 = tpu.matmul %225, %226, %cst_47 {dimension_numbers = #tpu.dot_dimension_numbers<[1], [0], [0], [1], [0, 0, 1, 1], [], []>} : vector<64x64xf32>, vector<64x256xf32>, vector<64x256xf32> -> vector<64x256xf32>
    %c0_48 = arith.constant 0 : index
    %c0_49 = arith.constant 0 : index
    %228 = vector.load %arg9[%c0_48, %c0_49] : memref<1x256xf32, #tpu.memory_space<vmem>>, vector<1x256xf32>
    %229 = vector.broadcast %228 : vector<1x256xf32> to vector<64x256xf32>
    %230 = arith.addf %227, %229 : vector<64x256xf32>
    %231 = vector.extract_strided_slice %230 {offsets = [56, 0], sizes = [8, 256], strides = [1, 1]} : vector<64x256xf32> to vector<8x256xf32>
    %232 = vector.extract_strided_slice %230 {offsets = [48, 0], sizes = [8, 256], strides = [1, 1]} : vector<64x256xf32> to vector<8x256xf32>
    %233 = vector.extract_strided_slice %230 {offsets = [40, 0], sizes = [8, 256], strides = [1, 1]} : vector<64x256xf32> to vector<8x256xf32>
    %234 = vector.extract_strided_slice %230 {offsets = [32, 0], sizes = [8, 256], strides = [1, 1]} : vector<64x256xf32> to vector<8x256xf32>
    %235 = vector.extract_strided_slice %230 {offsets = [24, 0], sizes = [8, 256], strides = [1, 1]} : vector<64x256xf32> to vector<8x256xf32>
    %236 = vector.extract_strided_slice %230 {offsets = [16, 0], sizes = [8, 256], strides = [1, 1]} : vector<64x256xf32> to vector<8x256xf32>
    %237 = vector.extract_strided_slice %230 {offsets = [8, 0], sizes = [8, 256], strides = [1, 1]} : vector<64x256xf32> to vector<8x256xf32>
    %238 = vector.extract_strided_slice %230 {offsets = [0, 0], sizes = [8, 256], strides = [1, 1]} : vector<64x256xf32> to vector<8x256xf32>
    %239 = tpu.concatenate %231, %232, %233, %234, %235, %236, %237, %238 in 0 : vector<8x256xf32>, vector<8x256xf32>, vector<8x256xf32>, vector<8x256xf32>, vector<8x256xf32>, vector<8x256xf32>, vector<8x256xf32>, vector<8x256xf32> -> vector<64x256xf32>
    %240 = vector.shape_cast %29 : vector<1x256xi1> to vector<1x256xi1>
    %241 = vector.broadcast %240 : vector<1x256xi1> to vector<64x256xi1>
    %242 = arith.select %241, %230, %239 : vector<64x256xi1>, vector<64x256xf32>
    %c0_50 = arith.constant 0 : index
    %c0_51 = arith.constant 0 : index
    %243 = vector.load %arg8[%c0_50, %c0_51] : memref<64x256xf32, #tpu.memory_space<vmem>>, vector<64x256xf32>
    %cst_52 = arith.constant 0.000000e+00 : f32
    %244 = vector.broadcast %cst_52 : f32 to vector<8x64xf32>
    %cst_53 = arith.constant 0.000000e+00 : f32
    %245 = vector.broadcast %cst_53 : f32 to vector<8x64xf32>
    %246 = vector.extract_strided_slice %242 {offsets = [0, 0], sizes = [8, 256], strides = [1, 1]} : vector<64x256xf32> to vector<8x256xf32>
    %cst_54 = arith.constant dense<0.000000e+00> : vector<8x256xf32>
    %247 = tpu.matmul %244, %243, %cst_54 {dimension_numbers = #tpu.dot_dimension_numbers<[1], [0], [0], [1], [0, 0, 1, 1], [], []>} : vector<8x64xf32>, vector<64x256xf32>, vector<8x256xf32> -> vector<8x256xf32>
    %248 = arith.addf %246, %247 : vector<8x256xf32>
    %249 = vector.extract_strided_slice %248 {offsets = [0, 0], sizes = [8, 192], strides = [1, 1]} : vector<8x256xf32> to vector<8x192xf32>
    %250 = arith.negf %249 : vector<8x192xf32>
    %251 = math.exp %250 : vector<8x192xf32>
    %cst_55 = arith.constant 1.000000e+00 : f32
    %252 = vector.broadcast %cst_55 : f32 to vector<8x192xf32>
    %253 = arith.addf %252, %251 : vector<8x192xf32>
    %254 = arith.divf %252, %253 : vector<8x192xf32>
    %255 = vector.extract_strided_slice %254 {offsets = [0, 0], sizes = [8, 64], strides = [1, 1]} : vector<8x192xf32> to vector<8x64xf32>
    %256 = vector.extract_strided_slice %254 {offsets = [0, 64], sizes = [8, 64], strides = [1, 1]} : vector<8x192xf32> to vector<8x64xf32>
    %257 = vector.extract_strided_slice %254 {offsets = [0, 128], sizes = [8, 64], strides = [1, 1]} : vector<8x192xf32> to vector<8x64xf32>
    %258 = vector.extract_strided_slice %248 {offsets = [0, 192], sizes = [8, 64], strides = [1, 1]} : vector<8x256xf32> to vector<8x64xf32>
    %259 = math.tanh %258 : vector<8x64xf32>
    %260 = arith.mulf %256, %245 : vector<8x64xf32>
    %261 = arith.mulf %255, %259 : vector<8x64xf32>
    %262 = arith.addf %260, %261 : vector<8x64xf32>
    %263 = math.tanh %262 : vector<8x64xf32>
    %264 = arith.mulf %257, %263 : vector<8x64xf32>
    %c0_56 = arith.constant 0 : index
    %c0_57 = arith.constant 0 : index
    %265 = vector.load %arg16[%c0_56, %c0_57] : memref<64x64xf32, #tpu.memory_space<vmem>>, vector<8x64xf32>
    tpu.vector_store %arg16[%c0_56, %c0_57], %264 {strides = array<i32>} : memref<64x64xf32, #tpu.memory_space<vmem>>, vector<8x64xf32>,
    %266 = vector.extract_strided_slice %242 {offsets = [8, 0], sizes = [8, 256], strides = [1, 1]} : vector<64x256xf32> to vector<8x256xf32>
    %cst_58 = arith.constant dense<0.000000e+00> : vector<8x256xf32>
    %267 = tpu.matmul %264, %243, %cst_58 {dimension_numbers = #tpu.dot_dimension_numbers<[1], [0], [0], [1], [0, 0, 1, 1], [], []>} : vector<8x64xf32>, vector<64x256xf32>, vector<8x256xf32> -> vector<8x256xf32>
    %268 = arith.addf %266, %267 : vector<8x256xf32>
    %269 = vector.extract_strided_slice %268 {offsets = [0, 0], sizes = [8, 192], strides = [1, 1]} : vector<8x256xf32> to vector<8x192xf32>
    %270 = arith.negf %269 : vector<8x192xf32>
    %271 = math.exp %270 : vector<8x192xf32>
    %cst_59 = arith.constant 1.000000e+00 : f32
    %272 = vector.broadcast %cst_59 : f32 to vector<8x192xf32>
    %273 = arith.addf %272, %271 : vector<8x192xf32>
    %274 = arith.divf %272, %273 : vector<8x192xf32>
    %275 = vector.extract_strided_slice %274 {offsets = [0, 0], sizes = [8, 64], strides = [1, 1]} : vector<8x192xf32> to vector<8x64xf32>
    %276 = vector.extract_strided_slice %274 {offsets = [0, 64], sizes = [8, 64], strides = [1, 1]} : vector<8x192xf32> to vector<8x64xf32>
    %277 = vector.extract_strided_slice %274 {offsets = [0, 128], sizes = [8, 64], strides = [1, 1]} : vector<8x192xf32> to vector<8x64xf32>
    %278 = vector.extract_strided_slice %268 {offsets = [0, 192], sizes = [8, 64], strides = [1, 1]} : vector<8x256xf32> to vector<8x64xf32>
    %279 = math.tanh %278 : vector<8x64xf32>
    %280 = arith.mulf %276, %262 : vector<8x64xf32>
    %281 = arith.mulf %275, %279 : vector<8x64xf32>
    %282 = arith.addf %280, %281 : vector<8x64xf32>
    %283 = math.tanh %282 : vector<8x64xf32>
    %284 = arith.mulf %277, %283 : vector<8x64xf32>
    %c8_60 = arith.constant 8 : index
    %c0_61 = arith.constant 0 : index
    %285 = vector.load %arg16[%c8_60, %c0_61] : memref<64x64xf32, #tpu.memory_space<vmem>>, vector<8x64xf32>
    tpu.vector_store %arg16[%c8_60, %c0_61], %284 {strides = array<i32>} : memref<64x64xf32, #tpu.memory_space<vmem>>, vector<8x64xf32>,
    %286 = vector.extract_strided_slice %242 {offsets = [16, 0], sizes = [8, 256], strides = [1, 1]} : vector<64x256xf32> to vector<8x256xf32>
    %cst_62 = arith.constant dense<0.000000e+00> : vector<8x256xf32>
    %287 = tpu.matmul %284, %243, %cst_62 {dimension_numbers = #tpu.dot_dimension_numbers<[1], [0], [0], [1], [0, 0, 1, 1], [], []>} : vector<8x64xf32>, vector<64x256xf32>, vector<8x256xf32> -> vector<8x256xf32>
    %288 = arith.addf %286, %287 : vector<8x256xf32>
    %289 = vector.extract_strided_slice %288 {offsets = [0, 0], sizes = [8, 192], strides = [1, 1]} : vector<8x256xf32> to vector<8x192xf32>
    %290 = arith.negf %289 : vector<8x192xf32>
    %291 = math.exp %290 : vector<8x192xf32>
    %cst_63 = arith.constant 1.000000e+00 : f32
    %292 = vector.broadcast %cst_63 : f32 to vector<8x192xf32>
    %293 = arith.addf %292, %291 : vector<8x192xf32>
    %294 = arith.divf %292, %293 : vector<8x192xf32>
    %295 = vector.extract_strided_slice %294 {offsets = [0, 0], sizes = [8, 64], strides = [1, 1]} : vector<8x192xf32> to vector<8x64xf32>
    %296 = vector.extract_strided_slice %294 {offsets = [0, 64], sizes = [8, 64], strides = [1, 1]} : vector<8x192xf32> to vector<8x64xf32>
    %297 = vector.extract_strided_slice %294 {offsets = [0, 128], sizes = [8, 64], strides = [1, 1]} : vector<8x192xf32> to vector<8x64xf32>
    %298 = vector.extract_strided_slice %288 {offsets = [0, 192], sizes = [8, 64], strides = [1, 1]} : vector<8x256xf32> to vector<8x64xf32>
    %299 = math.tanh %298 : vector<8x64xf32>
    %300 = arith.mulf %296, %282 : vector<8x64xf32>
    %301 = arith.mulf %295, %299 : vector<8x64xf32>
    %302 = arith.addf %300, %301 : vector<8x64xf32>
    %303 = math.tanh %302 : vector<8x64xf32>
    %304 = arith.mulf %297, %303 : vector<8x64xf32>
    %c16_64 = arith.constant 16 : index
    %c0_65 = arith.constant 0 : index
    %305 = vector.load %arg16[%c16_64, %c0_65] : memref<64x64xf32, #tpu.memory_space<vmem>>, vector<8x64xf32>
    tpu.vector_store %arg16[%c16_64, %c0_65], %304 {strides = array<i32>} : memref<64x64xf32, #tpu.memory_space<vmem>>, vector<8x64xf32>,
    %306 = vector.extract_strided_slice %242 {offsets = [24, 0], sizes = [8, 256], strides = [1, 1]} : vector<64x256xf32> to vector<8x256xf32>
    %cst_66 = arith.constant dense<0.000000e+00> : vector<8x256xf32>
    %307 = tpu.matmul %304, %243, %cst_66 {dimension_numbers = #tpu.dot_dimension_numbers<[1], [0], [0], [1], [0, 0, 1, 1], [], []>} : vector<8x64xf32>, vector<64x256xf32>, vector<8x256xf32> -> vector<8x256xf32>
    %308 = arith.addf %306, %307 : vector<8x256xf32>
    %309 = vector.extract_strided_slice %308 {offsets = [0, 0], sizes = [8, 192], strides = [1, 1]} : vector<8x256xf32> to vector<8x192xf32>
    %310 = arith.negf %309 : vector<8x192xf32>
    %311 = math.exp %310 : vector<8x192xf32>
    %cst_67 = arith.constant 1.000000e+00 : f32
    %312 = vector.broadcast %cst_67 : f32 to vector<8x192xf32>
    %313 = arith.addf %312, %311 : vector<8x192xf32>
    %314 = arith.divf %312, %313 : vector<8x192xf32>
    %315 = vector.extract_strided_slice %314 {offsets = [0, 0], sizes = [8, 64], strides = [1, 1]} : vector<8x192xf32> to vector<8x64xf32>
    %316 = vector.extract_strided_slice %314 {offsets = [0, 64], sizes = [8, 64], strides = [1, 1]} : vector<8x192xf32> to vector<8x64xf32>
    %317 = vector.extract_strided_slice %314 {offsets = [0, 128], sizes = [8, 64], strides = [1, 1]} : vector<8x192xf32> to vector<8x64xf32>
    %318 = vector.extract_strided_slice %308 {offsets = [0, 192], sizes = [8, 64], strides = [1, 1]} : vector<8x256xf32> to vector<8x64xf32>
    %319 = math.tanh %318 : vector<8x64xf32>
    %320 = arith.mulf %316, %302 : vector<8x64xf32>
    %321 = arith.mulf %315, %319 : vector<8x64xf32>
    %322 = arith.addf %320, %321 : vector<8x64xf32>
    %323 = math.tanh %322 : vector<8x64xf32>
    %324 = arith.mulf %317, %323 : vector<8x64xf32>
    %c24_68 = arith.constant 24 : index
    %c0_69 = arith.constant 0 : index
    %325 = vector.load %arg16[%c24_68, %c0_69] : memref<64x64xf32, #tpu.memory_space<vmem>>, vector<8x64xf32>
    tpu.vector_store %arg16[%c24_68, %c0_69], %324 {strides = array<i32>} : memref<64x64xf32, #tpu.memory_space<vmem>>, vector<8x64xf32>,
    %326 = vector.extract_strided_slice %242 {offsets = [32, 0], sizes = [8, 256], strides = [1, 1]} : vector<64x256xf32> to vector<8x256xf32>
    %cst_70 = arith.constant dense<0.000000e+00> : vector<8x256xf32>
    %327 = tpu.matmul %324, %243, %cst_70 {dimension_numbers = #tpu.dot_dimension_numbers<[1], [0], [0], [1], [0, 0, 1, 1], [], []>} : vector<8x64xf32>, vector<64x256xf32>, vector<8x256xf32> -> vector<8x256xf32>
    %328 = arith.addf %326, %327 : vector<8x256xf32>
    %329 = vector.extract_strided_slice %328 {offsets = [0, 0], sizes = [8, 192], strides = [1, 1]} : vector<8x256xf32> to vector<8x192xf32>
    %330 = arith.negf %329 : vector<8x192xf32>
    %331 = math.exp %330 : vector<8x192xf32>
    %cst_71 = arith.constant 1.000000e+00 : f32
    %332 = vector.broadcast %cst_71 : f32 to vector<8x192xf32>
    %333 = arith.addf %332, %331 : vector<8x192xf32>
    %334 = arith.divf %332, %333 : vector<8x192xf32>
    %335 = vector.extract_strided_slice %334 {offsets = [0, 0], sizes = [8, 64], strides = [1, 1]} : vector<8x192xf32> to vector<8x64xf32>
    %336 = vector.extract_strided_slice %334 {offsets = [0, 64], sizes = [8, 64], strides = [1, 1]} : vector<8x192xf32> to vector<8x64xf32>
    %337 = vector.extract_strided_slice %334 {offsets = [0, 128], sizes = [8, 64], strides = [1, 1]} : vector<8x192xf32> to vector<8x64xf32>
    %338 = vector.extract_strided_slice %328 {offsets = [0, 192], sizes = [8, 64], strides = [1, 1]} : vector<8x256xf32> to vector<8x64xf32>
    %339 = math.tanh %338 : vector<8x64xf32>
    %340 = arith.mulf %336, %322 : vector<8x64xf32>
    %341 = arith.mulf %335, %339 : vector<8x64xf32>
    %342 = arith.addf %340, %341 : vector<8x64xf32>
    %343 = math.tanh %342 : vector<8x64xf32>
    %344 = arith.mulf %337, %343 : vector<8x64xf32>
    %c32_72 = arith.constant 32 : index
    %c0_73 = arith.constant 0 : index
    %345 = vector.load %arg16[%c32_72, %c0_73] : memref<64x64xf32, #tpu.memory_space<vmem>>, vector<8x64xf32>
    tpu.vector_store %arg16[%c32_72, %c0_73], %344 {strides = array<i32>} : memref<64x64xf32, #tpu.memory_space<vmem>>, vector<8x64xf32>,
    %346 = vector.extract_strided_slice %242 {offsets = [40, 0], sizes = [8, 256], strides = [1, 1]} : vector<64x256xf32> to vector<8x256xf32>
    %cst_74 = arith.constant dense<0.000000e+00> : vector<8x256xf32>
    %347 = tpu.matmul %344, %243, %cst_74 {dimension_numbers = #tpu.dot_dimension_numbers<[1], [0], [0], [1], [0, 0, 1, 1], [], []>} : vector<8x64xf32>, vector<64x256xf32>, vector<8x256xf32> -> vector<8x256xf32>
    %348 = arith.addf %346, %347 : vector<8x256xf32>
    %349 = vector.extract_strided_slice %348 {offsets = [0, 0], sizes = [8, 192], strides = [1, 1]} : vector<8x256xf32> to vector<8x192xf32>
    %350 = arith.negf %349 : vector<8x192xf32>
    %351 = math.exp %350 : vector<8x192xf32>
    %cst_75 = arith.constant 1.000000e+00 : f32
    %352 = vector.broadcast %cst_75 : f32 to vector<8x192xf32>
    %353 = arith.addf %352, %351 : vector<8x192xf32>
    %354 = arith.divf %352, %353 : vector<8x192xf32>
    %355 = vector.extract_strided_slice %354 {offsets = [0, 0], sizes = [8, 64], strides = [1, 1]} : vector<8x192xf32> to vector<8x64xf32>
    %356 = vector.extract_strided_slice %354 {offsets = [0, 64], sizes = [8, 64], strides = [1, 1]} : vector<8x192xf32> to vector<8x64xf32>
    %357 = vector.extract_strided_slice %354 {offsets = [0, 128], sizes = [8, 64], strides = [1, 1]} : vector<8x192xf32> to vector<8x64xf32>
    %358 = vector.extract_strided_slice %348 {offsets = [0, 192], sizes = [8, 64], strides = [1, 1]} : vector<8x256xf32> to vector<8x64xf32>
    %359 = math.tanh %358 : vector<8x64xf32>
    %360 = arith.mulf %356, %342 : vector<8x64xf32>
    %361 = arith.mulf %355, %359 : vector<8x64xf32>
    %362 = arith.addf %360, %361 : vector<8x64xf32>
    %363 = math.tanh %362 : vector<8x64xf32>
    %364 = arith.mulf %357, %363 : vector<8x64xf32>
    %c40_76 = arith.constant 40 : index
    %c0_77 = arith.constant 0 : index
    %365 = vector.load %arg16[%c40_76, %c0_77] : memref<64x64xf32, #tpu.memory_space<vmem>>, vector<8x64xf32>
    tpu.vector_store %arg16[%c40_76, %c0_77], %364 {strides = array<i32>} : memref<64x64xf32, #tpu.memory_space<vmem>>, vector<8x64xf32>,
    %366 = vector.extract_strided_slice %242 {offsets = [48, 0], sizes = [8, 256], strides = [1, 1]} : vector<64x256xf32> to vector<8x256xf32>
    %cst_78 = arith.constant dense<0.000000e+00> : vector<8x256xf32>
    %367 = tpu.matmul %364, %243, %cst_78 {dimension_numbers = #tpu.dot_dimension_numbers<[1], [0], [0], [1], [0, 0, 1, 1], [], []>} : vector<8x64xf32>, vector<64x256xf32>, vector<8x256xf32> -> vector<8x256xf32>
    %368 = arith.addf %366, %367 : vector<8x256xf32>
    %369 = vector.extract_strided_slice %368 {offsets = [0, 0], sizes = [8, 192], strides = [1, 1]} : vector<8x256xf32> to vector<8x192xf32>
    %370 = arith.negf %369 : vector<8x192xf32>
    %371 = math.exp %370 : vector<8x192xf32>
    %cst_79 = arith.constant 1.000000e+00 : f32
    %372 = vector.broadcast %cst_79 : f32 to vector<8x192xf32>
    %373 = arith.addf %372, %371 : vector<8x192xf32>
    %374 = arith.divf %372, %373 : vector<8x192xf32>
    %375 = vector.extract_strided_slice %374 {offsets = [0, 0], sizes = [8, 64], strides = [1, 1]} : vector<8x192xf32> to vector<8x64xf32>
    %376 = vector.extract_strided_slice %374 {offsets = [0, 64], sizes = [8, 64], strides = [1, 1]} : vector<8x192xf32> to vector<8x64xf32>
    %377 = vector.extract_strided_slice %374 {offsets = [0, 128], sizes = [8, 64], strides = [1, 1]} : vector<8x192xf32> to vector<8x64xf32>
    %378 = vector.extract_strided_slice %368 {offsets = [0, 192], sizes = [8, 64], strides = [1, 1]} : vector<8x256xf32> to vector<8x64xf32>
    %379 = math.tanh %378 : vector<8x64xf32>
    %380 = arith.mulf %376, %362 : vector<8x64xf32>
    %381 = arith.mulf %375, %379 : vector<8x64xf32>
    %382 = arith.addf %380, %381 : vector<8x64xf32>
    %383 = math.tanh %382 : vector<8x64xf32>
    %384 = arith.mulf %377, %383 : vector<8x64xf32>
    %c48_80 = arith.constant 48 : index
    %c0_81 = arith.constant 0 : index
    %385 = vector.load %arg16[%c48_80, %c0_81] : memref<64x64xf32, #tpu.memory_space<vmem>>, vector<8x64xf32>
    tpu.vector_store %arg16[%c48_80, %c0_81], %384 {strides = array<i32>} : memref<64x64xf32, #tpu.memory_space<vmem>>, vector<8x64xf32>,
    %386 = vector.extract_strided_slice %242 {offsets = [56, 0], sizes = [8, 256], strides = [1, 1]} : vector<64x256xf32> to vector<8x256xf32>
    %cst_82 = arith.constant dense<0.000000e+00> : vector<8x256xf32>
    %387 = tpu.matmul %384, %243, %cst_82 {dimension_numbers = #tpu.dot_dimension_numbers<[1], [0], [0], [1], [0, 0, 1, 1], [], []>} : vector<8x64xf32>, vector<64x256xf32>, vector<8x256xf32> -> vector<8x256xf32>
    %388 = arith.addf %386, %387 : vector<8x256xf32>
    %389 = vector.extract_strided_slice %388 {offsets = [0, 0], sizes = [8, 192], strides = [1, 1]} : vector<8x256xf32> to vector<8x192xf32>
    %390 = arith.negf %389 : vector<8x192xf32>
    %391 = math.exp %390 : vector<8x192xf32>
    %cst_83 = arith.constant 1.000000e+00 : f32
    %392 = vector.broadcast %cst_83 : f32 to vector<8x192xf32>
    %393 = arith.addf %392, %391 : vector<8x192xf32>
    %394 = arith.divf %392, %393 : vector<8x192xf32>
    %395 = vector.extract_strided_slice %394 {offsets = [0, 0], sizes = [8, 64], strides = [1, 1]} : vector<8x192xf32> to vector<8x64xf32>
    %396 = vector.extract_strided_slice %394 {offsets = [0, 64], sizes = [8, 64], strides = [1, 1]} : vector<8x192xf32> to vector<8x64xf32>
    %397 = vector.extract_strided_slice %394 {offsets = [0, 128], sizes = [8, 64], strides = [1, 1]} : vector<8x192xf32> to vector<8x64xf32>
    %398 = vector.extract_strided_slice %388 {offsets = [0, 192], sizes = [8, 64], strides = [1, 1]} : vector<8x256xf32> to vector<8x64xf32>
    %399 = math.tanh %398 : vector<8x64xf32>
    %400 = arith.mulf %396, %382 : vector<8x64xf32>
    %401 = arith.mulf %395, %399 : vector<8x64xf32>
    %402 = arith.addf %400, %401 : vector<8x64xf32>
    %403 = math.tanh %402 : vector<8x64xf32>
    %404 = arith.mulf %397, %403 : vector<8x64xf32>
    %c56_84 = arith.constant 56 : index
    %c0_85 = arith.constant 0 : index
    %405 = vector.load %arg16[%c56_84, %c0_85] : memref<64x64xf32, #tpu.memory_space<vmem>>, vector<8x64xf32>
    tpu.vector_store %arg16[%c56_84, %c0_85], %404 {strides = array<i32>} : memref<64x64xf32, #tpu.memory_space<vmem>>, vector<8x64xf32>,
    %c0_86 = arith.constant 0 : index
    %c0_87 = arith.constant 0 : index
    %406 = vector.load %arg16[%c0_86, %c0_87] : memref<64x64xf32, #tpu.memory_space<vmem>>, vector<64x64xf32>
    %407 = vector.extract_strided_slice %406 {offsets = [56, 0], sizes = [8, 64], strides = [1, 1]} : vector<64x64xf32> to vector<8x64xf32>
    %408 = vector.extract_strided_slice %406 {offsets = [48, 0], sizes = [8, 64], strides = [1, 1]} : vector<64x64xf32> to vector<8x64xf32>
    %409 = vector.extract_strided_slice %406 {offsets = [40, 0], sizes = [8, 64], strides = [1, 1]} : vector<64x64xf32> to vector<8x64xf32>
    %410 = vector.extract_strided_slice %406 {offsets = [32, 0], sizes = [8, 64], strides = [1, 1]} : vector<64x64xf32> to vector<8x64xf32>
    %411 = vector.extract_strided_slice %406 {offsets = [24, 0], sizes = [8, 64], strides = [1, 1]} : vector<64x64xf32> to vector<8x64xf32>
    %412 = vector.extract_strided_slice %406 {offsets = [16, 0], sizes = [8, 64], strides = [1, 1]} : vector<64x64xf32> to vector<8x64xf32>
    %413 = vector.extract_strided_slice %406 {offsets = [8, 0], sizes = [8, 64], strides = [1, 1]} : vector<64x64xf32> to vector<8x64xf32>
    %414 = vector.extract_strided_slice %406 {offsets = [0, 0], sizes = [8, 64], strides = [1, 1]} : vector<64x64xf32> to vector<8x64xf32>
    %415 = tpu.concatenate %407, %408, %409, %410, %411, %412, %413, %414 in 0 : vector<8x64xf32>, vector<8x64xf32>, vector<8x64xf32>, vector<8x64xf32>, vector<8x64xf32>, vector<8x64xf32>, vector<8x64xf32>, vector<8x64xf32> -> vector<64x64xf32>
    %416 = vector.shape_cast %32 : vector<1x64xi1> to vector<1x64xi1>
    %417 = vector.broadcast %416 : vector<1x64xi1> to vector<64x64xi1>
    %418 = arith.select %417, %406, %415 : vector<64x64xi1>, vector<64x64xf32>
    %cst_88 = arith.constant dense<0.000000e+00> : vector<64xf32>
    %419 = vector.multi_reduction <add>, %418, %cst_88 [1] : vector<64x64xf32> to vector<64xf32>
    %420 = vector.shape_cast %419 : vector<64xf32> to vector<64x1xf32>
    %cst_89 = arith.constant 6.400000e+01 : f32
    %421 = vector.broadcast %cst_89 : f32 to vector<64x1xf32>
    %422 = arith.divf %420, %421 : vector<64x1xf32>
    %423 = vector.broadcast %422 : vector<64x1xf32> to vector<64x64xf32>
    %424 = arith.subf %418, %423 : vector<64x64xf32>
    %425 = arith.mulf %424, %424 : vector<64x64xf32>
    %cst_90 = arith.constant dense<0.000000e+00> : vector<64xf32>
    %426 = vector.multi_reduction <add>, %425, %cst_90 [1] : vector<64x64xf32> to vector<64xf32>
    %427 = vector.shape_cast %426 : vector<64xf32> to vector<64x1xf32>
    %cst_91 = arith.constant 6.400000e+01 : f32
    %428 = vector.broadcast %cst_91 : f32 to vector<64x1xf32>
    %429 = arith.divf %427, %428 : vector<64x1xf32>
    %430 = vector.broadcast %422 : vector<64x1xf32> to vector<64x64xf32>
    %431 = arith.subf %418, %430 : vector<64x64xf32>
    %cst_92 = arith.constant 9.99999974E-6 : f32
    %432 = vector.broadcast %cst_92 : f32 to vector<64x1xf32>
    %433 = arith.addf %429, %432 : vector<64x1xf32>
    %434 = math.rsqrt %433 : vector<64x1xf32>
    %435 = vector.broadcast %434 : vector<64x1xf32> to vector<64x64xf32>
    %436 = arith.mulf %431, %435 : vector<64x64xf32>
    %c0_93 = arith.constant 0 : index
    %c0_94 = arith.constant 0 : index
    %437 = vector.load %arg10[%c0_93, %c0_94] : memref<1x64xf32, #tpu.memory_space<vmem>>, vector<1x64xf32>
    %438 = vector.broadcast %437 : vector<1x64xf32> to vector<64x64xf32>
    %439 = arith.mulf %436, %438 : vector<64x64xf32>
    %c0_95 = arith.constant 0 : index
    %c0_96 = arith.constant 0 : index
    %440 = vector.load %arg11[%c0_95, %c0_96] : memref<1x64xf32, #tpu.memory_space<vmem>>, vector<1x64xf32>
    %441 = vector.broadcast %440 : vector<1x64xf32> to vector<64x64xf32>
    %442 = arith.addf %439, %441 : vector<64x64xf32>
    %c0_97 = arith.constant 0 : index
    %c0_98 = arith.constant 0 : index
    %443 = vector.load %arg12[%c0_97, %c0_98] : memref<64x128xf32, #tpu.memory_space<vmem>>, vector<64x128xf32>
    %cst_99 = arith.constant dense<0.000000e+00> : vector<64x128xf32>
    %444 = tpu.matmul %442, %443, %cst_99 {dimension_numbers = #tpu.dot_dimension_numbers<[1], [0], [0], [1], [0, 0, 1, 1], [], []>} : vector<64x64xf32>, vector<64x128xf32>, vector<64x128xf32> -> vector<64x128xf32>
    %c0_100 = arith.constant 0 : index
    %c0_101 = arith.constant 0 : index
    %445 = vector.load %arg13[%c0_100, %c0_101] : memref<1x128xf32, #tpu.memory_space<vmem>>, vector<1x128xf32>
    %446 = vector.broadcast %445 : vector<1x128xf32> to vector<64x128xf32>
    %447 = arith.addf %444, %446 : vector<64x128xf32>
    %c0_102 = arith.constant 0 : index
    %c0_103 = arith.constant 0 : index
    %448 = vector.load %arg14[%c0_102, %c0_103] : memref<64x128xf32, #tpu.memory_space<vmem>>, vector<64x128xf32>
    tpu.vector_store %arg14[%c0_102, %c0_103], %447 {strides = array<i32>} : memref<64x128xf32, #tpu.memory_space<vmem>>, vector<64x128xf32>,
    return
  }
  func.func @transform_0(%arg0: i32) -> (i32, i32) {
    %c0_i32 = arith.constant 0 : i32
    %c0_i32_0 = arith.constant 0 : i32
    %c0_i32_1 = arith.constant 0 : i32
    return %c0_i32, %c0_i32_0 : i32, i32
  }
  func.func @transform_1(%arg0: i32) -> (i32, i32) {
    %c0_i32 = arith.constant 0 : i32
    %c0_i32_0 = arith.constant 0 : i32
    %c0_i32_1 = arith.constant 0 : i32
    return %c0_i32, %c0_i32_0 : i32, i32
  }
  func.func @transform_2(%arg0: i32) -> (i32, i32) {
    %c0_i32 = arith.constant 0 : i32
    %c0_i32_0 = arith.constant 0 : i32
    %c0_i32_1 = arith.constant 0 : i32
    return %c0_i32, %c0_i32_0 : i32, i32
  }
  func.func @transform_3(%arg0: i32) -> (i32, i32) {
    %c0_i32 = arith.constant 0 : i32
    %c0_i32_0 = arith.constant 0 : i32
    %c0_i32_1 = arith.constant 0 : i32
    return %c0_i32, %c0_i32_0 : i32, i32
  }
  func.func @transform_4(%arg0: i32) -> (i32, i32) {
    %c0_i32 = arith.constant 0 : i32
    %c0_i32_0 = arith.constant 0 : i32
    %c0_i32_1 = arith.constant 0 : i32
    return %c0_i32, %c0_i32_0 : i32, i32
  }
  func.func @transform_5(%arg0: i32) -> (i32, i32) {
    %c0_i32 = arith.constant 0 : i32
    %c0_i32_0 = arith.constant 0 : i32
    %c0_i32_1 = arith.constant 0 : i32
    return %c0_i32, %c0_i32_0 : i32, i32
  }
  func.func @transform_6(%arg0: i32) -> (i32, i32) {
    %c0_i32 = arith.constant 0 : i32
    %c0_i32_0 = arith.constant 0 : i32
    %c0_i32_1 = arith.constant 0 : i32
    return %c0_i32, %c0_i32_0 : i32, i32
  }
  func.func @transform_7(%arg0: i32) -> (i32, i32) {
    %c0_i32 = arith.constant 0 : i32
    %c0_i32_0 = arith.constant 0 : i32
    %c0_i32_1 = arith.constant 0 : i32
    return %c0_i32, %c0_i32_0 : i32, i32
  }
  func.func @transform_8(%arg0: i32) -> (i32, i32) {
    %c0_i32 = arith.constant 0 : i32
    %c0_i32_0 = arith.constant 0 : i32
    %c0_i32_1 = arith.constant 0 : i32
    return %c0_i32, %c0_i32_0 : i32, i32
  }
  func.func @transform_9(%arg0: i32) -> (i32, i32) {
    %c0_i32 = arith.constant 0 : i32
    %c0_i32_0 = arith.constant 0 : i32
    %c0_i32_1 = arith.constant 0 : i32
    return %c0_i32, %c0_i32_0 : i32, i32
  }
  func.func @transform_10(%arg0: i32) -> (i32, i32) {
    %c0_i32 = arith.constant 0 : i32
    %c0_i32_0 = arith.constant 0 : i32
    %c0_i32_1 = arith.constant 0 : i32
    return %c0_i32, %c0_i32_0 : i32, i32
  }
  func.func @transform_11(%arg0: i32) -> (i32, i32) {
    %c0_i32 = arith.constant 0 : i32
    %c0_i32_0 = arith.constant 0 : i32
    %c0_i32_1 = arith.constant 0 : i32
    return %c0_i32, %c0_i32_0 : i32, i32
  }
  func.func @transform_12(%arg0: i32) -> (i32, i32) {
    %c0_i32 = arith.constant 0 : i32
    %c0_i32_0 = arith.constant 0 : i32
    %c0_i32_1 = arith.constant 0 : i32
    return %c0_i32, %c0_i32_0 : i32, i32
  }
  func.func @transform_13(%arg0: i32) -> (i32, i32) {
    %c0_i32 = arith.constant 0 : i32
    %c0_i32_0 = arith.constant 0 : i32
    %c0_i32_1 = arith.constant 0 : i32
    return %c0_i32, %c0_i32_0 : i32, i32
  }
}

</mosaic_0001>

<llo_original>
// kernel: model_forward.1
$region0: #{model_forward.1}
  #allocation0 [shape = 'u32[]', space=smem, size = 0x4, offset = 0x4, fixed_abs, tag = 'smem constant byte address 0x4 - core index']
  #allocation1 [shape = 'u32[144,128]{1,0:T(1,128)}', space=vmem, size = 0x12000, scoped, tag = 'internal scratch']
  #allocation2 [shape = 'f32[64,64]{1,0:T(8,128)}', space=vmem, size = 0x8000, scoped, tag = 'scratch operand']
  #allocation3 [shape = 'f32[64,64]{1,0:T(8,128)}', space=vmem, size = 0x8000, scoped, tag = 'scratch operand']
  %s0 = inlined_call_operand.vmem [shape: s32[64,1], index: 0, kind: input, shape index: {}]
  %s1 = inlined_call_operand.vmem [shape: f32[64,1], index: 1, kind: input, shape index: {}]
  %s2 = inlined_call_operand.vmem [shape: f32[50,16], index: 2, kind: input, shape index: {}]
  %s3 = inlined_call_operand.vmem [shape: f32[16,256], index: 3, kind: input, shape index: {}]
  %s4 = inlined_call_operand.vmem [shape: f32[64,256], index: 4, kind: input, shape index: {}]
  %s5 = inlined_call_operand.vmem [shape: f32[1,256], index: 5, kind: input, shape index: {}]
  %s6 = inlined_call_operand.vmem [shape: f32[64,256], index: 6, kind: input, shape index: {}]
  %s7 = inlined_call_operand.hbm [shape: f32[64,256], index: 7, kind: input, shape index: {}]
  %s8 = inlined_call_operand.hbm [shape: f32[1,256], index: 8, kind: input, shape index: {}]
  %s9 = inlined_call_operand.vmem [shape: f32[1,64], index: 9, kind: input, shape index: {}]
  %s10 = inlined_call_operand.vmem [shape: f32[1,64], index: 10, kind: input, shape index: {}]
  %s11 = inlined_call_operand.hbm [shape: f32[64,128], index: 11, kind: input, shape index: {}]
  %s12 = inlined_call_operand.hbm [shape: f32[1,128], index: 12, kind: input, shape index: {}]
  %s13 = inlined_call_operand.vmem [shape: f32[64,128], index: 13, kind: output, shape index: {}]
  %s14 = sld [smem:[#allocation0]]
  $region78: #{model_forward.1} parent=0
    _
  %s16 = ssub.s32 1, %s14
  %s17 = scalar_select 0, %s16, %s14
  $region1: #{model_forward.1} parent=0
    #allocation4 [shape = 'u8[65536]{0}', space=vmem, size = 0x10000, scoped, tag = 'input window, operand 7, single buffered']
    #allocation5 [shape = 's32[1]{0}', space=sflag, size = 0x4, scoped, tag = 'scoped memory for model_forward.1']
    #allocation6 [shape = 'u8[1024]{0}', space=vmem, size = 0x400, scoped, tag = 'input window, operand 8, single buffered']
    #allocation7 [shape = 's32[1]{0}', space=sflag, size = 0x4, scoped, tag = 'scoped memory for model_forward.1']
    #allocation8 [shape = 'u8[32768]{0}', space=vmem, size = 0x8000, scoped, tag = 'input window, operand 11, single buffered']
    #allocation9 [shape = 'u8[512]{0}', space=vmem, size = 0x400, scoped, tag = 'input window, operand 12, single buffered']
    #allocation10 [shape = 's32[1]{0}', space=sflag, size = 0x4, scoped, tag = 'scoped memory for model_forward.1']
    %18 = vsyncpa [#allocation5], 0
    %19 = vsyncpa [#allocation7], 0
    %20 = vsyncpa [#allocation10], 0
    // Predicated region
    $region2: #{model_forward.1} parent=1 // pred_check
      _
    $region3: #{model_forward.1} parent=1 // pred_check_branch
      %22 = sbr.rel (0) target = $region5
    $region4: #{model_forward.1} parent=1 // pred_region
      _
    $region5: #{model_forward.1} parent=1 // pred_fallthru
      _
    // Predicated region
    $region6: #{model_forward.1} parent=1 // pred_check
      _
    $region7: #{model_forward.1} parent=1 // pred_check_branch
      %24 = sbr.rel (0) target = $region9
    $region8: #{model_forward.1} parent=1 // pred_region
      _
    $region9: #{model_forward.1} parent=1 // pred_fallthru
      _
    // Predicated region
    $region10: #{model_forward.1} parent=1 // pred_check
      _
    $region11: #{model_forward.1} parent=1 // pred_check_branch
      %26 = sbr.rel (0) target = $region13
    $region12: #{model_forward.1} parent=1 // pred_region
      _
    $region13: #{model_forward.1} parent=1 // pred_fallthru
      _
    // Predicated region
    $region14: #{model_forward.1} parent=1 // pred_check
      _
    $region15: #{model_forward.1} parent=1 // pred_check_branch
      %28 = sbr.rel (0) target = $region17
    $region16: #{model_forward.1} parent=1 // pred_region
      _
    $region17: #{model_forward.1} parent=1 // pred_fallthru
      _
    // Predicated region
    $region18: #{model_forward.1} parent=1 // pred_check
      _
    $region19: #{model_forward.1} parent=1 // pred_check_branch
      %30 = sbr.rel (0) target = $region21
    $region20: #{model_forward.1} parent=1 // pred_region
      _
    $region21: #{model_forward.1} parent=1 // pred_fallthru
      _
    // Predicated region
    $region22: #{model_forward.1} parent=1 // pred_check
      _
    $region23: #{model_forward.1} parent=1 // pred_check_branch
      %32 = sbr.rel (0) target = $region25
    $region24: #{model_forward.1} parent=1 // pred_region
      _
    $region25: #{model_forward.1} parent=1 // pred_fallthru
      _
    // Predicated region
    $region26: #{model_forward.1} parent=1 // pred_check
      _
    $region27: #{model_forward.1} parent=1 // pred_check_branch
      %34 = sbr.rel (0) target = $region29
    $region28: #{model_forward.1} parent=1 // pred_region
      _
    $region29: #{model_forward.1} parent=1 // pred_fallthru
      _
    // Predicated region
    $region30: #{model_forward.1} parent=1 // pred_check
      _
    $region31: #{model_forward.1} parent=1 // pred_check_branch
      %36 = sbr.rel (0) target = $region33
    $region32: #{model_forward.1} parent=1 // pred_region
      %s38 = ssub.s32 2048, 2048
      %39 = vsyncadd [#allocation5], %s38
      %s40 = sshll.u32 [#allocation4], 4
      %s41 = int_to_ptr.vmem [resolvable:$true] %s40
      %46 = dma.hbm_to_vmem [thread:$0]  %s7, 2048, %s41, [#allocation5], 256, 256, 16
    $region33: #{model_forward.1} parent=1 // pred_fallthru
      _
    // Predicated region
    $region34: #{model_forward.1} parent=1 // pred_check
      _
    $region35: #{model_forward.1} parent=1 // pred_check_branch
      %48 = sbr.rel (0) target = $region37
    $region36: #{model_forward.1} parent=1 // pred_region
      %s50 = ssub.s32 32, 32
      %51 = vsyncadd [#allocation7], %s50
      %s53 = sshll.u32 [#allocation6], 4
      %s54 = int_to_ptr.vmem [resolvable:$true] %s53
      %56 = dma.hbm_to_vmem [thread:$0]  %s8, 32, %s54, [#allocation7]
    $region37: #{model_forward.1} parent=1 // pred_fallthru
      _
    // Predicated region
    $region38: #{model_forward.1} parent=1 // pred_check
      _
    $region39: #{model_forward.1} parent=1 // pred_check_branch
      %58 = sbr.rel (0) target = $region41
    $region40: #{model_forward.1} parent=1 // pred_region
      _
    $region41: #{model_forward.1} parent=1 // pred_fallthru
      _
    // Predicated region
    $region42: #{model_forward.1} parent=1 // pred_check
      _
    $region43: #{model_forward.1} parent=1 // pred_check_branch
      %60 = sbr.rel (0) target = $region45
    $region44: #{model_forward.1} parent=1 // pred_region
      _
    $region45: #{model_forward.1} parent=1 // pred_fallthru
      _
    // Predicated region
    $region46: #{model_forward.1} parent=1 // pred_check
      _
    $region47: #{model_forward.1} parent=1 // pred_check_branch
      %62 = sbr.rel (0) target = $region49
    $region48: #{model_forward.1} parent=1 // pred_region
      %s64 = ssub.s32 1024, 1024
      %65 = vsyncadd [#allocation7], %s64
      %s66 = sshll.u32 [#allocation8], 4
      %s67 = int_to_ptr.vmem [resolvable:$true] %s66
      %72 = dma.hbm_to_vmem [thread:$0]  %s11, 1024, %s67, [#allocation7], 128, 128, 8
    $region49: #{model_forward.1} parent=1 // pred_fallthru
      _
    // Predicated region
    $region50: #{model_forward.1} parent=1 // pred_check
      _
    $region51: #{model_forward.1} parent=1 // pred_check_branch
      %74 = sbr.rel (0) target = $region53
    $region52: #{model_forward.1} parent=1 // pred_region
      %s76 = ssub.s32 16, 16
      %77 = vsyncadd [#allocation10], %s76
      %s79 = sshll.u32 [#allocation9], 4
      %s80 = int_to_ptr.vmem [resolvable:$true] %s79
      %82 = dma.hbm_to_vmem [thread:$0]  %s12, 16, %s80, [#allocation10]
    $region53: #{model_forward.1} parent=1 // pred_fallthru
      _
    // Predicated region
    $region54: #{model_forward.1} parent=1 // pred_check
      _
    $region55: #{model_forward.1} parent=1 // pred_check_branch
      %84 = sbr.rel (0) target = $region57
    $region56: #{model_forward.1} parent=1 // pred_region
      %85 = dma.done [#allocation5], 2048
    $region57: #{model_forward.1} parent=1 // pred_fallthru
      _
    // Predicated region
    $region58: #{model_forward.1} parent=1 // pred_check
      _
    $region59: #{model_forward.1} parent=1 // pred_check_branch
      %87 = sbr.rel (0) target = $region61
    $region60: #{model_forward.1} parent=1 // pred_region
      %88 = dma.done [#allocation7], 32
    $region61: #{model_forward.1} parent=1 // pred_fallthru
      _
    // Predicated region
    $region62: #{model_forward.1} parent=1 // pred_check
      _
    $region63: #{model_forward.1} parent=1 // pred_check_branch
      %90 = sbr.rel (0) target = $region65
    $region64: #{model_forward.1} parent=1 // pred_region
      %91 = dma.done [#allocation7], 1024
    $region65: #{model_forward.1} parent=1 // pred_fallthru
      _
    // Predicated region
    $region66: #{model_forward.1} parent=1 // pred_check
      _
    $region67: #{model_forward.1} parent=1 // pred_check_branch
      %93 = sbr.rel (0) target = $region69
    $region68: #{model_forward.1} parent=1 // pred_region
      %94 = dma.done [#allocation10], 16
    $region69: #{model_forward.1} parent=1 // pred_fallthru
      _
    %v95 = vld [vmem:[%s0] sm:$0xff]
    %v96 = vld [vmem:[%s0 + $0x8] sm:$0xff]
    %v97 = vld [vmem:[%s0 + $0x10] sm:$0xff]
    %v98 = vld [vmem:[%s0 + $0x18] sm:$0xff]
    %v99 = vld [vmem:[%s0 + $0x20] sm:$0xff]
    %v100 = vld [vmem:[%s0 + $0x28] sm:$0xff]
    %v101 = vld [vmem:[%s0 + $0x30] sm:$0xff]
    %v102 = vld [vmem:[%s0 + $0x38] sm:$0xff]
    %v103 = vlaneseq
    %v104 = vand.u32 %v103, 127
    %105 = vset.pattern.permute.xlu0 0
    %106 = vperm.xlu0 %105, %v95
    %v107 = vpop.permute.xlu0 %106
    %108 = vset.pattern.permute.xlu0 0
    %109 = vperm.xlu0 %108, %v96
    %v110 = vpop.permute.xlu0 %109
    %111 = vset.pattern.permute.xlu0 0
    %112 = vperm.xlu0 %111, %v97
    %v113 = vpop.permute.xlu0 %112
    %114 = vset.pattern.permute.xlu0 0
    %115 = vperm.xlu0 %114, %v98
    %v116 = vpop.permute.xlu0 %115
    %117 = vset.pattern.permute.xlu0 0
    %118 = vperm.xlu0 %117, %v99
    %v119 = vpop.permute.xlu0 %118
    %120 = vset.pattern.permute.xlu0 0
    %121 = vperm.xlu0 %120, %v100
    %v122 = vpop.permute.xlu0 %121
    %123 = vset.pattern.permute.xlu0 0
    %124 = vperm.xlu0 %123, %v101
    %v125 = vpop.permute.xlu0 %124
    %126 = vset.pattern.permute.xlu0 0
    %127 = vperm.xlu0 %126, %v102
    %v128 = vpop.permute.xlu0 %127
    %vm129 = vcmp.eq.s32.totalorder %v104, %v107
    %vm130 = vcmp.eq.s32.totalorder %v104, %v110
    %vm131 = vcmp.eq.s32.totalorder %v104, %v113
    %vm132 = vcmp.eq.s32.totalorder %v104, %v116
    %vm133 = vcmp.eq.s32.totalorder %v104, %v119
    %vm134 = vcmp.eq.s32.totalorder %v104, %v122
    %vm135 = vcmp.eq.s32.totalorder %v104, %v125
    %vm136 = vcmp.eq.s32.totalorder %v104, %v128
    %v137 = vsel %vm129, 1, 0
    %v138 = vsel %vm130, 1, 0
    %v139 = vsel %vm131, 1, 0
    %v140 = vsel %vm132, 1, 0
    %v141 = vsel %vm133, 1, 0
    %v142 = vsel %vm134, 1, 0
    %v143 = vsel %vm135, 1, 0
    %v144 = vsel %vm136, 1, 0
    %v145 = vcvt.s32.f32 %v137
    %v146 = vcvt.s32.f32 %v138
    %v147 = vcvt.s32.f32 %v139
    %v148 = vcvt.s32.f32 %v140
    %v149 = vcvt.s32.f32 %v141
    %v150 = vcvt.s32.f32 %v142
    %v151 = vcvt.s32.f32 %v143
    %v152 = vcvt.s32.f32 %v144
    %v153 = vld [vmem:[%s2] sm:$0xff]
    %v154 = vld [vmem:[%s2 + $0x8] sm:$0xff]
    %v155 = vld [vmem:[%s2 + $0x10] sm:$0xff]
    %v156 = vld [vmem:[%s2 + $0x18] sm:$0xff]
    %v157 = vld [vmem:[%s2 + $0x20] sm:$0xff]
    %v158 = vld [vmem:[%s2 + $0x28] sm:$0xff]
    %v159 = vld [vmem:[%s2 + $0x30] sm:$0x3]
    %vm160 = vcmask 408576
    %v162 = vsel %vm160, %v145, 0
    %v165 = vsel %vm160, %v146, 0
    %v168 = vsel %vm160, %v147, 0
    %v171 = vsel %vm160, %v148, 0
    %v174 = vsel %vm160, %v149, 0
    %v177 = vsel %vm160, %v150, 0
    %v180 = vsel %vm160, %v151, 0
    %v183 = vsel %vm160, %v152, 0
    %vm185 = vcmask 1041408
    %v187 = vsel %vm185, %v159, 0
    %189 = vmatprep.subr.mxu0 0.0
    %190 = vmatpush1.msra.mxu0 %v153
    %191 = vmatprep.subr.mxu0 0.0
    %192 = vmatpush1.msra.mxu0 %v154
    %193 = vmatprep.subr.mxu0 0.0
    %194 = vmatpush1.msra.mxu0 %v155
    %195 = vmatprep.subr.mxu0 0.0
    %196 = vmatpush1.msra.mxu0 %v156
    %197 = vmatprep.subr.mxu0 0.0
    %198 = vmatpush1.msra.mxu0 %v157
    %199 = vmatprep.subr.mxu0 0.0
    %200 = vmatpush1.msra.mxu0 %v158
    %201 = vmatprep.subr.mxu0 0.0
    %202 = vmatpush1.msra.mxu0 %v187
    %203 = vmatprep.subr.mxu0 0.0
    %204 = vmatpush1.msra.mxu0 0.0
    %205 = vmatprep.subr.mxu0 0.0
    %206 = vmatpush1.msra.mxu0 0.0
    %207 = vmatprep.subr.mxu0 0.0
    %208 = vmatpush1.msra.mxu0 0.0
    %209 = vmatprep.subr.mxu0 0.0
    %210 = vmatpush1.msra.mxu0 0.0
    %211 = vmatprep.subr.mxu0 0.0
    %212 = vmatpush1.msra.mxu0 0.0
    %213 = vmatprep.subr.mxu0 0.0
    %214 = vmatpush1.msra.mxu0 0.0
    %215 = vmatprep.subr.mxu0 0.0
    %216 = vmatpush1.msra.mxu0 0.0
    %217 = vmatprep.subr.mxu0 0.0
    %218 = vmatpush1.msra.mxu0 0.0
    %219 = vmatprep.subr.mxu0 0.0
    %220 = vmatpush1.msra.mxu0 0.0
    %221 = vmatprep.subr.mxu0 0.0
    %222 = vmatpush1.msra.mxu0 0.0
    %223 = vmatprep.subr.mxu0 0.0
    %224 = vmatpush1.msra.mxu0 0.0
    %225 = vmatprep.subr.mxu0 0.0
    %226 = vmatpush1.msra.mxu0 0.0
    %227 = vmatprep.subr.mxu0 0.0
    %228 = vmatpush1.msra.mxu0 0.0
    %229 = vmatprep.subr.mxu0 0.0
    %230 = vmatpush1.msra.mxu0 0.0
    %231 = vmatprep.subr.mxu0 0.0
    %232 = vmatpush1.msra.mxu0 0.0
    %233 = vmatprep.subr.mxu0 0.0
    %234 = vmatpush1.msra.mxu0 0.0
    %235 = vmatprep.subr.mxu0 0.0
    %236 = vmatpush1.msra.mxu0 0.0
    %237 = vmatprep.subr.mxu0 0.0
    %238 = vmatpush1.msra.mxu0 0.0
    %239 = vmatprep.subr.mxu0 0.0
    %240 = vmatpush1.msra.mxu0 0.0
    %241 = vmatprep.subr.mxu0 0.0
    %242 = vmatpush1.msra.mxu0 0.0
    %243 = vmatprep.subr.mxu0 0.0
    %244 = vmatpush1.msra.mxu0 0.0
    %245 = vmatprep.subr.mxu0 0.0
    %246 = vmatpush1.msra.mxu0 0.0
    %247 = vmatprep.subr.mxu0 0.0
    %248 = vmatpush1.msra.mxu0 0.0
    %249 = vmatprep.subr.mxu0 0.0
    %250 = vmatpush1.msra.mxu0 0.0
    %251 = vmatprep.subr.mxu0 0.0
    %252 = vmatpush1.msra.mxu0 0.0
    %253 = vmatprep.mubr.f32.mxu0 0.0
    %254 = vmatmul.mubr.f32.gmra.mrb[0].mxu0 %v162
    %v255 = vpop.f32.mrb[0].mxu0
    %v256 = vadd.f32 0.0, %v255
    %v257 = vpop.f32.mrb[0].mxu0
    %258 = vmatprep.mubr.f32.mxu0 0.0
    %259 = vmatmul.mubr.f32.gmra.mrb[0].mxu0 %v165
    %v260 = vpop.f32.mrb[0].mxu0
    %v261 = vadd.f32 0.0, %v260
    %v262 = vpop.f32.mrb[0].mxu0
    %263 = vmatprep.mubr.f32.mxu0 0.0
    %264 = vmatmul.mubr.f32.gmra.mrb[0].mxu0 %v168
    %v265 = vpop.f32.mrb[0].mxu0
    %v266 = vadd.f32 0.0, %v265
    %v267 = vpop.f32.mrb[0].mxu0
    %268 = vmatprep.mubr.f32.mxu0 0.0
    %269 = vmatmul.mubr.f32.gmra.mrb[0].mxu0 %v171
    %v270 = vpop.f32.mrb[0].mxu0
    %v271 = vadd.f32 0.0, %v270
    %v272 = vpop.f32.mrb[0].mxu0
    %273 = vmatprep.mubr.f32.mxu0 0.0
    %274 = vmatmul.mubr.f32.gmra.mrb[0].mxu0 %v174
    %v275 = vpop.f32.mrb[0].mxu0
    %v276 = vadd.f32 0.0, %v275
    %v277 = vpop.f32.mrb[0].mxu0
    %278 = vmatprep.mubr.f32.mxu0 0.0
    %279 = vmatmul.mubr.f32.gmra.mrb[0].mxu0 %v177
    %v280 = vpop.f32.mrb[0].mxu0
    %v281 = vadd.f32 0.0, %v280
    %v282 = vpop.f32.mrb[0].mxu0
    %283 = vmatprep.mubr.f32.mxu0 0.0
    %284 = vmatmul.mubr.f32.gmra.mrb[0].mxu0 %v180
    %v285 = vpop.f32.mrb[0].mxu0
    %v286 = vadd.f32 0.0, %v285
    %v287 = vpop.f32.mrb[0].mxu0
    %288 = vmatprep.mubr.f32.mxu0 0.0
    %289 = vmatmul.mubr.f32.gmra.mrb[0].mxu0 %v183
    %v290 = vpop.f32.mrb[0].mxu0
    %v291 = vadd.f32 0.0, %v290
    %v292 = vpop.f32.mrb[0].mxu0
    %293 = vdwg.mxu0
    %v294 = vld [vmem:[%s1] sm:$0xff]
    %v295 = vld [vmem:[%s1 + $0x8] sm:$0xff]
    %v296 = vld [vmem:[%s1 + $0x10] sm:$0xff]
    %v297 = vld [vmem:[%s1 + $0x18] sm:$0xff]
    %v298 = vld [vmem:[%s1 + $0x20] sm:$0xff]
    %v299 = vld [vmem:[%s1 + $0x28] sm:$0xff]
    %v300 = vld [vmem:[%s1 + $0x30] sm:$0xff]
    %v301 = vld [vmem:[%s1 + $0x38] sm:$0xff]
    %303 = vset.pattern.permute.xlu0 0
    %304 = vperm.xlu0 %303, %v294
    %v305 = vpop.permute.xlu0 %304
    %308 = vset.pattern.permute.xlu0 0
    %309 = vperm.xlu0 %308, %v295
    %v310 = vpop.permute.xlu0 %309
    %313 = vset.pattern.permute.xlu0 0
    %314 = vperm.xlu0 %313, %v296
    %v315 = vpop.permute.xlu0 %314
    %318 = vset.pattern.permute.xlu0 0
    %319 = vperm.xlu0 %318, %v297
    %v320 = vpop.permute.xlu0 %319
    %323 = vset.pattern.permute.xlu0 0
    %324 = vperm.xlu0 %323, %v298
    %v325 = vpop.permute.xlu0 %324
    %328 = vset.pattern.permute.xlu0 0
    %329 = vperm.xlu0 %328, %v299
    %v330 = vpop.permute.xlu0 %329
    %333 = vset.pattern.permute.xlu0 0
    %334 = vperm.xlu0 %333, %v300
    %v335 = vpop.permute.xlu0 %334
    %338 = vset.pattern.permute.xlu0 0
    %339 = vperm.xlu0 %338, %v301
    %v340 = vpop.permute.xlu0 %339
    %v342 = vmul.f32 %v256, %v305
    %v343 = vmul.f32 %v261, %v310
    %v344 = vmul.f32 %v266, %v315
    %v345 = vmul.f32 %v271, %v320
    %v346 = vmul.f32 %v276, %v325
    %v347 = vmul.f32 %v281, %v330
    %v348 = vmul.f32 %v286, %v335
    %v349 = vmul.f32 %v291, %v340
    %v350 = vadd.s32 %v104, 128
    %vm351 = vcmp.lt.s32.totalorder %v104, 0
    %v352 = vsub.s32 0, %v104
    %v353 = vsel %vm351, %v352, %v104
    %v354 = vshrl.u32 %v353, 6
    %v355 = vand.u32 %v353, 63
    %v356 = vsub.s32 0, %v355
    %v357 = vsel %vm351, %v356, %v355
    %vm358 = vcmp.lt.s32.totalorder %v350, 0
    %v359 = vsub.s32 0, %v350
    %v360 = vsel %vm358, %v359, %v350
    %v361 = vshrl.u32 %v360, 6
    %v362 = vand.u32 %v360, 63
    %v363 = vsub.s32 0, %v362
    %v364 = vsel %vm358, %v363, %v362
    %vm365 = vcmp.ne.s32.totalorder %v357, 0
    %vm366 = vcmp.ne.s32.totalorder %v364, 0
    %vm367 = vcmp.lt.s32.totalorder %v357, 0
    %vm368 = vcmp.lt.s32.totalorder %v364, 0
    %vm369 = vmand %vm367, %vm365
    %vm370 = vmand %vm368, %vm366
    %v371 = vadd.s32 %v357, 64
    %v372 = vadd.s32 %v364, 64
    %v373 = vsel %vm369, %v371, %v357
    %v374 = vsel %vm370, %v372, %v364
    %vm375 = vcmp.lt.s32.totalorder %v373, 32
    %vm376 = vcmp.lt.s32.totalorder %v374, 32
    %vm377 = vcmp.lt.s32.totalorder %v104, 32
    %v378 = vld [vmem:[%s3] sm:$0xff]
    %v379 = vld [vmem:[%s3 + $0x8] sm:$0xff]
    %v380 = vld [vmem:[%s3 + $0x10] sm:$0xff]
    %v381 = vld [vmem:[%s3 + $0x18] sm:$0xff]
    %v382 = vld [vmem:[%s5] sm:$0x3]
    %v384 = vlaneseq
    %v385 = vshrl.u32 %v384, 7
    %v386 = vsub.s32 0, %v385
    %v387 = vrot.slane %v382, %v386
    %v388 = vlaneseq
    %v389 = vshrl.u32 %v388, 7
    %v390 = vsub.s32 1, %v389
    %v391 = vrot.slane %v382, %v390
    %vm394 = vcmask 130048
    %v396 = vsel %vm394, %v342, 0
    %v399 = vsel %vm394, %v343, 0
    %v402 = vsel %vm394, %v344, 0
    %v405 = vsel %vm394, %v345, 0
    %v408 = vsel %vm394, %v346, 0
    %v411 = vsel %vm394, %v347, 0
    %v414 = vsel %vm394, %v348, 0
    %v417 = vsel %vm394, %v349, 0
    %419 = vmatprep.subr.mxu0 %v379
    %420 = vmatpush1.msra.mxu0 %v378
    %421 = vmatprep.subr.mxu0 %v381
    %422 = vmatpush1.msra.mxu0 %v380
    %423 = vmatprep.subr.mxu0 0.0
    %424 = vmatpush1.msra.mxu0 0.0
    %425 = vmatprep.subr.mxu0 0.0
    %426 = vmatpush1.msra.mxu0 0.0
    %427 = vmatprep.subr.mxu0 0.0
    %428 = vmatpush1.msra.mxu0 0.0
    %429 = vmatprep.subr.mxu0 0.0
    %430 = vmatpush1.msra.mxu0 0.0
    %431 = vmatprep.subr.mxu0 0.0
    %432 = vmatpush1.msra.mxu0 0.0
    %433 = vmatprep.subr.mxu0 0.0
    %434 = vmatpush1.msra.mxu0 0.0
    %435 = vmatprep.subr.mxu0 0.0
    %436 = vmatpush1.msra.mxu0 0.0
    %437 = vmatprep.subr.mxu0 0.0
    %438 = vmatpush1.msra.mxu0 0.0
    %439 = vmatprep.subr.mxu0 0.0
    %440 = vmatpush1.msra.mxu0 0.0
    %441 = vmatprep.subr.mxu0 0.0
    %442 = vmatpush1.msra.mxu0 0.0
    %443 = vmatprep.subr.mxu0 0.0
    %444 = vmatpush1.msra.mxu0 0.0
    %445 = vmatprep.subr.mxu0 0.0
    %446 = vmatpush1.msra.mxu0 0.0
    %447 = vmatprep.subr.mxu0 0.0
    %448 = vmatpush1.msra.mxu0 0.0
    %449 = vmatprep.subr.mxu0 0.0
    %450 = vmatpush1.msra.mxu0 0.0
    %451 = vmatprep.subr.mxu0 0.0
    %452 = vmatpush1.msra.mxu0 0.0
    %453 = vmatprep.subr.mxu0 0.0
    %454 = vmatpush1.msra.mxu0 0.0
    %455 = vmatprep.subr.mxu0 0.0
    %456 = vmatpush1.msra.mxu0 0.0
    %457 = vmatprep.subr.mxu0 0.0
    %458 = vmatpush1.msra.mxu0 0.0
    %459 = vmatprep.subr.mxu0 0.0
    %460 = vmatpush1.msra.mxu0 0.0
    %461 = vmatprep.subr.mxu0 0.0
    %462 = vmatpush1.msra.mxu0 0.0
    %463 = vmatprep.subr.mxu0 0.0
    %464 = vmatpush1.msra.mxu0 0.0
    %465 = vmatprep.subr.mxu0 0.0
    %466 = vmatpush1.msra.mxu0 0.0
    %467 = vmatprep.subr.mxu0 0.0
    %468 = vmatpush1.msra.mxu0 0.0
    %469 = vmatprep.subr.mxu0 0.0
    %470 = vmatpush1.msra.mxu0 0.0
    %471 = vmatprep.subr.mxu0 0.0
    %472 = vmatpush1.msra.mxu0 0.0
    %473 = vmatprep.subr.mxu0 0.0
    %474 = vmatpush1.msra.mxu0 0.0
    %475 = vmatprep.subr.mxu0 0.0
    %476 = vmatpush1.msra.mxu0 0.0
    %477 = vmatprep.subr.mxu0 0.0
    %478 = vmatpush1.msra.mxu0 0.0
    %479 = vmatprep.subr.mxu0 0.0
    %480 = vmatpush1.msra.mxu0 0.0
    %481 = vmatprep.subr.mxu0 0.0
    %482 = vmatpush1.msra.mxu0 0.0
    %483 = vmatprep.mubr.f32.mxu0 0.0
    %484 = vmatmul.mubr.f32.gmra.mrb[0].mxu0 %v396
    %v485 = vpop.f32.mrb[0].mxu0
    %v486 = vadd.f32 %v387, %v485
    %v487 = vpop.f32.mrb[0].mxu0
    %v488 = vadd.f32 %v391, %v487
    %489 = vmatprep.mubr.f32.mxu0 0.0
    %490 = vmatmul.mubr.f32.gmra.mrb[0].mxu0 %v399
    %v491 = vpop.f32.mrb[0].mxu0
    %v492 = vadd.f32 %v387, %v491
    %v493 = vpop.f32.mrb[0].mxu0
    %v494 = vadd.f32 %v391, %v493
    %495 = vmatprep.mubr.f32.mxu0 0.0
    %496 = vmatmul.mubr.f32.gmra.mrb[0].mxu0 %v402
    %v497 = vpop.f32.mrb[0].mxu0
    %v498 = vadd.f32 %v387, %v497
    %v499 = vpop.f32.mrb[0].mxu0
    %v500 = vadd.f32 %v391, %v499
    %501 = vmatprep.mubr.f32.mxu0 0.0
    %502 = vmatmul.mubr.f32.gmra.mrb[0].mxu0 %v405
    %v503 = vpop.f32.mrb[0].mxu0
    %v504 = vadd.f32 %v387, %v503
    %v505 = vpop.f32.mrb[0].mxu0
    %v506 = vadd.f32 %v391, %v505
    %507 = vmatprep.mubr.f32.mxu0 0.0
    %508 = vmatmul.mubr.f32.gmra.mrb[0].mxu0 %v408
    %v509 = vpop.f32.mrb[0].mxu0
    %v510 = vadd.f32 %v387, %v509
    %v511 = vpop.f32.mrb[0].mxu0
    %v512 = vadd.f32 %v391, %v511
    %513 = vmatprep.mubr.f32.mxu0 0.0
    %514 = vmatmul.mubr.f32.gmra.mrb[0].mxu0 %v411
    %v515 = vpop.f32.mrb[0].mxu0
    %v516 = vadd.f32 %v387, %v515
    %v517 = vpop.f32.mrb[0].mxu0
    %v518 = vadd.f32 %v391, %v517
    %519 = vmatprep.mubr.f32.mxu0 0.0
    %520 = vmatmul.mubr.f32.gmra.mrb[0].mxu0 %v414
    %v521 = vpop.f32.mrb[0].mxu0
    %v522 = vadd.f32 %v387, %v521
    %v523 = vpop.f32.mrb[0].mxu0
    %v524 = vadd.f32 %v391, %v523
    %525 = vmatprep.mubr.f32.mxu0 0.0
    %526 = vmatmul.mubr.f32.gmra.mrb[0].mxu0 %v417
    %v527 = vpop.f32.mrb[0].mxu0
    %v528 = vadd.f32 %v387, %v527
    %v529 = vpop.f32.mrb[0].mxu0
    %v530 = vadd.f32 %v391, %v529
    %531 = vdwg.mxu0
    %v532 = vsel %vm375, 1, 0
    %v533 = vsel %vm376, 1, 0
    %vm534 = vcmp.eq.s32.totalorder %v532, 1
    %vm535 = vcmp.eq.s32.totalorder %v533, 1
    %v536 = vsel %vm534, %v486, %v528
    %v537 = vsel %vm535, %v488, %v530
    %v538 = vsel %vm534, %v492, %v522
    %v539 = vsel %vm535, %v494, %v524
    %v540 = vsel %vm534, %v498, %v516
    %v541 = vsel %vm535, %v500, %v518
    %v542 = vsel %vm534, %v504, %v510
    %v543 = vsel %vm535, %v506, %v512
    %v544 = vsel %vm534, %v510, %v504
    %v545 = vsel %vm535, %v512, %v506
    %v546 = vsel %vm534, %v516, %v498
    %v547 = vsel %vm535, %v518, %v500
    %v548 = vsel %vm534, %v522, %v492
    %v549 = vsel %vm535, %v524, %v494
    %v550 = vsel %vm534, %v528, %v486
    %v551 = vsel %vm535, %v530, %v488
    %v552 = vld [vmem:[%s4] sm:$0xff]
    %v553 = vld [vmem:[%s4 + $0x8] sm:$0xff]
    %v554 = vld [vmem:[%s4 + $0x10] sm:$0xff]
    %v555 = vld [vmem:[%s4 + $0x18] sm:$0xff]
    %v556 = vld [vmem:[%s4 + $0x20] sm:$0xff]
    %v557 = vld [vmem:[%s4 + $0x28] sm:$0xff]
    %v558 = vld [vmem:[%s4 + $0x30] sm:$0xff]
    %v559 = vld [vmem:[%s4 + $0x38] sm:$0xff]
    %v560 = vld [vmem:[%s4 + $0x40] sm:$0xff]
    %v561 = vld [vmem:[%s4 + $0x48] sm:$0xff]
    %v562 = vld [vmem:[%s4 + $0x50] sm:$0xff]
    %v563 = vld [vmem:[%s4 + $0x58] sm:$0xff]
    %v564 = vld [vmem:[%s4 + $0x60] sm:$0xff]
    %v565 = vld [vmem:[%s4 + $0x68] sm:$0xff]
    %v566 = vld [vmem:[%s4 + $0x70] sm:$0xff]
    %v567 = vld [vmem:[%s4 + $0x78] sm:$0xff]
    %vm568 = vcmask 523264
    %v570 = vsel %vm568, 0.0, 0
    %572 = vmatprep.subr.mxu0 %v553
    %573 = vmatpush1.msra.mxu0 %v552
    %574 = vmatprep.subr.mxu0 %v555
    %575 = vmatpush1.msra.mxu0 %v554
    %576 = vmatprep.subr.mxu0 %v557
    %577 = vmatpush1.msra.mxu0 %v556
    %578 = vmatprep.subr.mxu0 %v559
    %579 = vmatpush1.msra.mxu0 %v558
    %580 = vmatprep.subr.mxu0 %v561
    %581 = vmatpush1.msra.mxu0 %v560
    %582 = vmatprep.subr.mxu0 %v563
    %583 = vmatpush1.msra.mxu0 %v562
    %584 = vmatprep.subr.mxu0 %v565
    %585 = vmatpush1.msra.mxu0 %v564
    %586 = vmatprep.subr.mxu0 %v567
    %587 = vmatpush1.msra.mxu0 %v566
    %588 = vmatprep.subr.mxu0 0.0
    %589 = vmatpush1.msra.mxu0 0.0
    %590 = vmatprep.subr.mxu0 0.0
    %591 = vmatpush1.msra.mxu0 0.0
    %592 = vmatprep.subr.mxu0 0.0
    %593 = vmatpush1.msra.mxu0 0.0
    %594 = vmatprep.subr.mxu0 0.0
    %595 = vmatpush1.msra.mxu0 0.0
    %596 = vmatprep.subr.mxu0 0.0
    %597 = vmatpush1.msra.mxu0 0.0
    %598 = vmatprep.subr.mxu0 0.0
    %599 = vmatpush1.msra.mxu0 0.0
    %600 = vmatprep.subr.mxu0 0.0
    %601 = vmatpush1.msra.mxu0 0.0
    %602 = vmatprep.subr.mxu0 0.0
    %603 = vmatpush1.msra.mxu0 0.0
    %604 = vmatprep.subr.mxu0 0.0
    %605 = vmatpush1.msra.mxu0 0.0
    %606 = vmatprep.subr.mxu0 0.0
    %607 = vmatpush1.msra.mxu0 0.0
    %608 = vmatprep.subr.mxu0 0.0
    %609 = vmatpush1.msra.mxu0 0.0
    %610 = vmatprep.subr.mxu0 0.0
    %611 = vmatpush1.msra.mxu0 0.0
    %612 = vmatprep.subr.mxu0 0.0
    %613 = vmatpush1.msra.mxu0 0.0
    %614 = vmatprep.subr.mxu0 0.0
    %615 = vmatpush1.msra.mxu0 0.0
    %616 = vmatprep.subr.mxu0 0.0
    %617 = vmatpush1.msra.mxu0 0.0
    %618 = vmatprep.subr.mxu0 0.0
    %619 = vmatpush1.msra.mxu0 0.0
    %620 = vmatprep.subr.mxu0 0.0
    %621 = vmatpush1.msra.mxu0 0.0
    %622 = vmatprep.subr.mxu0 0.0
    %623 = vmatpush1.msra.mxu0 0.0
    %624 = vmatprep.subr.mxu0 0.0
    %625 = vmatpush1.msra.mxu0 0.0
    %626 = vmatprep.subr.mxu0 0.0
    %627 = vmatpush1.msra.mxu0 0.0
    %628 = vmatprep.subr.mxu0 0.0
    %629 = vmatpush1.msra.mxu0 0.0
    %630 = vmatprep.subr.mxu0 0.0
    %631 = vmatpush1.msra.mxu0 0.0
    %632 = vmatprep.subr.mxu0 0.0
    %633 = vmatpush1.msra.mxu0 0.0
    %634 = vmatprep.subr.mxu0 0.0
    %635 = vmatpush1.msra.mxu0 0.0
    %636 = vmatprep.mubr.f32.mxu0 0.0
    %637 = vmatmul.mubr.f32.gmra.mrb[0].mxu0 %v570
    %v638 = vpop.f32.mrb[0].mxu0
    %v639 = vadd.f32 0.0, %v638
    %v640 = vpop.f32.mrb[0].mxu0
    %v641 = vadd.f32 0.0, %v640
    %642 = vdwg.mxu0
    %v643 = vadd.f32 %v536, %v639
    %v644 = vadd.f32 %v537, %v641
    %v645 = vxor.u32 %v643, 2147483648
    %v646 = vxor.u32 %v644, 2147483648
    %v647 = vmul.f32 %v645, 1.442695
    %v648 = vpow.pop %v647
    %v649 = vmul.f32 %v646, 1.442695
    %v650 = vpow.pop %v649
    %v651 = vadd.f32 %v648, 1.0
    %v652 = vadd.f32 %v650, 1.0
    %v653 = vrcp.pop %v651
    %v654 = vmul.f32 1.0, %v653
    %v655 = vrcp.pop %v652
    %v656 = vmul.f32 1.0, %v655
    %v657 = vtanh.pop %v644
    %v658 = vmul.f32 %v654, 0.0
    %660 = vrot.lane.b32.xlu0 %v657, 64
    %v661 = vpop.permute.xlu0 %660
    %v663 = vmul.f32 %v654, %v661
    %665 = vrot.lane.b32.xlu0 %v663, 64
    %v666 = vpop.permute.xlu0 %665
    %v668 = vadd.f32 %v658, %v666
    %v669 = vtanh.pop %v668
    %671 = vrot.lane.b32.xlu0 %v669, 64
    %v672 = vpop.permute.xlu0 %671
    %v674 = vmul.f32 %v656, %v672
    %675 = vst.msk [vmem:[#allocation2] sm:$0xff] %vm568, %v674
    %v677 = vsel %vm568, %v674, 0
    %679 = vmatprep.subr.mxu0 %v553
    %680 = vmatpush1.msra.mxu0 %v552
    %681 = vmatprep.subr.mxu0 %v555
    %682 = vmatpush1.msra.mxu0 %v554
    %683 = vmatprep.subr.mxu0 %v557
    %684 = vmatpush1.msra.mxu0 %v556
    %685 = vmatprep.subr.mxu0 %v559
    %686 = vmatpush1.msra.mxu0 %v558
    %687 = vmatprep.subr.mxu0 %v561
    %688 = vmatpush1.msra.mxu0 %v560
    %689 = vmatprep.subr.mxu0 %v563
    %690 = vmatpush1.msra.mxu0 %v562
    %691 = vmatprep.subr.mxu0 %v565
    %692 = vmatpush1.msra.mxu0 %v564
    %693 = vmatprep.subr.mxu0 %v567
    %694 = vmatpush1.msra.mxu0 %v566
    %695 = vmatprep.subr.mxu0 0.0
    %696 = vmatpush1.msra.mxu0 0.0
    %697 = vmatprep.subr.mxu0 0.0
    %698 = vmatpush1.msra.mxu0 0.0
    %699 = vmatprep.subr.mxu0 0.0
    %700 = vmatpush1.msra.mxu0 0.0
    %701 = vmatprep.subr.mxu0 0.0
    %702 = vmatpush1.msra.mxu0 0.0
    %703 = vmatprep.subr.mxu0 0.0
    %704 = vmatpush1.msra.mxu0 0.0
    %705 = vmatprep.subr.mxu0 0.0
    %706 = vmatpush1.msra.mxu0 0.0
    %707 = vmatprep.subr.mxu0 0.0
    %708 = vmatpush1.msra.mxu0 0.0
    %709 = vmatprep.subr.mxu0 0.0
    %710 = vmatpush1.msra.mxu0 0.0
    %711 = vmatprep.subr.mxu0 0.0
    %712 = vmatpush1.msra.mxu0 0.0
    %713 = vmatprep.subr.mxu0 0.0
    %714 = vmatpush1.msra.mxu0 0.0
    %715 = vmatprep.subr.mxu0 0.0
    %716 = vmatpush1.msra.mxu0 0.0
    %717 = vmatprep.subr.mxu0 0.0
    %718 = vmatpush1.msra.mxu0 0.0
    %719 = vmatprep.subr.mxu0 0.0
    %720 = vmatpush1.msra.mxu0 0.0
    %721 = vmatprep.subr.mxu0 0.0
    %722 = vmatpush1.msra.mxu0 0.0
    %723 = vmatprep.subr.mxu0 0.0
    %724 = vmatpush1.msra.mxu0 0.0
    %725 = vmatprep.subr.mxu0 0.0
    %726 = vmatpush1.msra.mxu0 0.0
    %727 = vmatprep.subr.mxu0 0.0
    %728 = vmatpush1.msra.mxu0 0.0
    %729 = vmatprep.subr.mxu0 0.0
    %730 = vmatpush1.msra.mxu0 0.0
    %731 = vmatprep.subr.mxu0 0.0
    %732 = vmatpush1.msra.mxu0 0.0
    %733 = vmatprep.subr.mxu0 0.0
    %734 = vmatpush1.msra.mxu0 0.0
    %735 = vmatprep.subr.mxu0 0.0
    %736 = vmatpush1.msra.mxu0 0.0
    %737 = vmatprep.subr.mxu0 0.0
    %738 = vmatpush1.msra.mxu0 0.0
    %739 = vmatprep.subr.mxu0 0.0
    %740 = vmatpush1.msra.mxu0 0.0
    %741 = vmatprep.subr.mxu0 0.0
    %742 = vmatpush1.msra.mxu0 0.0
    %743 = vmatprep.mubr.f32.mxu0 0.0
    %744 = vmatmul.mubr.f32.gmra.mrb[0].mxu0 %v677
    %v745 = vpop.f32.mrb[0].mxu0
    %v746 = vadd.f32 0.0, %v745
    %v747 = vpop.f32.mrb[0].mxu0
    %v748 = vadd.f32 0.0, %v747
    %749 = vdwg.mxu0
    %v750 = vadd.f32 %v538, %v746
    %v751 = vadd.f32 %v539, %v748
    %v752 = vxor.u32 %v750, 2147483648
    %v753 = vxor.u32 %v751, 2147483648
    %v754 = vmul.f32 %v752, 1.442695
    %v755 = vpow.pop %v754
    %v756 = vmul.f32 %v753, 1.442695
    %v757 = vpow.pop %v756
    %v758 = vadd.f32 %v755, 1.0
    %v759 = vadd.f32 %v757, 1.0
    %v760 = vrcp.pop %v758
    %v761 = vmul.f32 1.0, %v760
    %v762 = vrcp.pop %v759
    %v763 = vmul.f32 1.0, %v762
    %v764 = vtanh.pop %v751
    %v765 = vmul.f32 %v761, %v668
    %767 = vrot.lane.b32.xlu0 %v764, 64
    %v768 = vpop.permute.xlu0 %767
    %v770 = vmul.f32 %v761, %v768
    %772 = vrot.lane.b32.xlu0 %v770, 64
    %v773 = vpop.permute.xlu0 %772
    %v775 = vadd.f32 %v765, %v773
    %v776 = vtanh.pop %v775
    %778 = vrot.lane.b32.xlu0 %v776, 64
    %v779 = vpop.permute.xlu0 %778
    %v781 = vmul.f32 %v763, %v779
    %782 = vst.msk [vmem:[#allocation2 + $0x8] sm:$0xff] %vm568, %v781
    %v784 = vsel %vm568, %v781, 0
    %786 = vmatprep.subr.mxu0 %v553
    %787 = vmatpush1.msra.mxu0 %v552
    %788 = vmatprep.subr.mxu0 %v555
    %789 = vmatpush1.msra.mxu0 %v554
    %790 = vmatprep.subr.mxu0 %v557
    %791 = vmatpush1.msra.mxu0 %v556
    %792 = vmatprep.subr.mxu0 %v559
    %793 = vmatpush1.msra.mxu0 %v558
    %794 = vmatprep.subr.mxu0 %v561
    %795 = vmatpush1.msra.mxu0 %v560
    %796 = vmatprep.subr.mxu0 %v563
    %797 = vmatpush1.msra.mxu0 %v562
    %798 = vmatprep.subr.mxu0 %v565
    %799 = vmatpush1.msra.mxu0 %v564
    %800 = vmatprep.subr.mxu0 %v567
    %801 = vmatpush1.msra.mxu0 %v566
    %802 = vmatprep.subr.mxu0 0.0
    %803 = vmatpush1.msra.mxu0 0.0
    %804 = vmatprep.subr.mxu0 0.0
    %805 = vmatpush1.msra.mxu0 0.0
    %806 = vmatprep.subr.mxu0 0.0
    %807 = vmatpush1.msra.mxu0 0.0
    %808 = vmatprep.subr.mxu0 0.0
    %809 = vmatpush1.msra.mxu0 0.0
    %810 = vmatprep.subr.mxu0 0.0
    %811 = vmatpush1.msra.mxu0 0.0
    %812 = vmatprep.subr.mxu0 0.0
    %813 = vmatpush1.msra.mxu0 0.0
    %814 = vmatprep.subr.mxu0 0.0
    %815 = vmatpush1.msra.mxu0 0.0
    %816 = vmatprep.subr.mxu0 0.0
    %817 = vmatpush1.msra.mxu0 0.0
    %818 = vmatprep.subr.mxu0 0.0
    %819 = vmatpush1.msra.mxu0 0.0
    %820 = vmatprep.subr.mxu0 0.0
    %821 = vmatpush1.msra.mxu0 0.0
    %822 = vmatprep.subr.mxu0 0.0
    %823 = vmatpush1.msra.mxu0 0.0
    %824 = vmatprep.subr.mxu0 0.0
    %825 = vmatpush1.msra.mxu0 0.0
    %826 = vmatprep.subr.mxu0 0.0
    %827 = vmatpush1.msra.mxu0 0.0
    %828 = vmatprep.subr.mxu0 0.0
    %829 = vmatpush1.msra.mxu0 0.0
    %830 = vmatprep.subr.mxu0 0.0
    %831 = vmatpush1.msra.mxu0 0.0
    %832 = vmatprep.subr.mxu0 0.0
    %833 = vmatpush1.msra.mxu0 0.0
    %834 = vmatprep.subr.mxu0 0.0
    %835 = vmatpush1.msra.mxu0 0.0
    %836 = vmatprep.subr.mxu0 0.0
    %837 = vmatpush1.msra.mxu0 0.0
    %838 = vmatprep.subr.mxu0 0.0
    %839 = vmatpush1.msra.mxu0 0.0
    %840 = vmatprep.subr.mxu0 0.0
    %841 = vmatpush1.msra.mxu0 0.0
    %842 = vmatprep.subr.mxu0 0.0
    %843 = vmatpush1.msra.mxu0 0.0
    %844 = vmatprep.subr.mxu0 0.0
    %845 = vmatpush1.msra.mxu0 0.0
    %846 = vmatprep.subr.mxu0 0.0
    %847 = vmatpush1.msra.mxu0 0.0
    %848 = vmatprep.subr.mxu0 0.0
    %849 = vmatpush1.msra.mxu0 0.0
    %850 = vmatprep.mubr.f32.mxu0 0.0
    %851 = vmatmul.mubr.f32.gmra.mrb[0].mxu0 %v784
    %v852 = vpop.f32.mrb[0].mxu0
    %v853 = vadd.f32 0.0, %v852
    %v854 = vpop.f32.mrb[0].mxu0
    %v855 = vadd.f32 0.0, %v854
    %856 = vdwg.mxu0
    %v857 = vadd.f32 %v540, %v853
    %v858 = vadd.f32 %v541, %v855
    %v859 = vxor.u32 %v857, 2147483648
    %v860 = vxor.u32 %v858, 2147483648
    %v861 = vmul.f32 %v859, 1.442695
    %v862 = vpow.pop %v861
    %v863 = vmul.f32 %v860, 1.442695
    %v864 = vpow.pop %v863
    %v865 = vadd.f32 %v862, 1.0
    %v866 = vadd.f32 %v864, 1.0
    %v867 = vrcp.pop %v865
    %v868 = vmul.f32 1.0, %v867
    %v869 = vrcp.pop %v866
    %v870 = vmul.f32 1.0, %v869
    %v871 = vtanh.pop %v858
    %v872 = vmul.f32 %v868, %v775
    %874 = vrot.lane.b32.xlu0 %v871, 64
    %v875 = vpop.permute.xlu0 %874
    %v877 = vmul.f32 %v868, %v875
    %879 = vrot.lane.b32.xlu0 %v877, 64
    %v880 = vpop.permute.xlu0 %879
    %v882 = vadd.f32 %v872, %v880
    %v883 = vtanh.pop %v882
    %885 = vrot.lane.b32.xlu0 %v883, 64
    %v886 = vpop.permute.xlu0 %885
    %v888 = vmul.f32 %v870, %v886
    %889 = vst.msk [vmem:[#allocation2 + $0x10] sm:$0xff] %vm568, %v888
    %v891 = vsel %vm568, %v888, 0
    %893 = vmatprep.subr.mxu0 %v553
    %894 = vmatpush1.msra.mxu0 %v552
    %895 = vmatprep.subr.mxu0 %v555
    %896 = vmatpush1.msra.mxu0 %v554
    %897 = vmatprep.subr.mxu0 %v557
    %898 = vmatpush1.msra.mxu0 %v556
    %899 = vmatprep.subr.mxu0 %v559
    %900 = vmatpush1.msra.mxu0 %v558
    %901 = vmatprep.subr.mxu0 %v561
    %902 = vmatpush1.msra.mxu0 %v560
    %903 = vmatprep.subr.mxu0 %v563
    %904 = vmatpush1.msra.mxu0 %v562
    %905 = vmatprep.subr.mxu0 %v565
    %906 = vmatpush1.msra.mxu0 %v564
    %907 = vmatprep.subr.mxu0 %v567
    %908 = vmatpush1.msra.mxu0 %v566
    %909 = vmatprep.subr.mxu0 0.0
    %910 = vmatpush1.msra.mxu0 0.0
    %911 = vmatprep.subr.mxu0 0.0
    %912 = vmatpush1.msra.mxu0 0.0
    %913 = vmatprep.subr.mxu0 0.0
    %914 = vmatpush1.msra.mxu0 0.0
    %915 = vmatprep.subr.mxu0 0.0
    %916 = vmatpush1.msra.mxu0 0.0
    %917 = vmatprep.subr.mxu0 0.0
    %918 = vmatpush1.msra.mxu0 0.0
    %919 = vmatprep.subr.mxu0 0.0
    %920 = vmatpush1.msra.mxu0 0.0
    %921 = vmatprep.subr.mxu0 0.0
    %922 = vmatpush1.msra.mxu0 0.0
    %923 = vmatprep.subr.mxu0 0.0
    %924 = vmatpush1.msra.mxu0 0.0
    %925 = vmatprep.subr.mxu0 0.0
    %926 = vmatpush1.msra.mxu0 0.0
    %927 = vmatprep.subr.mxu0 0.0
    %928 = vmatpush1.msra.mxu0 0.0
    %929 = vmatprep.subr.mxu0 0.0
    %930 = vmatpush1.msra.mxu0 0.0
    %931 = vmatprep.subr.mxu0 0.0
    %932 = vmatpush1.msra.mxu0 0.0
    %933 = vmatprep.subr.mxu0 0.0
    %934 = vmatpush1.msra.mxu0 0.0
    %935 = vmatprep.subr.mxu0 0.0
    %936 = vmatpush1.msra.mxu0 0.0
    %937 = vmatprep.subr.mxu0 0.0
    %938 = vmatpush1.msra.mxu0 0.0
    %939 = vmatprep.subr.mxu0 0.0
    %940 = vmatpush1.msra.mxu0 0.0
    %941 = vmatprep.subr.mxu0 0.0
    %942 = vmatpush1.msra.mxu0 0.0
    %943 = vmatprep.subr.mxu0 0.0
    %944 = vmatpush1.msra.mxu0 0.0
    %945 = vmatprep.subr.mxu0 0.0
    %946 = vmatpush1.msra.mxu0 0.0
    %947 = vmatprep.subr.mxu0 0.0
    %948 = vmatpush1.msra.mxu0 0.0
    %949 = vmatprep.subr.mxu0 0.0
    %950 = vmatpush1.msra.mxu0 0.0
    %951 = vmatprep.subr.mxu0 0.0
    %952 = vmatpush1.msra.mxu0 0.0
    %953 = vmatprep.subr.mxu0 0.0
    %954 = vmatpush1.msra.mxu0 0.0
    %955 = vmatprep.subr.mxu0 0.0
    %956 = vmatpush1.msra.mxu0 0.0
    %957 = vmatprep.mubr.f32.mxu0 0.0
    %958 = vmatmul.mubr.f32.gmra.mrb[0].mxu0 %v891
    %v959 = vpop.f32.mrb[0].mxu0
    %v960 = vadd.f32 0.0, %v959
    %v961 = vpop.f32.mrb[0].mxu0
    %v962 = vadd.f32 0.0, %v961
    %963 = vdwg.mxu0
    %v964 = vadd.f32 %v542, %v960
    %v965 = vadd.f32 %v543, %v962
    %v966 = vxor.u32 %v964, 2147483648
    %v967 = vxor.u32 %v965, 2147483648
    %v968 = vmul.f32 %v966, 1.442695
    %v969 = vpow.pop %v968
    %v970 = vmul.f32 %v967, 1.442695
    %v971 = vpow.pop %v970
    %v972 = vadd.f32 %v969, 1.0
    %v973 = vadd.f32 %v971, 1.0
    %v974 = vrcp.pop %v972
    %v975 = vmul.f32 1.0, %v974
    %v976 = vrcp.pop %v973
    %v977 = vmul.f32 1.0, %v976
    %v978 = vtanh.pop %v965
    %v979 = vmul.f32 %v975, %v882
    %981 = vrot.lane.b32.xlu0 %v978, 64
    %v982 = vpop.permute.xlu0 %981
    %v984 = vmul.f32 %v975, %v982
    %986 = vrot.lane.b32.xlu0 %v984, 64
    %v987 = vpop.permute.xlu0 %986
    %v989 = vadd.f32 %v979, %v987
    %v990 = vtanh.pop %v989
    %992 = vrot.lane.b32.xlu0 %v990, 64
    %v993 = vpop.permute.xlu0 %992
    %v995 = vmul.f32 %v977, %v993
    %996 = vst.msk [vmem:[#allocation2 + $0x18] sm:$0xff] %vm568, %v995
    %v998 = vsel %vm568, %v995, 0
    %1000 = vmatprep.subr.mxu0 %v553
    %1001 = vmatpush1.msra.mxu0 %v552
    %1002 = vmatprep.subr.mxu0 %v555
    %1003 = vmatpush1.msra.mxu0 %v554
    %1004 = vmatprep.subr.mxu0 %v557
    %1005 = vmatpush1.msra.mxu0 %v556
    %1006 = vmatprep.subr.mxu0 %v559
    %1007 = vmatpush1.msra.mxu0 %v558
    %1008 = vmatprep.subr.mxu0 %v561
    %1009 = vmatpush1.msra.mxu0 %v560
    %1010 = vmatprep.subr.mxu0 %v563
    %1011 = vmatpush1.msra.mxu0 %v562
    %1012 = vmatprep.subr.mxu0 %v565
    %1013 = vmatpush1.msra.mxu0 %v564
    %1014 = vmatprep.subr.mxu0 %v567
    %1015 = vmatpush1.msra.mxu0 %v566
    %1016 = vmatprep.subr.mxu0 0.0
    %1017 = vmatpush1.msra.mxu0 0.0
    %1018 = vmatprep.subr.mxu0 0.0
    %1019 = vmatpush1.msra.mxu0 0.0
    %1020 = vmatprep.subr.mxu0 0.0
    %1021 = vmatpush1.msra.mxu0 0.0
    %1022 = vmatprep.subr.mxu0 0.0
    %1023 = vmatpush1.msra.mxu0 0.0
    %1024 = vmatprep.subr.mxu0 0.0
    %1025 = vmatpush1.msra.mxu0 0.0
    %1026 = vmatprep.subr.mxu0 0.0
    %1027 = vmatpush1.msra.mxu0 0.0
    %1028 = vmatprep.subr.mxu0 0.0
    %1029 = vmatpush1.msra.mxu0 0.0
    %1030 = vmatprep.subr.mxu0 0.0
    %1031 = vmatpush1.msra.mxu0 0.0
    %1032 = vmatprep.subr.mxu0 0.0
    %1033 = vmatpush1.msra.mxu0 0.0
    %1034 = vmatprep.subr.mxu0 0.0
    %1035 = vmatpush1.msra.mxu0 0.0
    %1036 = vmatprep.subr.mxu0 0.0
    %1037 = vmatpush1.msra.mxu0 0.0
    %1038 = vmatprep.subr.mxu0 0.0
    %1039 = vmatpush1.msra.mxu0 0.0
    %1040 = vmatprep.subr.mxu0 0.0
    %1041 = vmatpush1.msra.mxu0 0.0
    %1042 = vmatprep.subr.mxu0 0.0
    %1043 = vmatpush1.msra.mxu0 0.0
    %1044 = vmatprep.subr.mxu0 0.0
    %1045 = vmatpush1.msra.mxu0 0.0
    %1046 = vmatprep.subr.mxu0 0.0
    %1047 = vmatpush1.msra.mxu0 0.0
    %1048 = vmatprep.subr.mxu0 0.0
    %1049 = vmatpush1.msra.mxu0 0.0
    %1050 = vmatprep.subr.mxu0 0.0
    %1051 = vmatpush1.msra.mxu0 0.0
    %1052 = vmatprep.subr.mxu0 0.0
    %1053 = vmatpush1.msra.mxu0 0.0
    %1054 = vmatprep.subr.mxu0 0.0
    %1055 = vmatpush1.msra.mxu0 0.0
    %1056 = vmatprep.subr.mxu0 0.0
    %1057 = vmatpush1.msra.mxu0 0.0
    %1058 = vmatprep.subr.mxu0 0.0
    %1059 = vmatpush1.msra.mxu0 0.0
    %1060 = vmatprep.subr.mxu0 0.0
    %1061 = vmatpush1.msra.mxu0 0.0
    %1062 = vmatprep.subr.mxu0 0.0
    %1063 = vmatpush1.msra.mxu0 0.0
    %1064 = vmatprep.mubr.f32.mxu0 0.0
    %1065 = vmatmul.mubr.f32.gmra.mrb[0].mxu0 %v998
    %v1066 = vpop.f32.mrb[0].mxu0
    %v1067 = vadd.f32 0.0, %v1066
    %v1068 = vpop.f32.mrb[0].mxu0
    %v1069 = vadd.f32 0.0, %v1068
    %1070 = vdwg.mxu0
    %v1071 = vadd.f32 %v544, %v1067
    %v1072 = vadd.f32 %v545, %v1069
    %v1073 = vxor.u32 %v1071, 2147483648
    %v1074 = vxor.u32 %v1072, 2147483648
    %v1075 = vmul.f32 %v1073, 1.442695
    %v1076 = vpow.pop %v1075
    %v1077 = vmul.f32 %v1074, 1.442695
    %v1078 = vpow.pop %v1077
    %v1079 = vadd.f32 %v1076, 1.0
    %v1080 = vadd.f32 %v1078, 1.0
    %v1081 = vrcp.pop %v1079
    %v1082 = vmul.f32 1.0, %v1081
    %v1083 = vrcp.pop %v1080
    %v1084 = vmul.f32 1.0, %v1083
    %v1085 = vtanh.pop %v1072
    %v1086 = vmul.f32 %v1082, %v989
    %1088 = vrot.lane.b32.xlu0 %v1085, 64
    %v1089 = vpop.permute.xlu0 %1088
    %v1091 = vmul.f32 %v1082, %v1089
    %1093 = vrot.lane.b32.xlu0 %v1091, 64
    %v1094 = vpop.permute.xlu0 %1093
    %v1096 = vadd.f32 %v1086, %v1094
    %v1097 = vtanh.pop %v1096
    %1099 = vrot.lane.b32.xlu0 %v1097, 64
    %v1100 = vpop.permute.xlu0 %1099
    %v1102 = vmul.f32 %v1084, %v1100
    %1103 = vst.msk [vmem:[#allocation2 + $0x20] sm:$0xff] %vm568, %v1102
    %v1105 = vsel %vm568, %v1102, 0
    %1107 = vmatprep.subr.mxu0 %v553
    %1108 = vmatpush1.msra.mxu0 %v552
    %1109 = vmatprep.subr.mxu0 %v555
    %1110 = vmatpush1.msra.mxu0 %v554
    %1111 = vmatprep.subr.mxu0 %v557
    %1112 = vmatpush1.msra.mxu0 %v556
    %1113 = vmatprep.subr.mxu0 %v559
    %1114 = vmatpush1.msra.mxu0 %v558
    %1115 = vmatprep.subr.mxu0 %v561
    %1116 = vmatpush1.msra.mxu0 %v560
    %1117 = vmatprep.subr.mxu0 %v563
    %1118 = vmatpush1.msra.mxu0 %v562
    %1119 = vmatprep.subr.mxu0 %v565
    %1120 = vmatpush1.msra.mxu0 %v564
    %1121 = vmatprep.subr.mxu0 %v567
    %1122 = vmatpush1.msra.mxu0 %v566
    %1123 = vmatprep.subr.mxu0 0.0
    %1124 = vmatpush1.msra.mxu0 0.0
    %1125 = vmatprep.subr.mxu0 0.0
    %1126 = vmatpush1.msra.mxu0 0.0
    %1127 = vmatprep.subr.mxu0 0.0
    %1128 = vmatpush1.msra.mxu0 0.0
    %1129 = vmatprep.subr.mxu0 0.0
    %1130 = vmatpush1.msra.mxu0 0.0
    %1131 = vmatprep.subr.mxu0 0.0
    %1132 = vmatpush1.msra.mxu0 0.0
    %1133 = vmatprep.subr.mxu0 0.0
    %1134 = vmatpush1.msra.mxu0 0.0
    %1135 = vmatprep.subr.mxu0 0.0
    %1136 = vmatpush1.msra.mxu0 0.0
    %1137 = vmatprep.subr.mxu0 0.0
    %1138 = vmatpush1.msra.mxu0 0.0
    %1139 = vmatprep.subr.mxu0 0.0
    %1140 = vmatpush1.msra.mxu0 0.0
    %1141 = vmatprep.subr.mxu0 0.0
    %1142 = vmatpush1.msra.mxu0 0.0
    %1143 = vmatprep.subr.mxu0 0.0
    %1144 = vmatpush1.msra.mxu0 0.0
    %1145 = vmatprep.subr.mxu0 0.0
    %1146 = vmatpush1.msra.mxu0 0.0
    %1147 = vmatprep.subr.mxu0 0.0
    %1148 = vmatpush1.msra.mxu0 0.0
    %1149 = vmatprep.subr.mxu0 0.0
    %1150 = vmatpush1.msra.mxu0 0.0
    %1151 = vmatprep.subr.mxu0 0.0
    %1152 = vmatpush1.msra.mxu0 0.0
    %1153 = vmatprep.subr.mxu0 0.0
    %1154 = vmatpush1.msra.mxu0 0.0
    %1155 = vmatprep.subr.mxu0 0.0
    %1156 = vmatpush1.msra.mxu0 0.0
    %1157 = vmatprep.subr.mxu0 0.0
    %1158 = vmatpush1.msra.mxu0 0.0
    %1159 = vmatprep.subr.mxu0 0.0
    %1160 = vmatpush1.msra.mxu0 0.0
    %1161 = vmatprep.subr.mxu0 0.0
    %1162 = vmatpush1.msra.mxu0 0.0
    %1163 = vmatprep.subr.mxu0 0.0
    %1164 = vmatpush1.msra.mxu0 0.0
    %1165 = vmatprep.subr.mxu0 0.0
    %1166 = vmatpush1.msra.mxu0 0.0
    %1167 = vmatprep.subr.mxu0 0.0
    %1168 = vmatpush1.msra.mxu0 0.0
    %1169 = vmatprep.subr.mxu0 0.0
    %1170 = vmatpush1.msra.mxu0 0.0
    %1171 = vmatprep.mubr.f32.mxu0 0.0
    %1172 = vmatmul.mubr.f32.gmra.mrb[0].mxu0 %v1105
    %v1173 = vpop.f32.mrb[0].mxu0
    %v1174 = vadd.f32 0.0, %v1173
    %v1175 = vpop.f32.mrb[0].mxu0
    %v1176 = vadd.f32 0.0, %v1175
    %1177 = vdwg.mxu0
    %v1178 = vadd.f32 %v546, %v1174
    %v1179 = vadd.f32 %v547, %v1176
    %v1180 = vxor.u32 %v1178, 2147483648
    %v1181 = vxor.u32 %v1179, 2147483648
    %v1182 = vmul.f32 %v1180, 1.442695
    %v1183 = vpow.pop %v1182
    %v1184 = vmul.f32 %v1181, 1.442695
    %v1185 = vpow.pop %v1184
    %v1186 = vadd.f32 %v1183, 1.0
    %v1187 = vadd.f32 %v1185, 1.0
    %v1188 = vrcp.pop %v1186
    %v1189 = vmul.f32 1.0, %v1188
    %v1190 = vrcp.pop %v1187
    %v1191 = vmul.f32 1.0, %v1190
    %v1192 = vtanh.pop %v1179
    %v1193 = vmul.f32 %v1189, %v1096
    %1195 = vrot.lane.b32.xlu0 %v1192, 64
    %v1196 = vpop.permute.xlu0 %1195
    %v1198 = vmul.f32 %v1189, %v1196
    %1200 = vrot.lane.b32.xlu0 %v1198, 64
    %v1201 = vpop.permute.xlu0 %1200
    %v1203 = vadd.f32 %v1193, %v1201
    %v1204 = vtanh.pop %v1203
    %1206 = vrot.lane.b32.xlu0 %v1204, 64
    %v1207 = vpop.permute.xlu0 %1206
    %v1209 = vmul.f32 %v1191, %v1207
    %1210 = vst.msk [vmem:[#allocation2 + $0x28] sm:$0xff] %vm568, %v1209
    %v1212 = vsel %vm568, %v1209, 0
    %1214 = vmatprep.subr.mxu0 %v553
    %1215 = vmatpush1.msra.mxu0 %v552
    %1216 = vmatprep.subr.mxu0 %v555
    %1217 = vmatpush1.msra.mxu0 %v554
    %1218 = vmatprep.subr.mxu0 %v557
    %1219 = vmatpush1.msra.mxu0 %v556
    %1220 = vmatprep.subr.mxu0 %v559
    %1221 = vmatpush1.msra.mxu0 %v558
    %1222 = vmatprep.subr.mxu0 %v561
    %1223 = vmatpush1.msra.mxu0 %v560
    %1224 = vmatprep.subr.mxu0 %v563
    %1225 = vmatpush1.msra.mxu0 %v562
    %1226 = vmatprep.subr.mxu0 %v565
    %1227 = vmatpush1.msra.mxu0 %v564
    %1228 = vmatprep.subr.mxu0 %v567
    %1229 = vmatpush1.msra.mxu0 %v566
    %1230 = vmatprep.subr.mxu0 0.0
    %1231 = vmatpush1.msra.mxu0 0.0
    %1232 = vmatprep.subr.mxu0 0.0
    %1233 = vmatpush1.msra.mxu0 0.0
    %1234 = vmatprep.subr.mxu0 0.0
    %1235 = vmatpush1.msra.mxu0 0.0
    %1236 = vmatprep.subr.mxu0 0.0
    %1237 = vmatpush1.msra.mxu0 0.0
    %1238 = vmatprep.subr.mxu0 0.0
    %1239 = vmatpush1.msra.mxu0 0.0
    %1240 = vmatprep.subr.mxu0 0.0
    %1241 = vmatpush1.msra.mxu0 0.0
    %1242 = vmatprep.subr.mxu0 0.0
    %1243 = vmatpush1.msra.mxu0 0.0
    %1244 = vmatprep.subr.mxu0 0.0
    %1245 = vmatpush1.msra.mxu0 0.0
    %1246 = vmatprep.subr.mxu0 0.0
    %1247 = vmatpush1.msra.mxu0 0.0
    %1248 = vmatprep.subr.mxu0 0.0
    %1249 = vmatpush1.msra.mxu0 0.0
    %1250 = vmatprep.subr.mxu0 0.0
    %1251 = vmatpush1.msra.mxu0 0.0
    %1252 = vmatprep.subr.mxu0 0.0
    %1253 = vmatpush1.msra.mxu0 0.0
    %1254 = vmatprep.subr.mxu0 0.0
    %1255 = vmatpush1.msra.mxu0 0.0
    %1256 = vmatprep.subr.mxu0 0.0
    %1257 = vmatpush1.msra.mxu0 0.0
    %1258 = vmatprep.subr.mxu0 0.0
    %1259 = vmatpush1.msra.mxu0 0.0
    %1260 = vmatprep.subr.mxu0 0.0
    %1261 = vmatpush1.msra.mxu0 0.0
    %1262 = vmatprep.subr.mxu0 0.0
    %1263 = vmatpush1.msra.mxu0 0.0
    %1264 = vmatprep.subr.mxu0 0.0
    %1265 = vmatpush1.msra.mxu0 0.0
    %1266 = vmatprep.subr.mxu0 0.0
    %1267 = vmatpush1.msra.mxu0 0.0
    %1268 = vmatprep.subr.mxu0 0.0
    %1269 = vmatpush1.msra.mxu0 0.0
    %1270 = vmatprep.subr.mxu0 0.0
    %1271 = vmatpush1.msra.mxu0 0.0
    %1272 = vmatprep.subr.mxu0 0.0
    %1273 = vmatpush1.msra.mxu0 0.0
    %1274 = vmatprep.subr.mxu0 0.0
    %1275 = vmatpush1.msra.mxu0 0.0
    %1276 = vmatprep.subr.mxu0 0.0
    %1277 = vmatpush1.msra.mxu0 0.0
    %1278 = vmatprep.mubr.f32.mxu0 0.0
    %1279 = vmatmul.mubr.f32.gmra.mrb[0].mxu0 %v1212
    %v1280 = vpop.f32.mrb[0].mxu0
    %v1281 = vadd.f32 0.0, %v1280
    %v1282 = vpop.f32.mrb[0].mxu0
    %v1283 = vadd.f32 0.0, %v1282
    %1284 = vdwg.mxu0
    %v1285 = vadd.f32 %v548, %v1281
    %v1286 = vadd.f32 %v549, %v1283
    %v1287 = vxor.u32 %v1285, 2147483648
    %v1288 = vxor.u32 %v1286, 2147483648
    %v1289 = vmul.f32 %v1287, 1.442695
    %v1290 = vpow.pop %v1289
    %v1291 = vmul.f32 %v1288, 1.442695
    %v1292 = vpow.pop %v1291
    %v1293 = vadd.f32 %v1290, 1.0
    %v1294 = vadd.f32 %v1292, 1.0
    %v1295 = vrcp.pop %v1293
    %v1296 = vmul.f32 1.0, %v1295
    %v1297 = vrcp.pop %v1294
    %v1298 = vmul.f32 1.0, %v1297
    %v1299 = vtanh.pop %v1286
    %v1300 = vmul.f32 %v1296, %v1203
    %1302 = vrot.lane.b32.xlu0 %v1299, 64
    %v1303 = vpop.permute.xlu0 %1302
    %v1305 = vmul.f32 %v1296, %v1303
    %1307 = vrot.lane.b32.xlu0 %v1305, 64
    %v1308 = vpop.permute.xlu0 %1307
    %v1310 = vadd.f32 %v1300, %v1308
    %v1311 = vtanh.pop %v1310
    %1313 = vrot.lane.b32.xlu0 %v1311, 64
    %v1314 = vpop.permute.xlu0 %1313
    %v1316 = vmul.f32 %v1298, %v1314
    %1317 = vst.msk [vmem:[#allocation2 + $0x30] sm:$0xff] %vm568, %v1316
    %v1319 = vsel %vm568, %v1316, 0
    %1321 = vmatprep.subr.mxu0 %v553
    %1322 = vmatpush1.msra.mxu0 %v552
    %1323 = vmatprep.subr.mxu0 %v555
    %1324 = vmatpush1.msra.mxu0 %v554
    %1325 = vmatprep.subr.mxu0 %v557
    %1326 = vmatpush1.msra.mxu0 %v556
    %1327 = vmatprep.subr.mxu0 %v559
    %1328 = vmatpush1.msra.mxu0 %v558
    %1329 = vmatprep.subr.mxu0 %v561
    %1330 = vmatpush1.msra.mxu0 %v560
    %1331 = vmatprep.subr.mxu0 %v563
    %1332 = vmatpush1.msra.mxu0 %v562
    %1333 = vmatprep.subr.mxu0 %v565
    %1334 = vmatpush1.msra.mxu0 %v564
    %1335 = vmatprep.subr.mxu0 %v567
    %1336 = vmatpush1.msra.mxu0 %v566
    %1337 = vmatprep.subr.mxu0 0.0
    %1338 = vmatpush1.msra.mxu0 0.0
    %1339 = vmatprep.subr.mxu0 0.0
    %1340 = vmatpush1.msra.mxu0 0.0
    %1341 = vmatprep.subr.mxu0 0.0
    %1342 = vmatpush1.msra.mxu0 0.0
    %1343 = vmatprep.subr.mxu0 0.0
    %1344 = vmatpush1.msra.mxu0 0.0
    %1345 = vmatprep.subr.mxu0 0.0
    %1346 = vmatpush1.msra.mxu0 0.0
    %1347 = vmatprep.subr.mxu0 0.0
    %1348 = vmatpush1.msra.mxu0 0.0
    %1349 = vmatprep.subr.mxu0 0.0
    %1350 = vmatpush1.msra.mxu0 0.0
    %1351 = vmatprep.subr.mxu0 0.0
    %1352 = vmatpush1.msra.mxu0 0.0
    %1353 = vmatprep.subr.mxu0 0.0
    %1354 = vmatpush1.msra.mxu0 0.0
    %1355 = vmatprep.subr.mxu0 0.0
    %1356 = vmatpush1.msra.mxu0 0.0
    %1357 = vmatprep.subr.mxu0 0.0
    %1358 = vmatpush1.msra.mxu0 0.0
    %1359 = vmatprep.subr.mxu0 0.0
    %1360 = vmatpush1.msra.mxu0 0.0
    %1361 = vmatprep.subr.mxu0 0.0
    %1362 = vmatpush1.msra.mxu0 0.0
    %1363 = vmatprep.subr.mxu0 0.0
    %1364 = vmatpush1.msra.mxu0 0.0
    %1365 = vmatprep.subr.mxu0 0.0
    %1366 = vmatpush1.msra.mxu0 0.0
    %1367 = vmatprep.subr.mxu0 0.0
    %1368 = vmatpush1.msra.mxu0 0.0
    %1369 = vmatprep.subr.mxu0 0.0
    %1370 = vmatpush1.msra.mxu0 0.0
    %1371 = vmatprep.subr.mxu0 0.0
    %1372 = vmatpush1.msra.mxu0 0.0
    %1373 = vmatprep.subr.mxu0 0.0
    %1374 = vmatpush1.msra.mxu0 0.0
    %1375 = vmatprep.subr.mxu0 0.0
    %1376 = vmatpush1.msra.mxu0 0.0
    %1377 = vmatprep.subr.mxu0 0.0
    %1378 = vmatpush1.msra.mxu0 0.0
    %1379 = vmatprep.subr.mxu0 0.0
    %1380 = vmatpush1.msra.mxu0 0.0
    %1381 = vmatprep.subr.mxu0 0.0
    %1382 = vmatpush1.msra.mxu0 0.0
    %1383 = vmatprep.subr.mxu0 0.0
    %1384 = vmatpush1.msra.mxu0 0.0
    %1385 = vmatprep.mubr.f32.mxu0 0.0
    %1386 = vmatmul.mubr.f32.gmra.mrb[0].mxu0 %v1319
    %v1387 = vpop.f32.mrb[0].mxu0
    %v1388 = vadd.f32 0.0, %v1387
    %v1389 = vpop.f32.mrb[0].mxu0
    %v1390 = vadd.f32 0.0, %v1389
    %1391 = vdwg.mxu0
    %v1392 = vadd.f32 %v550, %v1388
    %v1393 = vadd.f32 %v551, %v1390
    %v1394 = vxor.u32 %v1392, 2147483648
    %v1395 = vxor.u32 %v1393, 2147483648
    %v1396 = vmul.f32 %v1394, 1.442695
    %v1397 = vpow.pop %v1396
    %v1398 = vmul.f32 %v1395, 1.442695
    %v1399 = vpow.pop %v1398
    %v1400 = vadd.f32 %v1397, 1.0
    %v1401 = vadd.f32 %v1399, 1.0
    %v1402 = vrcp.pop %v1400
    %v1403 = vmul.f32 1.0, %v1402
    %v1404 = vrcp.pop %v1401
    %v1405 = vmul.f32 1.0, %v1404
    %v1406 = vtanh.pop %v1393
    %v1407 = vmul.f32 %v1403, %v1310
    %1409 = vrot.lane.b32.xlu0 %v1406, 64
    %v1410 = vpop.permute.xlu0 %1409
    %v1412 = vmul.f32 %v1403, %v1410
    %1414 = vrot.lane.b32.xlu0 %v1412, 64
    %v1415 = vpop.permute.xlu0 %1414
    %v1417 = vadd.f32 %v1407, %v1415
    %v1418 = vtanh.pop %v1417
    %1420 = vrot.lane.b32.xlu0 %v1418, 64
    %v1421 = vpop.permute.xlu0 %1420
    %v1423 = vmul.f32 %v1405, %v1421
    %1424 = vst.msk [vmem:[#allocation2 + $0x38] sm:$0xff] %vm568, %v1423
    %v1425 = vld [vmem:[#allocation2] sm:$0xff]
    %v1426 = vld [vmem:[#allocation2 + $0x8] sm:$0xff]
    %v1427 = vld [vmem:[#allocation2 + $0x10] sm:$0xff]
    %v1428 = vld [vmem:[#allocation2 + $0x18] sm:$0xff]
    %v1429 = vld [vmem:[#allocation2 + $0x20] sm:$0xff]
    %v1430 = vld [vmem:[#allocation2 + $0x28] sm:$0xff]
    %v1431 = vld [vmem:[#allocation2 + $0x30] sm:$0xff]
    %v1432 = vld [vmem:[#allocation2 + $0x38] sm:$0xff]
    %v1433 = vsel %vm377, 1, 0
    %vm1434 = vcmp.eq.s32.totalorder %v1433, 1
    %v1435 = vsel %vm1434, %v1425, %v1432
    %v1436 = vsel %vm1434, %v1426, %v1431
    %v1437 = vsel %vm1434, %v1427, %v1430
    %v1438 = vsel %vm1434, %v1428, %v1429
    %v1439 = vsel %vm1434, %v1429, %v1428
    %v1440 = vsel %vm1434, %v1430, %v1427
    %v1441 = vsel %vm1434, %v1431, %v1426
    %v1442 = vsel %vm1434, %v1432, %v1425
    %v1443 = vld [vmem:[%s6] sm:$0xff]
    %v1444 = vld [vmem:[%s6 + $0x8] sm:$0xff]
    %v1445 = vld [vmem:[%s6 + $0x10] sm:$0xff]
    %v1446 = vld [vmem:[%s6 + $0x18] sm:$0xff]
    %v1447 = vld [vmem:[%s6 + $0x20] sm:$0xff]
    %v1448 = vld [vmem:[%s6 + $0x28] sm:$0xff]
    %v1449 = vld [vmem:[%s6 + $0x30] sm:$0xff]
    %v1450 = vld [vmem:[%s6 + $0x38] sm:$0xff]
    %v1451 = vld [vmem:[%s6 + $0x40] sm:$0xff]
    %v1452 = vld [vmem:[%s6 + $0x48] sm:$0xff]
    %v1453 = vld [vmem:[%s6 + $0x50] sm:$0xff]
    %v1454 = vld [vmem:[%s6 + $0x58] sm:$0xff]
    %v1455 = vld [vmem:[%s6 + $0x60] sm:$0xff]
    %v1456 = vld [vmem:[%s6 + $0x68] sm:$0xff]
    %v1457 = vld [vmem:[%s6 + $0x70] sm:$0xff]
    %v1458 = vld [vmem:[%s6 + $0x78] sm:$0xff]
    %v1459 = vld [vmem:[#allocation6] sm:$0x3]
    %v1461 = vlaneseq
    %v1462 = vshrl.u32 %v1461, 7
    %v1463 = vsub.s32 0, %v1462
    %v1464 = vrot.slane %v1459, %v1463
    %v1465 = vlaneseq
    %v1466 = vshrl.u32 %v1465, 7
    %v1467 = vsub.s32 1, %v1466
    %v1468 = vrot.slane %v1459, %v1467
    %v1472 = vsel %vm568, %v1435, 0
    %v1475 = vsel %vm568, %v1436, 0
    %v1478 = vsel %vm568, %v1437, 0
    %v1481 = vsel %vm568, %v1438, 0
    %v1484 = vsel %vm568, %v1439, 0
    %v1487 = vsel %vm568, %v1440, 0
    %v1490 = vsel %vm568, %v1441, 0
    %v1493 = vsel %vm568, %v1442, 0
    %1495 = vmatprep.subr.mxu0 %v1444
    %1496 = vmatpush1.msra.mxu0 %v1443
    %1497 = vmatprep.subr.mxu0 %v1446
    %1498 = vmatpush1.msra.mxu0 %v1445
    %1499 = vmatprep.subr.mxu0 %v1448
    %1500 = vmatpush1.msra.mxu0 %v1447
    %1501 = vmatprep.subr.mxu0 %v1450
    %1502 = vmatpush1.msra.mxu0 %v1449
    %1503 = vmatprep.subr.mxu0 %v1452
    %1504 = vmatpush1.msra.mxu0 %v1451
    %1505 = vmatprep.subr.mxu0 %v1454
    %1506 = vmatpush1.msra.mxu0 %v1453
    %1507 = vmatprep.subr.mxu0 %v1456
    %1508 = vmatpush1.msra.mxu0 %v1455
    %1509 = vmatprep.subr.mxu0 %v1458
    %1510 = vmatpush1.msra.mxu0 %v1457
    %1511 = vmatprep.subr.mxu0 0.0
    %1512 = vmatpush1.msra.mxu0 0.0
    %1513 = vmatprep.subr.mxu0 0.0
    %1514 = vmatpush1.msra.mxu0 0.0
    %1515 = vmatprep.subr.mxu0 0.0
    %1516 = vmatpush1.msra.mxu0 0.0
    %1517 = vmatprep.subr.mxu0 0.0
    %1518 = vmatpush1.msra.mxu0 0.0
    %1519 = vmatprep.subr.mxu0 0.0
    %1520 = vmatpush1.msra.mxu0 0.0
    %1521 = vmatprep.subr.mxu0 0.0
    %1522 = vmatpush1.msra.mxu0 0.0
    %1523 = vmatprep.subr.mxu0 0.0
    %1524 = vmatpush1.msra.mxu0 0.0
    %1525 = vmatprep.subr.mxu0 0.0
    %1526 = vmatpush1.msra.mxu0 0.0
    %1527 = vmatprep.subr.mxu0 0.0
    %1528 = vmatpush1.msra.mxu0 0.0
    %1529 = vmatprep.subr.mxu0 0.0
    %1530 = vmatpush1.msra.mxu0 0.0
    %1531 = vmatprep.subr.mxu0 0.0
    %1532 = vmatpush1.msra.mxu0 0.0
    %1533 = vmatprep.subr.mxu0 0.0
    %1534 = vmatpush1.msra.mxu0 0.0
    %1535 = vmatprep.subr.mxu0 0.0
    %1536 = vmatpush1.msra.mxu0 0.0
    %1537 = vmatprep.subr.mxu0 0.0
    %1538 = vmatpush1.msra.mxu0 0.0
    %1539 = vmatprep.subr.mxu0 0.0
    %1540 = vmatpush1.msra.mxu0 0.0
    %1541 = vmatprep.subr.mxu0 0.0
    %1542 = vmatpush1.msra.mxu0 0.0
    %1543 = vmatprep.subr.mxu0 0.0
    %1544 = vmatpush1.msra.mxu0 0.0
    %1545 = vmatprep.subr.mxu0 0.0
    %1546 = vmatpush1.msra.mxu0 0.0
    %1547 = vmatprep.subr.mxu0 0.0
    %1548 = vmatpush1.msra.mxu0 0.0
    %1549 = vmatprep.subr.mxu0 0.0
    %1550 = vmatpush1.msra.mxu0 0.0
    %1551 = vmatprep.subr.mxu0 0.0
    %1552 = vmatpush1.msra.mxu0 0.0
    %1553 = vmatprep.subr.mxu0 0.0
    %1554 = vmatpush1.msra.mxu0 0.0
    %1555 = vmatprep.subr.mxu0 0.0
    %1556 = vmatpush1.msra.mxu0 0.0
    %1557 = vmatprep.subr.mxu0 0.0
    %1558 = vmatpush1.msra.mxu0 0.0
    %1559 = vmatprep.mubr.f32.mxu0 0.0
    %1560 = vmatmul.mubr.f32.gmra.mrb[0].mxu0 %v1472
    %v1561 = vpop.f32.mrb[0].mxu0
    %v1562 = vadd.f32 %v1464, %v1561
    %v1563 = vpop.f32.mrb[0].mxu0
    %v1564 = vadd.f32 %v1468, %v1563
    %1565 = vmatprep.mubr.f32.mxu0 0.0
    %1566 = vmatmul.mubr.f32.gmra.mrb[0].mxu0 %v1475
    %v1567 = vpop.f32.mrb[0].mxu0
    %v1568 = vadd.f32 %v1464, %v1567
    %v1569 = vpop.f32.mrb[0].mxu0
    %v1570 = vadd.f32 %v1468, %v1569
    %1571 = vmatprep.mubr.f32.mxu0 0.0
    %1572 = vmatmul.mubr.f32.gmra.mrb[0].mxu0 %v1478
    %v1573 = vpop.f32.mrb[0].mxu0
    %v1574 = vadd.f32 %v1464, %v1573
    %v1575 = vpop.f32.mrb[0].mxu0
    %v1576 = vadd.f32 %v1468, %v1575
    %1577 = vmatprep.mubr.f32.mxu0 0.0
    %1578 = vmatmul.mubr.f32.gmra.mrb[0].mxu0 %v1481
    %v1579 = vpop.f32.mrb[0].mxu0
    %v1580 = vadd.f32 %v1464, %v1579
    %v1581 = vpop.f32.mrb[0].mxu0
    %v1582 = vadd.f32 %v1468, %v1581
    %1583 = vmatprep.mubr.f32.mxu0 0.0
    %1584 = vmatmul.mubr.f32.gmra.mrb[0].mxu0 %v1484
    %v1585 = vpop.f32.mrb[0].mxu0
    %v1586 = vadd.f32 %v1464, %v1585
    %v1587 = vpop.f32.mrb[0].mxu0
    %v1588 = vadd.f32 %v1468, %v1587
    %1589 = vmatprep.mubr.f32.mxu0 0.0
    %1590 = vmatmul.mubr.f32.gmra.mrb[0].mxu0 %v1487
    %v1591 = vpop.f32.mrb[0].mxu0
    %v1592 = vadd.f32 %v1464, %v1591
    %v1593 = vpop.f32.mrb[0].mxu0
    %v1594 = vadd.f32 %v1468, %v1593
    %1595 = vmatprep.mubr.f32.mxu0 0.0
    %1596 = vmatmul.mubr.f32.gmra.mrb[0].mxu0 %v1490
    %v1597 = vpop.f32.mrb[0].mxu0
    %v1598 = vadd.f32 %v1464, %v1597
    %v1599 = vpop.f32.mrb[0].mxu0
    %v1600 = vadd.f32 %v1468, %v1599
    %1601 = vmatprep.mubr.f32.mxu0 0.0
    %1602 = vmatmul.mubr.f32.gmra.mrb[0].mxu0 %v1493
    %v1603 = vpop.f32.mrb[0].mxu0
    %v1604 = vadd.f32 %v1464, %v1603
    %v1605 = vpop.f32.mrb[0].mxu0
    %v1606 = vadd.f32 %v1468, %v1605
    %1607 = vdwg.mxu0
    %v1608 = vsel %vm534, %v1562, %v1604
    %v1609 = vsel %vm535, %v1564, %v1606
    %v1610 = vsel %vm534, %v1568, %v1598
    %v1611 = vsel %vm535, %v1570, %v1600
    %v1612 = vsel %vm534, %v1574, %v1592
    %v1613 = vsel %vm535, %v1576, %v1594
    %v1614 = vsel %vm534, %v1580, %v1586
    %v1615 = vsel %vm535, %v1582, %v1588
    %v1616 = vsel %vm534, %v1586, %v1580
    %v1617 = vsel %vm535, %v1588, %v1582
    %v1618 = vsel %vm534, %v1592, %v1574
    %v1619 = vsel %vm535, %v1594, %v1576
    %v1620 = vsel %vm534, %v1598, %v1568
    %v1621 = vsel %vm535, %v1600, %v1570
    %v1622 = vsel %vm534, %v1604, %v1562
    %v1623 = vsel %vm535, %v1606, %v1564
    %v1624 = vld [vmem:[#allocation4] sm:$0xff]
    %v1625 = vld [vmem:[#allocation4 + $0x8] sm:$0xff]
    %v1626 = vld [vmem:[#allocation4 + $0x10] sm:$0xff]
    %v1627 = vld [vmem:[#allocation4 + $0x18] sm:$0xff]
    %v1628 = vld [vmem:[#allocation4 + $0x20] sm:$0xff]
    %v1629 = vld [vmem:[#allocation4 + $0x28] sm:$0xff]
    %v1630 = vld [vmem:[#allocation4 + $0x30] sm:$0xff]
    %v1631 = vld [vmem:[#allocation4 + $0x38] sm:$0xff]
    %v1632 = vld [vmem:[#allocation4 + $0x40] sm:$0xff]
    %v1633 = vld [vmem:[#allocation4 + $0x48] sm:$0xff]
    %v1634 = vld [vmem:[#allocation4 + $0x50] sm:$0xff]
    %v1635 = vld [vmem:[#allocation4 + $0x58] sm:$0xff]
    %v1636 = vld [vmem:[#allocation4 + $0x60] sm:$0xff]
    %v1637 = vld [vmem:[#allocation4 + $0x68] sm:$0xff]
    %v1638 = vld [vmem:[#allocation4 + $0x70] sm:$0xff]
    %v1639 = vld [vmem:[#allocation4 + $0x78] sm:$0xff]
    %1640 = vmatprep.subr.mxu0 %v1625
    %1641 = vmatpush1.msra.mxu0 %v1624
    %1642 = vmatprep.subr.mxu0 %v1627
    %1643 = vmatpush1.msra.mxu0 %v1626
    %1644 = vmatprep.subr.mxu0 %v1629
    %1645 = vmatpush1.msra.mxu0 %v1628
    %1646 = vmatprep.subr.mxu0 %v1631
    %1647 = vmatpush1.msra.mxu0 %v1630
    %1648 = vmatprep.subr.mxu0 %v1633
    %1649 = vmatpush1.msra.mxu0 %v1632
    %1650 = vmatprep.subr.mxu0 %v1635
    %1651 = vmatpush1.msra.mxu0 %v1634
    %1652 = vmatprep.subr.mxu0 %v1637
    %1653 = vmatpush1.msra.mxu0 %v1636
    %1654 = vmatprep.subr.mxu0 %v1639
    %1655 = vmatpush1.msra.mxu0 %v1638
    %1656 = vmatprep.subr.mxu0 0.0
    %1657 = vmatpush1.msra.mxu0 0.0
    %1658 = vmatprep.subr.mxu0 0.0
    %1659 = vmatpush1.msra.mxu0 0.0
    %1660 = vmatprep.subr.mxu0 0.0
    %1661 = vmatpush1.msra.mxu0 0.0
    %1662 = vmatprep.subr.mxu0 0.0
    %1663 = vmatpush1.msra.mxu0 0.0
    %1664 = vmatprep.subr.mxu0 0.0
    %1665 = vmatpush1.msra.mxu0 0.0
    %1666 = vmatprep.subr.mxu0 0.0
    %1667 = vmatpush1.msra.mxu0 0.0
    %1668 = vmatprep.subr.mxu0 0.0
    %1669 = vmatpush1.msra.mxu0 0.0
    %1670 = vmatprep.subr.mxu0 0.0
    %1671 = vmatpush1.msra.mxu0 0.0
    %1672 = vmatprep.subr.mxu0 0.0
    %1673 = vmatpush1.msra.mxu0 0.0
    %1674 = vmatprep.subr.mxu0 0.0
    %1675 = vmatpush1.msra.mxu0 0.0
    %1676 = vmatprep.subr.mxu0 0.0
    %1677 = vmatpush1.msra.mxu0 0.0
    %1678 = vmatprep.subr.mxu0 0.0
    %1679 = vmatpush1.msra.mxu0 0.0
    %1680 = vmatprep.subr.mxu0 0.0
    %1681 = vmatpush1.msra.mxu0 0.0
    %1682 = vmatprep.subr.mxu0 0.0
    %1683 = vmatpush1.msra.mxu0 0.0
    %1684 = vmatprep.subr.mxu0 0.0
    %1685 = vmatpush1.msra.mxu0 0.0
    %1686 = vmatprep.subr.mxu0 0.0
    %1687 = vmatpush1.msra.mxu0 0.0
    %1688 = vmatprep.subr.mxu0 0.0
    %1689 = vmatpush1.msra.mxu0 0.0
    %1690 = vmatprep.subr.mxu0 0.0
    %1691 = vmatpush1.msra.mxu0 0.0
    %1692 = vmatprep.subr.mxu0 0.0
    %1693 = vmatpush1.msra.mxu0 0.0
    %1694 = vmatprep.subr.mxu0 0.0
    %1695 = vmatpush1.msra.mxu0 0.0
    %1696 = vmatprep.subr.mxu0 0.0
    %1697 = vmatpush1.msra.mxu0 0.0
    %1698 = vmatprep.subr.mxu0 0.0
    %1699 = vmatpush1.msra.mxu0 0.0
    %1700 = vmatprep.subr.mxu0 0.0
    %1701 = vmatpush1.msra.mxu0 0.0
    %1702 = vmatprep.subr.mxu0 0.0
    %1703 = vmatpush1.msra.mxu0 0.0
    %1704 = vmatprep.mubr.f32.mxu0 0.0
    %1705 = vmatmul.mubr.f32.gmra.mrb[0].mxu0 %v570
    %v1706 = vpop.f32.mrb[0].mxu0
    %v1707 = vadd.f32 0.0, %v1706
    %v1708 = vpop.f32.mrb[0].mxu0
    %v1709 = vadd.f32 0.0, %v1708
    %1710 = vdwg.mxu0
    %v1711 = vadd.f32 %v1608, %v1707
    %v1712 = vadd.f32 %v1609, %v1709
    %v1713 = vxor.u32 %v1711, 2147483648
    %v1714 = vxor.u32 %v1712, 2147483648
    %v1715 = vmul.f32 %v1713, 1.442695
    %v1716 = vpow.pop %v1715
    %v1717 = vmul.f32 %v1714, 1.442695
    %v1718 = vpow.pop %v1717
    %v1719 = vadd.f32 %v1716, 1.0
    %v1720 = vadd.f32 %v1718, 1.0
    %v1721 = vrcp.pop %v1719
    %v1722 = vmul.f32 1.0, %v1721
    %v1723 = vrcp.pop %v1720
    %v1724 = vmul.f32 1.0, %v1723
    %v1725 = vtanh.pop %v1712
    %v1726 = vmul.f32 %v1722, 0.0
    %1728 = vrot.lane.b32.xlu0 %v1725, 64
    %v1729 = vpop.permute.xlu0 %1728
    %v1731 = vmul.f32 %v1722, %v1729
    %1733 = vrot.lane.b32.xlu0 %v1731, 64
    %v1734 = vpop.permute.xlu0 %1733
    %v1736 = vadd.f32 %v1726, %v1734
    %v1737 = vtanh.pop %v1736
    %1739 = vrot.lane.b32.xlu0 %v1737, 64
    %v1740 = vpop.permute.xlu0 %1739
    %v1742 = vmul.f32 %v1724, %v1740
    %1743 = vst.msk [vmem:[#allocation3] sm:$0xff] %vm568, %v1742
    %v1745 = vsel %vm568, %v1742, 0
    %1747 = vmatprep.subr.mxu0 %v1625
    %1748 = vmatpush1.msra.mxu0 %v1624
    %1749 = vmatprep.subr.mxu0 %v1627
    %1750 = vmatpush1.msra.mxu0 %v1626
    %1751 = vmatprep.subr.mxu0 %v1629
    %1752 = vmatpush1.msra.mxu0 %v1628
    %1753 = vmatprep.subr.mxu0 %v1631
    %1754 = vmatpush1.msra.mxu0 %v1630
    %1755 = vmatprep.subr.mxu0 %v1633
    %1756 = vmatpush1.msra.mxu0 %v1632
    %1757 = vmatprep.subr.mxu0 %v1635
    %1758 = vmatpush1.msra.mxu0 %v1634
    %1759 = vmatprep.subr.mxu0 %v1637
    %1760 = vmatpush1.msra.mxu0 %v1636
    %1761 = vmatprep.subr.mxu0 %v1639
    %1762 = vmatpush1.msra.mxu0 %v1638
    %1763 = vmatprep.subr.mxu0 0.0
    %1764 = vmatpush1.msra.mxu0 0.0
    %1765 = vmatprep.subr.mxu0 0.0
    %1766 = vmatpush1.msra.mxu0 0.0
    %1767 = vmatprep.subr.mxu0 0.0
    %1768 = vmatpush1.msra.mxu0 0.0
    %1769 = vmatprep.subr.mxu0 0.0
    %1770 = vmatpush1.msra.mxu0 0.0
    %1771 = vmatprep.subr.mxu0 0.0
    %1772 = vmatpush1.msra.mxu0 0.0
    %1773 = vmatprep.subr.mxu0 0.0
    %1774 = vmatpush1.msra.mxu0 0.0
    %1775 = vmatprep.subr.mxu0 0.0
    %1776 = vmatpush1.msra.mxu0 0.0
    %1777 = vmatprep.subr.mxu0 0.0
    %1778 = vmatpush1.msra.mxu0 0.0
    %1779 = vmatprep.subr.mxu0 0.0
    %1780 = vmatpush1.msra.mxu0 0.0
    %1781 = vmatprep.subr.mxu0 0.0
    %1782 = vmatpush1.msra.mxu0 0.0
    %1783 = vmatprep.subr.mxu0 0.0
    %1784 = vmatpush1.msra.mxu0 0.0
    %1785 = vmatprep.subr.mxu0 0.0
    %1786 = vmatpush1.msra.mxu0 0.0
    %1787 = vmatprep.subr.mxu0 0.0
    %1788 = vmatpush1.msra.mxu0 0.0
    %1789 = vmatprep.subr.mxu0 0.0
    %1790 = vmatpush1.msra.mxu0 0.0
    %1791 = vmatprep.subr.mxu0 0.0
    %1792 = vmatpush1.msra.mxu0 0.0
    %1793 = vmatprep.subr.mxu0 0.0
    %1794 = vmatpush1.msra.mxu0 0.0
    %1795 = vmatprep.subr.mxu0 0.0
    %1796 = vmatpush1.msra.mxu0 0.0
    %1797 = vmatprep.subr.mxu0 0.0
    %1798 = vmatpush1.msra.mxu0 0.0
    %1799 = vmatprep.subr.mxu0 0.0
    %1800 = vmatpush1.msra.mxu0 0.0
    %1801 = vmatprep.subr.mxu0 0.0
    %1802 = vmatpush1.msra.mxu0 0.0
    %1803 = vmatprep.subr.mxu0 0.0
    %1804 = vmatpush1.msra.mxu0 0.0
    %1805 = vmatprep.subr.mxu0 0.0
    %1806 = vmatpush1.msra.mxu0 0.0
    %1807 = vmatprep.subr.mxu0 0.0
    %1808 = vmatpush1.msra.mxu0 0.0
    %1809 = vmatprep.subr.mxu0 0.0
    %1810 = vmatpush1.msra.mxu0 0.0
    %1811 = vmatprep.mubr.f32.mxu0 0.0
    %1812 = vmatmul.mubr.f32.gmra.mrb[0].mxu0 %v1745
    %v1813 = vpop.f32.mrb[0].mxu0
    %v1814 = vadd.f32 0.0, %v1813
    %v1815 = vpop.f32.mrb[0].mxu0
    %v1816 = vadd.f32 0.0, %v1815
    %1817 = vdwg.mxu0
    %v1818 = vadd.f32 %v1610, %v1814
    %v1819 = vadd.f32 %v1611, %v1816
    %v1820 = vxor.u32 %v1818, 2147483648
    %v1821 = vxor.u32 %v1819, 2147483648
    %v1822 = vmul.f32 %v1820, 1.442695
    %v1823 = vpow.pop %v1822
    %v1824 = vmul.f32 %v1821, 1.442695
    %v1825 = vpow.pop %v1824
    %v1826 = vadd.f32 %v1823, 1.0
    %v1827 = vadd.f32 %v1825, 1.0
    %v1828 = vrcp.pop %v1826
    %v1829 = vmul.f32 1.0, %v1828
    %v1830 = vrcp.pop %v1827
    %v1831 = vmul.f32 1.0, %v1830
    %v1832 = vtanh.pop %v1819
    %v1833 = vmul.f32 %v1829, %v1736
    %1835 = vrot.lane.b32.xlu0 %v1832, 64
    %v1836 = vpop.permute.xlu0 %1835
    %v1838 = vmul.f32 %v1829, %v1836
    %1840 = vrot.lane.b32.xlu0 %v1838, 64
    %v1841 = vpop.permute.xlu0 %1840
    %v1843 = vadd.f32 %v1833, %v1841
    %v1844 = vtanh.pop %v1843
    %1846 = vrot.lane.b32.xlu0 %v1844, 64
    %v1847 = vpop.permute.xlu0 %1846
    %v1849 = vmul.f32 %v1831, %v1847
    %1850 = vst.msk [vmem:[#allocation3 + $0x8] sm:$0xff] %vm568, %v1849
    %v1852 = vsel %vm568, %v1849, 0
    %1854 = vmatprep.subr.mxu0 %v1625
    %1855 = vmatpush1.msra.mxu0 %v1624
    %1856 = vmatprep.subr.mxu0 %v1627
    %1857 = vmatpush1.msra.mxu0 %v1626
    %1858 = vmatprep.subr.mxu0 %v1629
    %1859 = vmatpush1.msra.mxu0 %v1628
    %1860 = vmatprep.subr.mxu0 %v1631
    %1861 = vmatpush1.msra.mxu0 %v1630
    %1862 = vmatprep.subr.mxu0 %v1633
    %1863 = vmatpush1.msra.mxu0 %v1632
    %1864 = vmatprep.subr.mxu0 %v1635
    %1865 = vmatpush1.msra.mxu0 %v1634
    %1866 = vmatprep.subr.mxu0 %v1637
    %1867 = vmatpush1.msra.mxu0 %v1636
    %1868 = vmatprep.subr.mxu0 %v1639
    %1869 = vmatpush1.msra.mxu0 %v1638
    %1870 = vmatprep.subr.mxu0 0.0
    %1871 = vmatpush1.msra.mxu0 0.0
    %1872 = vmatprep.subr.mxu0 0.0
    %1873 = vmatpush1.msra.mxu0 0.0
    %1874 = vmatprep.subr.mxu0 0.0
    %1875 = vmatpush1.msra.mxu0 0.0
    %1876 = vmatprep.subr.mxu0 0.0
    %1877 = vmatpush1.msra.mxu0 0.0
    %1878 = vmatprep.subr.mxu0 0.0
    %1879 = vmatpush1.msra.mxu0 0.0
    %1880 = vmatprep.subr.mxu0 0.0
    %1881 = vmatpush1.msra.mxu0 0.0
    %1882 = vmatprep.subr.mxu0 0.0
    %1883 = vmatpush1.msra.mxu0 0.0
    %1884 = vmatprep.subr.mxu0 0.0
    %1885 = vmatpush1.msra.mxu0 0.0
    %1886 = vmatprep.subr.mxu0 0.0
    %1887 = vmatpush1.msra.mxu0 0.0
    %1888 = vmatprep.subr.mxu0 0.0
    %1889 = vmatpush1.msra.mxu0 0.0
    %1890 = vmatprep.subr.mxu0 0.0
    %1891 = vmatpush1.msra.mxu0 0.0
    %1892 = vmatprep.subr.mxu0 0.0
    %1893 = vmatpush1.msra.mxu0 0.0
    %1894 = vmatprep.subr.mxu0 0.0
    %1895 = vmatpush1.msra.mxu0 0.0
    %1896 = vmatprep.subr.mxu0 0.0
    %1897 = vmatpush1.msra.mxu0 0.0
    %1898 = vmatprep.subr.mxu0 0.0
    %1899 = vmatpush1.msra.mxu0 0.0
    %1900 = vmatprep.subr.mxu0 0.0
    %1901 = vmatpush1.msra.mxu0 0.0
    %1902 = vmatprep.subr.mxu0 0.0
    %1903 = vmatpush1.msra.mxu0 0.0
    %1904 = vmatprep.subr.mxu0 0.0
    %1905 = vmatpush1.msra.mxu0 0.0
    %1906 = vmatprep.subr.mxu0 0.0
    %1907 = vmatpush1.msra.mxu0 0.0
    %1908 = vmatprep.subr.mxu0 0.0
    %1909 = vmatpush1.msra.mxu0 0.0
    %1910 = vmatprep.subr.mxu0 0.0
    %1911 = vmatpush1.msra.mxu0 0.0
    %1912 = vmatprep.subr.mxu0 0.0
    %1913 = vmatpush1.msra.mxu0 0.0
    %1914 = vmatprep.subr.mxu0 0.0
    %1915 = vmatpush1.msra.mxu0 0.0
    %1916 = vmatprep.subr.mxu0 0.0
    %1917 = vmatpush1.msra.mxu0 0.0
    %1918 = vmatprep.mubr.f32.mxu0 0.0
    %1919 = vmatmul.mubr.f32.gmra.mrb[0].mxu0 %v1852
    %v1920 = vpop.f32.mrb[0].mxu0
    %v1921 = vadd.f32 0.0, %v1920
    %v1922 = vpop.f32.mrb[0].mxu0
    %v1923 = vadd.f32 0.0, %v1922
    %1924 = vdwg.mxu0
    %v1925 = vadd.f32 %v1612, %v1921
    %v1926 = vadd.f32 %v1613, %v1923
    %v1927 = vxor.u32 %v1925, 2147483648
    %v1928 = vxor.u32 %v1926, 2147483648
    %v1929 = vmul.f32 %v1927, 1.442695
    %v1930 = vpow.pop %v1929
    %v1931 = vmul.f32 %v1928, 1.442695
    %v1932 = vpow.pop %v1931
    %v1933 = vadd.f32 %v1930, 1.0
    %v1934 = vadd.f32 %v1932, 1.0
    %v1935 = vrcp.pop %v1933
    %v1936 = vmul.f32 1.0, %v1935
    %v1937 = vrcp.pop %v1934
    %v1938 = vmul.f32 1.0, %v1937
    %v1939 = vtanh.pop %v1926
    %v1940 = vmul.f32 %v1936, %v1843
    %1942 = vrot.lane.b32.xlu0 %v1939, 64
    %v1943 = vpop.permute.xlu0 %1942
    %v1945 = vmul.f32 %v1936, %v1943
    %1947 = vrot.lane.b32.xlu0 %v1945, 64
    %v1948 = vpop.permute.xlu0 %1947
    %v1950 = vadd.f32 %v1940, %v1948
    %v1951 = vtanh.pop %v1950
    %1953 = vrot.lane.b32.xlu0 %v1951, 64
    %v1954 = vpop.permute.xlu0 %1953
    %v1956 = vmul.f32 %v1938, %v1954
    %1957 = vst.msk [vmem:[#allocation3 + $0x10] sm:$0xff] %vm568, %v1956
    %v1959 = vsel %vm568, %v1956, 0
    %1961 = vmatprep.subr.mxu0 %v1625
    %1962 = vmatpush1.msra.mxu0 %v1624
    %1963 = vmatprep.subr.mxu0 %v1627
    %1964 = vmatpush1.msra.mxu0 %v1626
    %1965 = vmatprep.subr.mxu0 %v1629
    %1966 = vmatpush1.msra.mxu0 %v1628
    %1967 = vmatprep.subr.mxu0 %v1631
    %1968 = vmatpush1.msra.mxu0 %v1630
    %1969 = vmatprep.subr.mxu0 %v1633
    %1970 = vmatpush1.msra.mxu0 %v1632
    %1971 = vmatprep.subr.mxu0 %v1635
    %1972 = vmatpush1.msra.mxu0 %v1634
    %1973 = vmatprep.subr.mxu0 %v1637
    %1974 = vmatpush1.msra.mxu0 %v1636
    %1975 = vmatprep.subr.mxu0 %v1639
    %1976 = vmatpush1.msra.mxu0 %v1638
    %1977 = vmatprep.subr.mxu0 0.0
    %1978 = vmatpush1.msra.mxu0 0.0
    %1979 = vmatprep.subr.mxu0 0.0
    %1980 = vmatpush1.msra.mxu0 0.0
    %1981 = vmatprep.subr.mxu0 0.0
    %1982 = vmatpush1.msra.mxu0 0.0
    %1983 = vmatprep.subr.mxu0 0.0
    %1984 = vmatpush1.msra.mxu0 0.0
    %1985 = vmatprep.subr.mxu0 0.0
    %1986 = vmatpush1.msra.mxu0 0.0
    %1987 = vmatprep.subr.mxu0 0.0
    %1988 = vmatpush1.msra.mxu0 0.0
    %1989 = vmatprep.subr.mxu0 0.0
    %1990 = vmatpush1.msra.mxu0 0.0
    %1991 = vmatprep.subr.mxu0 0.0
    %1992 = vmatpush1.msra.mxu0 0.0
    %1993 = vmatprep.subr.mxu0 0.0
    %1994 = vmatpush1.msra.mxu0 0.0
    %1995 = vmatprep.subr.mxu0 0.0
    %1996 = vmatpush1.msra.mxu0 0.0
    %1997 = vmatprep.subr.mxu0 0.0
    %1998 = vmatpush1.msra.mxu0 0.0
    %1999 = vmatprep.subr.mxu0 0.0
    %2000 = vmatpush1.msra.mxu0 0.0
    %2001 = vmatprep.subr.mxu0 0.0
    %2002 = vmatpush1.msra.mxu0 0.0
    %2003 = vmatprep.subr.mxu0 0.0
    %2004 = vmatpush1.msra.mxu0 0.0
    %2005 = vmatprep.subr.mxu0 0.0
    %2006 = vmatpush1.msra.mxu0 0.0
    %2007 = vmatprep.subr.mxu0 0.0
    %2008 = vmatpush1.msra.mxu0 0.0
    %2009 = vmatprep.subr.mxu0 0.0
    %2010 = vmatpush1.msra.mxu0 0.0
    %2011 = vmatprep.subr.mxu0 0.0
    %2012 = vmatpush1.msra.mxu0 0.0
    %2013 = vmatprep.subr.mxu0 0.0
    %2014 = vmatpush1.msra.mxu0 0.0
    %2015 = vmatprep.subr.mxu0 0.0
    %2016 = vmatpush1.msra.mxu0 0.0
    %2017 = vmatprep.subr.mxu0 0.0
    %2018 = vmatpush1.msra.mxu0 0.0
    %2019 = vmatprep.subr.mxu0 0.0
    %2020 = vmatpush1.msra.mxu0 0.0
    %2021 = vmatprep.subr.mxu0 0.0
    %2022 = vmatpush1.msra.mxu0 0.0
    %2023 = vmatprep.subr.mxu0 0.0
    %2024 = vmatpush1.msra.mxu0 0.0
    %2025 = vmatprep.mubr.f32.mxu0 0.0
    %2026 = vmatmul.mubr.f32.gmra.mrb[0].mxu0 %v1959
    %v2027 = vpop.f32.mrb[0].mxu0
    %v2028 = vadd.f32 0.0, %v2027
    %v2029 = vpop.f32.mrb[0].mxu0
    %v2030 = vadd.f32 0.0, %v2029
    %2031 = vdwg.mxu0
    %v2032 = vadd.f32 %v1614, %v2028
    %v2033 = vadd.f32 %v1615, %v2030
    %v2034 = vxor.u32 %v2032, 2147483648
    %v2035 = vxor.u32 %v2033, 2147483648
    %v2036 = vmul.f32 %v2034, 1.442695
    %v2037 = vpow.pop %v2036
    %v2038 = vmul.f32 %v2035, 1.442695
    %v2039 = vpow.pop %v2038
    %v2040 = vadd.f32 %v2037, 1.0
    %v2041 = vadd.f32 %v2039, 1.0
    %v2042 = vrcp.pop %v2040
    %v2043 = vmul.f32 1.0, %v2042
    %v2044 = vrcp.pop %v2041
    %v2045 = vmul.f32 1.0, %v2044
    %v2046 = vtanh.pop %v2033
    %v2047 = vmul.f32 %v2043, %v1950
    %2049 = vrot.lane.b32.xlu0 %v2046, 64
    %v2050 = vpop.permute.xlu0 %2049
    %v2052 = vmul.f32 %v2043, %v2050
    %2054 = vrot.lane.b32.xlu0 %v2052, 64
    %v2055 = vpop.permute.xlu0 %2054
    %v2057 = vadd.f32 %v2047, %v2055
    %v2058 = vtanh.pop %v2057
    %2060 = vrot.lane.b32.xlu0 %v2058, 64
    %v2061 = vpop.permute.xlu0 %2060
    %v2063 = vmul.f32 %v2045, %v2061
    %2064 = vst.msk [vmem:[#allocation3 + $0x18] sm:$0xff] %vm568, %v2063
    %v2066 = vsel %vm568, %v2063, 0
    %2068 = vmatprep.subr.mxu0 %v1625
    %2069 = vmatpush1.msra.mxu0 %v1624
    %2070 = vmatprep.subr.mxu0 %v1627
    %2071 = vmatpush1.msra.mxu0 %v1626
    %2072 = vmatprep.subr.mxu0 %v1629
    %2073 = vmatpush1.msra.mxu0 %v1628
    %2074 = vmatprep.subr.mxu0 %v1631
    %2075 = vmatpush1.msra.mxu0 %v1630
    %2076 = vmatprep.subr.mxu0 %v1633
    %2077 = vmatpush1.msra.mxu0 %v1632
    %2078 = vmatprep.subr.mxu0 %v1635
    %2079 = vmatpush1.msra.mxu0 %v1634
    %2080 = vmatprep.subr.mxu0 %v1637
    %2081 = vmatpush1.msra.mxu0 %v1636
    %2082 = vmatprep.subr.mxu0 %v1639
    %2083 = vmatpush1.msra.mxu0 %v1638
    %2084 = vmatprep.subr.mxu0 0.0
    %2085 = vmatpush1.msra.mxu0 0.0
    %2086 = vmatprep.subr.mxu0 0.0
    %2087 = vmatpush1.msra.mxu0 0.0
    %2088 = vmatprep.subr.mxu0 0.0
    %2089 = vmatpush1.msra.mxu0 0.0
    %2090 = vmatprep.subr.mxu0 0.0
    %2091 = vmatpush1.msra.mxu0 0.0
    %2092 = vmatprep.subr.mxu0 0.0
    %2093 = vmatpush1.msra.mxu0 0.0
    %2094 = vmatprep.subr.mxu0 0.0
    %2095 = vmatpush1.msra.mxu0 0.0
    %2096 = vmatprep.subr.mxu0 0.0
    %2097 = vmatpush1.msra.mxu0 0.0
    %2098 = vmatprep.subr.mxu0 0.0
    %2099 = vmatpush1.msra.mxu0 0.0
    %2100 = vmatprep.subr.mxu0 0.0
    %2101 = vmatpush1.msra.mxu0 0.0
    %2102 = vmatprep.subr.mxu0 0.0
    %2103 = vmatpush1.msra.mxu0 0.0
    %2104 = vmatprep.subr.mxu0 0.0
    %2105 = vmatpush1.msra.mxu0 0.0
    %2106 = vmatprep.subr.mxu0 0.0
    %2107 = vmatpush1.msra.mxu0 0.0
    %2108 = vmatprep.subr.mxu0 0.0
    %2109 = vmatpush1.msra.mxu0 0.0
    %2110 = vmatprep.subr.mxu0 0.0
    %2111 = vmatpush1.msra.mxu0 0.0
    %2112 = vmatprep.subr.mxu0 0.0
    %2113 = vmatpush1.msra.mxu0 0.0
    %2114 = vmatprep.subr.mxu0 0.0
    %2115 = vmatpush1.msra.mxu0 0.0
    %2116 = vmatprep.subr.mxu0 0.0
    %2117 = vmatpush1.msra.mxu0 0.0
    %2118 = vmatprep.subr.mxu0 0.0
    %2119 = vmatpush1.msra.mxu0 0.0
    %2120 = vmatprep.subr.mxu0 0.0
    %2121 = vmatpush1.msra.mxu0 0.0
    %2122 = vmatprep.subr.mxu0 0.0
    %2123 = vmatpush1.msra.mxu0 0.0
    %2124 = vmatprep.subr.mxu0 0.0
    %2125 = vmatpush1.msra.mxu0 0.0
    %2126 = vmatprep.subr.mxu0 0.0
    %2127 = vmatpush1.msra.mxu0 0.0
    %2128 = vmatprep.subr.mxu0 0.0
    %2129 = vmatpush1.msra.mxu0 0.0
    %2130 = vmatprep.subr.mxu0 0.0
    %2131 = vmatpush1.msra.mxu0 0.0
    %2132 = vmatprep.mubr.f32.mxu0 0.0
    %2133 = vmatmul.mubr.f32.gmra.mrb[0].mxu0 %v2066
    %v2134 = vpop.f32.mrb[0].mxu0
    %v2135 = vadd.f32 0.0, %v2134
    %v2136 = vpop.f32.mrb[0].mxu0
    %v2137 = vadd.f32 0.0, %v2136
    %2138 = vdwg.mxu0
    %v2139 = vadd.f32 %v1616, %v2135
    %v2140 = vadd.f32 %v1617, %v2137
    %v2141 = vxor.u32 %v2139, 2147483648
    %v2142 = vxor.u32 %v2140, 2147483648
    %v2143 = vmul.f32 %v2141, 1.442695
    %v2144 = vpow.pop %v2143
    %v2145 = vmul.f32 %v2142, 1.442695
    %v2146 = vpow.pop %v2145
    %v2147 = vadd.f32 %v2144, 1.0
    %v2148 = vadd.f32 %v2146, 1.0
    %v2149 = vrcp.pop %v2147
    %v2150 = vmul.f32 1.0, %v2149
    %v2151 = vrcp.pop %v2148
    %v2152 = vmul.f32 1.0, %v2151
    %v2153 = vtanh.pop %v2140
    %v2154 = vmul.f32 %v2150, %v2057
    %2156 = vrot.lane.b32.xlu0 %v2153, 64
    %v2157 = vpop.permute.xlu0 %2156
    %v2159 = vmul.f32 %v2150, %v2157
    %2161 = vrot.lane.b32.xlu0 %v2159, 64
    %v2162 = vpop.permute.xlu0 %2161
    %v2164 = vadd.f32 %v2154, %v2162
    %v2165 = vtanh.pop %v2164
    %2167 = vrot.lane.b32.xlu0 %v2165, 64
    %v2168 = vpop.permute.xlu0 %2167
    %v2170 = vmul.f32 %v2152, %v2168
    %2171 = vst.msk [vmem:[#allocation3 + $0x20] sm:$0xff] %vm568, %v2170
    %v2173 = vsel %vm568, %v2170, 0
    %2175 = vmatprep.subr.mxu0 %v1625
    %2176 = vmatpush1.msra.mxu0 %v1624
    %2177 = vmatprep.subr.mxu0 %v1627
    %2178 = vmatpush1.msra.mxu0 %v1626
    %2179 = vmatprep.subr.mxu0 %v1629
    %2180 = vmatpush1.msra.mxu0 %v1628
    %2181 = vmatprep.subr.mxu0 %v1631
    %2182 = vmatpush1.msra.mxu0 %v1630
    %2183 = vmatprep.subr.mxu0 %v1633
    %2184 = vmatpush1.msra.mxu0 %v1632
    %2185 = vmatprep.subr.mxu0 %v1635
    %2186 = vmatpush1.msra.mxu0 %v1634
    %2187 = vmatprep.subr.mxu0 %v1637
    %2188 = vmatpush1.msra.mxu0 %v1636
    %2189 = vmatprep.subr.mxu0 %v1639
    %2190 = vmatpush1.msra.mxu0 %v1638
    %2191 = vmatprep.subr.mxu0 0.0
    %2192 = vmatpush1.msra.mxu0 0.0
    %2193 = vmatprep.subr.mxu0 0.0
    %2194 = vmatpush1.msra.mxu0 0.0
    %2195 = vmatprep.subr.mxu0 0.0
    %2196 = vmatpush1.msra.mxu0 0.0
    %2197 = vmatprep.subr.mxu0 0.0
    %2198 = vmatpush1.msra.mxu0 0.0
    %2199 = vmatprep.subr.mxu0 0.0
    %2200 = vmatpush1.msra.mxu0 0.0
    %2201 = vmatprep.subr.mxu0 0.0
    %2202 = vmatpush1.msra.mxu0 0.0
    %2203 = vmatprep.subr.mxu0 0.0
    %2204 = vmatpush1.msra.mxu0 0.0
    %2205 = vmatprep.subr.mxu0 0.0
    %2206 = vmatpush1.msra.mxu0 0.0
    %2207 = vmatprep.subr.mxu0 0.0
    %2208 = vmatpush1.msra.mxu0 0.0
    %2209 = vmatprep.subr.mxu0 0.0
    %2210 = vmatpush1.msra.mxu0 0.0
    %2211 = vmatprep.subr.mxu0 0.0
    %2212 = vmatpush1.msra.mxu0 0.0
    %2213 = vmatprep.subr.mxu0 0.0
    %2214 = vmatpush1.msra.mxu0 0.0
    %2215 = vmatprep.subr.mxu0 0.0
    %2216 = vmatpush1.msra.mxu0 0.0
    %2217 = vmatprep.subr.mxu0 0.0
    %2218 = vmatpush1.msra.mxu0 0.0
    %2219 = vmatprep.subr.mxu0 0.0
    %2220 = vmatpush1.msra.mxu0 0.0
    %2221 = vmatprep.subr.mxu0 0.0
    %2222 = vmatpush1.msra.mxu0 0.0
    %2223 = vmatprep.subr.mxu0 0.0
    %2224 = vmatpush1.msra.mxu0 0.0
    %2225 = vmatprep.subr.mxu0 0.0
    %2226 = vmatpush1.msra.mxu0 0.0
    %2227 = vmatprep.subr.mxu0 0.0
    %2228 = vmatpush1.msra.mxu0 0.0
    %2229 = vmatprep.subr.mxu0 0.0
    %2230 = vmatpush1.msra.mxu0 0.0
    %2231 = vmatprep.subr.mxu0 0.0
    %2232 = vmatpush1.msra.mxu0 0.0
    %2233 = vmatprep.subr.mxu0 0.0
    %2234 = vmatpush1.msra.mxu0 0.0
    %2235 = vmatprep.subr.mxu0 0.0
    %2236 = vmatpush1.msra.mxu0 0.0
    %2237 = vmatprep.subr.mxu0 0.0
    %2238 = vmatpush1.msra.mxu0 0.0
    %2239 = vmatprep.mubr.f32.mxu0 0.0
    %2240 = vmatmul.mubr.f32.gmra.mrb[0].mxu0 %v2173
    %v2241 = vpop.f32.mrb[0].mxu0
    %v2242 = vadd.f32 0.0, %v2241
    %v2243 = vpop.f32.mrb[0].mxu0
    %v2244 = vadd.f32 0.0, %v2243
    %2245 = vdwg.mxu0
    %v2246 = vadd.f32 %v1618, %v2242
    %v2247 = vadd.f32 %v1619, %v2244
    %v2248 = vxor.u32 %v2246, 2147483648
    %v2249 = vxor.u32 %v2247, 2147483648
    %v2250 = vmul.f32 %v2248, 1.442695
    %v2251 = vpow.pop %v2250
    %v2252 = vmul.f32 %v2249, 1.442695
    %v2253 = vpow.pop %v2252
    %v2254 = vadd.f32 %v2251, 1.0
    %v2255 = vadd.f32 %v2253, 1.0
    %v2256 = vrcp.pop %v2254
    %v2257 = vmul.f32 1.0, %v2256
    %v2258 = vrcp.pop %v2255
    %v2259 = vmul.f32 1.0, %v2258
    %v2260 = vtanh.pop %v2247
    %v2261 = vmul.f32 %v2257, %v2164
    %2263 = vrot.lane.b32.xlu0 %v2260, 64
    %v2264 = vpop.permute.xlu0 %2263
    %v2266 = vmul.f32 %v2257, %v2264
    %2268 = vrot.lane.b32.xlu0 %v2266, 64
    %v2269 = vpop.permute.xlu0 %2268
    %v2271 = vadd.f32 %v2261, %v2269
    %v2272 = vtanh.pop %v2271
    %2274 = vrot.lane.b32.xlu0 %v2272, 64
    %v2275 = vpop.permute.xlu0 %2274
    %v2277 = vmul.f32 %v2259, %v2275
    %2278 = vst.msk [vmem:[#allocation3 + $0x28] sm:$0xff] %vm568, %v2277
    %v2280 = vsel %vm568, %v2277, 0
    %2282 = vmatprep.subr.mxu0 %v1625
    %2283 = vmatpush1.msra.mxu0 %v1624
    %2284 = vmatprep.subr.mxu0 %v1627
    %2285 = vmatpush1.msra.mxu0 %v1626
    %2286 = vmatprep.subr.mxu0 %v1629
    %2287 = vmatpush1.msra.mxu0 %v1628
    %2288 = vmatprep.subr.mxu0 %v1631
    %2289 = vmatpush1.msra.mxu0 %v1630
    %2290 = vmatprep.subr.mxu0 %v1633
    %2291 = vmatpush1.msra.mxu0 %v1632
    %2292 = vmatprep.subr.mxu0 %v1635
    %2293 = vmatpush1.msra.mxu0 %v1634
    %2294 = vmatprep.subr.mxu0 %v1637
    %2295 = vmatpush1.msra.mxu0 %v1636
    %2296 = vmatprep.subr.mxu0 %v1639
    %2297 = vmatpush1.msra.mxu0 %v1638
    %2298 = vmatprep.subr.mxu0 0.0
    %2299 = vmatpush1.msra.mxu0 0.0
    %2300 = vmatprep.subr.mxu0 0.0
    %2301 = vmatpush1.msra.mxu0 0.0
    %2302 = vmatprep.subr.mxu0 0.0
    %2303 = vmatpush1.msra.mxu0 0.0
    %2304 = vmatprep.subr.mxu0 0.0
    %2305 = vmatpush1.msra.mxu0 0.0
    %2306 = vmatprep.subr.mxu0 0.0
    %2307 = vmatpush1.msra.mxu0 0.0
    %2308 = vmatprep.subr.mxu0 0.0
    %2309 = vmatpush1.msra.mxu0 0.0
    %2310 = vmatprep.subr.mxu0 0.0
    %2311 = vmatpush1.msra.mxu0 0.0
    %2312 = vmatprep.subr.mxu0 0.0
    %2313 = vmatpush1.msra.mxu0 0.0
    %2314 = vmatprep.subr.mxu0 0.0
    %2315 = vmatpush1.msra.mxu0 0.0
    %2316 = vmatprep.subr.mxu0 0.0
    %2317 = vmatpush1.msra.mxu0 0.0
    %2318 = vmatprep.subr.mxu0 0.0
    %2319 = vmatpush1.msra.mxu0 0.0
    %2320 = vmatprep.subr.mxu0 0.0
    %2321 = vmatpush1.msra.mxu0 0.0
    %2322 = vmatprep.subr.mxu0 0.0
    %2323 = vmatpush1.msra.mxu0 0.0
    %2324 = vmatprep.subr.mxu0 0.0
    %2325 = vmatpush1.msra.mxu0 0.0
    %2326 = vmatprep.subr.mxu0 0.0
    %2327 = vmatpush1.msra.mxu0 0.0
    %2328 = vmatprep.subr.mxu0 0.0
    %2329 = vmatpush1.msra.mxu0 0.0
    %2330 = vmatprep.subr.mxu0 0.0
    %2331 = vmatpush1.msra.mxu0 0.0
    %2332 = vmatprep.subr.mxu0 0.0
    %2333 = vmatpush1.msra.mxu0 0.0
    %2334 = vmatprep.subr.mxu0 0.0
    %2335 = vmatpush1.msra.mxu0 0.0
    %2336 = vmatprep.subr.mxu0 0.0
    %2337 = vmatpush1.msra.mxu0 0.0
    %2338 = vmatprep.subr.mxu0 0.0
    %2339 = vmatpush1.msra.mxu0 0.0
    %2340 = vmatprep.subr.mxu0 0.0
    %2341 = vmatpush1.msra.mxu0 0.0
    %2342 = vmatprep.subr.mxu0 0.0
    %2343 = vmatpush1.msra.mxu0 0.0
    %2344 = vmatprep.subr.mxu0 0.0
    %2345 = vmatpush1.msra.mxu0 0.0
    %2346 = vmatprep.mubr.f32.mxu0 0.0
    %2347 = vmatmul.mubr.f32.gmra.mrb[0].mxu0 %v2280
    %v2348 = vpop.f32.mrb[0].mxu0
    %v2349 = vadd.f32 0.0, %v2348
    %v2350 = vpop.f32.mrb[0].mxu0
    %v2351 = vadd.f32 0.0, %v2350
    %2352 = vdwg.mxu0
    %v2353 = vadd.f32 %v1620, %v2349
    %v2354 = vadd.f32 %v1621, %v2351
    %v2355 = vxor.u32 %v2353, 2147483648
    %v2356 = vxor.u32 %v2354, 2147483648
    %v2357 = vmul.f32 %v2355, 1.442695
    %v2358 = vpow.pop %v2357
    %v2359 = vmul.f32 %v2356, 1.442695
    %v2360 = vpow.pop %v2359
    %v2361 = vadd.f32 %v2358, 1.0
    %v2362 = vadd.f32 %v2360, 1.0
    %v2363 = vrcp.pop %v2361
    %v2364 = vmul.f32 1.0, %v2363
    %v2365 = vrcp.pop %v2362
    %v2366 = vmul.f32 1.0, %v2365
    %v2367 = vtanh.pop %v2354
    %v2368 = vmul.f32 %v2364, %v2271
    %2370 = vrot.lane.b32.xlu0 %v2367, 64
    %v2371 = vpop.permute.xlu0 %2370
    %v2373 = vmul.f32 %v2364, %v2371
    %2375 = vrot.lane.b32.xlu0 %v2373, 64
    %v2376 = vpop.permute.xlu0 %2375
    %v2378 = vadd.f32 %v2368, %v2376
    %v2379 = vtanh.pop %v2378
    %2381 = vrot.lane.b32.xlu0 %v2379, 64
    %v2382 = vpop.permute.xlu0 %2381
    %v2384 = vmul.f32 %v2366, %v2382
    %2385 = vst.msk [vmem:[#allocation3 + $0x30] sm:$0xff] %vm568, %v2384
    %v2387 = vsel %vm568, %v2384, 0
    %2389 = vmatprep.subr.mxu0 %v1625
    %2390 = vmatpush1.msra.mxu0 %v1624
    %2391 = vmatprep.subr.mxu0 %v1627
    %2392 = vmatpush1.msra.mxu0 %v1626
    %2393 = vmatprep.subr.mxu0 %v1629
    %2394 = vmatpush1.msra.mxu0 %v1628
    %2395 = vmatprep.subr.mxu0 %v1631
    %2396 = vmatpush1.msra.mxu0 %v1630
    %2397 = vmatprep.subr.mxu0 %v1633
    %2398 = vmatpush1.msra.mxu0 %v1632
    %2399 = vmatprep.subr.mxu0 %v1635
    %2400 = vmatpush1.msra.mxu0 %v1634
    %2401 = vmatprep.subr.mxu0 %v1637
    %2402 = vmatpush1.msra.mxu0 %v1636
    %2403 = vmatprep.subr.mxu0 %v1639
    %2404 = vmatpush1.msra.mxu0 %v1638
    %2405 = vmatprep.subr.mxu0 0.0
    %2406 = vmatpush1.msra.mxu0 0.0
    %2407 = vmatprep.subr.mxu0 0.0
    %2408 = vmatpush1.msra.mxu0 0.0
    %2409 = vmatprep.subr.mxu0 0.0
    %2410 = vmatpush1.msra.mxu0 0.0
    %2411 = vmatprep.subr.mxu0 0.0
    %2412 = vmatpush1.msra.mxu0 0.0
    %2413 = vmatprep.subr.mxu0 0.0
    %2414 = vmatpush1.msra.mxu0 0.0
    %2415 = vmatprep.subr.mxu0 0.0
    %2416 = vmatpush1.msra.mxu0 0.0
    %2417 = vmatprep.subr.mxu0 0.0
    %2418 = vmatpush1.msra.mxu0 0.0
    %2419 = vmatprep.subr.mxu0 0.0
    %2420 = vmatpush1.msra.mxu0 0.0
    %2421 = vmatprep.subr.mxu0 0.0
    %2422 = vmatpush1.msra.mxu0 0.0
    %2423 = vmatprep.subr.mxu0 0.0
    %2424 = vmatpush1.msra.mxu0 0.0
    %2425 = vmatprep.subr.mxu0 0.0
    %2426 = vmatpush1.msra.mxu0 0.0
    %2427 = vmatprep.subr.mxu0 0.0
    %2428 = vmatpush1.msra.mxu0 0.0
    %2429 = vmatprep.subr.mxu0 0.0
    %2430 = vmatpush1.msra.mxu0 0.0
    %2431 = vmatprep.subr.mxu0 0.0
    %2432 = vmatpush1.msra.mxu0 0.0
    %2433 = vmatprep.subr.mxu0 0.0
    %2434 = vmatpush1.msra.mxu0 0.0
    %2435 = vmatprep.subr.mxu0 0.0
    %2436 = vmatpush1.msra.mxu0 0.0
    %2437 = vmatprep.subr.mxu0 0.0
    %2438 = vmatpush1.msra.mxu0 0.0
    %2439 = vmatprep.subr.mxu0 0.0
    %2440 = vmatpush1.msra.mxu0 0.0
    %2441 = vmatprep.subr.mxu0 0.0
    %2442 = vmatpush1.msra.mxu0 0.0
    %2443 = vmatprep.subr.mxu0 0.0
    %2444 = vmatpush1.msra.mxu0 0.0
    %2445 = vmatprep.subr.mxu0 0.0
    %2446 = vmatpush1.msra.mxu0 0.0
    %2447 = vmatprep.subr.mxu0 0.0
    %2448 = vmatpush1.msra.mxu0 0.0
    %2449 = vmatprep.subr.mxu0 0.0
    %2450 = vmatpush1.msra.mxu0 0.0
    %2451 = vmatprep.subr.mxu0 0.0
    %2452 = vmatpush1.msra.mxu0 0.0
    %2453 = vmatprep.mubr.f32.mxu0 0.0
    %2454 = vmatmul.mubr.f32.gmra.mrb[0].mxu0 %v2387
    %v2455 = vpop.f32.mrb[0].mxu0
    %v2456 = vadd.f32 0.0, %v2455
    %v2457 = vpop.f32.mrb[0].mxu0
    %v2458 = vadd.f32 0.0, %v2457
    %2459 = vdwg.mxu0
    %v2460 = vadd.f32 %v1622, %v2456
    %v2461 = vadd.f32 %v1623, %v2458
    %v2462 = vxor.u32 %v2460, 2147483648
    %v2463 = vxor.u32 %v2461, 2147483648
    %v2464 = vmul.f32 %v2462, 1.442695
    %v2465 = vpow.pop %v2464
    %v2466 = vmul.f32 %v2463, 1.442695
    %v2467 = vpow.pop %v2466
    %v2468 = vadd.f32 %v2465, 1.0
    %v2469 = vadd.f32 %v2467, 1.0
    %v2470 = vrcp.pop %v2468
    %v2471 = vmul.f32 1.0, %v2470
    %v2472 = vrcp.pop %v2469
    %v2473 = vmul.f32 1.0, %v2472
    %v2474 = vtanh.pop %v2461
    %v2475 = vmul.f32 %v2471, %v2378
    %2477 = vrot.lane.b32.xlu0 %v2474, 64
    %v2478 = vpop.permute.xlu0 %2477
    %v2480 = vmul.f32 %v2471, %v2478
    %2482 = vrot.lane.b32.xlu0 %v2480, 64
    %v2483 = vpop.permute.xlu0 %2482
    %v2485 = vadd.f32 %v2475, %v2483
    %v2486 = vtanh.pop %v2485
    %2488 = vrot.lane.b32.xlu0 %v2486, 64
    %v2489 = vpop.permute.xlu0 %2488
    %v2491 = vmul.f32 %v2473, %v2489
    %2492 = vst.msk [vmem:[#allocation3 + $0x38] sm:$0xff] %vm568, %v2491
    %v2493 = vld [vmem:[#allocation3] sm:$0xff]
    %v2494 = vld [vmem:[#allocation3 + $0x8] sm:$0xff]
    %v2495 = vld [vmem:[#allocation3 + $0x10] sm:$0xff]
    %v2496 = vld [vmem:[#allocation3 + $0x18] sm:$0xff]
    %v2497 = vld [vmem:[#allocation3 + $0x20] sm:$0xff]
    %v2498 = vld [vmem:[#allocation3 + $0x28] sm:$0xff]
    %v2499 = vld [vmem:[#allocation3 + $0x30] sm:$0xff]
    %v2500 = vld [vmem:[#allocation3 + $0x38] sm:$0xff]
    %v2501 = vsel %vm1434, %v2493, %v2500
    %v2502 = vsel %vm1434, %v2494, %v2499
    %v2503 = vsel %vm1434, %v2495, %v2498
    %v2504 = vsel %vm1434, %v2496, %v2497
    %v2505 = vsel %vm1434, %v2497, %v2496
    %v2506 = vsel %vm1434, %v2498, %v2495
    %v2507 = vsel %vm1434, %v2499, %v2494
    %v2508 = vsel %vm1434, %v2500, %v2493
    %v2509 = vsel %vm568, %v2501, 0.0
    %2510 = vadd.xlane.f32.xlu0 %v2509
    %v2511 = vpop.xlane.xlu0 %2510
    %v2512 = vsel %vm568, %v2502, 0.0
    %2513 = vadd.xlane.f32.xlu0 %v2512
    %v2514 = vpop.xlane.xlu0 %2513
    %v2515 = vsel %vm568, %v2503, 0.0
    %2516 = vadd.xlane.f32.xlu0 %v2515
    %v2517 = vpop.xlane.xlu0 %2516
    %v2518 = vsel %vm568, %v2504, 0.0
    %2519 = vadd.xlane.f32.xlu0 %v2518
    %v2520 = vpop.xlane.xlu0 %2519
    %v2521 = vsel %vm568, %v2505, 0.0
    %2522 = vadd.xlane.f32.xlu0 %v2521
    %v2523 = vpop.xlane.xlu0 %2522
    %v2524 = vsel %vm568, %v2506, 0.0
    %2525 = vadd.xlane.f32.xlu0 %v2524
    %v2526 = vpop.xlane.xlu0 %2525
    %v2527 = vsel %vm568, %v2507, 0.0
    %2528 = vadd.xlane.f32.xlu0 %v2527
    %v2529 = vpop.xlane.xlu0 %2528
    %v2530 = vsel %vm568, %v2508, 0.0
    %2531 = vadd.xlane.f32.xlu0 %v2530
    %v2532 = vpop.xlane.xlu0 %2531
    %v2533 = vrcp.pop 64.0
    %v2534 = vmul.f32 %v2511, %v2533
    %v2535 = vmul.f32 %v2514, %v2533
    %v2536 = vmul.f32 %v2517, %v2533
    %v2537 = vmul.f32 %v2520, %v2533
    %v2538 = vmul.f32 %v2523, %v2533
    %v2539 = vmul.f32 %v2526, %v2533
    %v2540 = vmul.f32 %v2529, %v2533
    %v2541 = vmul.f32 %v2532, %v2533
    %v2542 = vsub.f32 %v2501, %v2534
    %v2543 = vsub.f32 %v2502, %v2535
    %v2544 = vsub.f32 %v2503, %v2536
    %v2545 = vsub.f32 %v2504, %v2537
    %v2546 = vsub.f32 %v2505, %v2538
    %v2547 = vsub.f32 %v2506, %v2539
    %v2548 = vsub.f32 %v2507, %v2540
    %v2549 = vsub.f32 %v2508, %v2541
    %v2550 = vmul.f32 %v2542, %v2542
    %v2551 = vmul.f32 %v2543, %v2543
    %v2552 = vmul.f32 %v2544, %v2544
    %v2553 = vmul.f32 %v2545, %v2545
    %v2554 = vmul.f32 %v2546, %v2546
    %v2555 = vmul.f32 %v2547, %v2547
    %v2556 = vmul.f32 %v2548, %v2548
    %v2557 = vmul.f32 %v2549, %v2549
    %v2558 = vsel %vm568, %v2550, 0.0
    %2559 = vadd.xlane.f32.xlu0 %v2558
    %v2560 = vpop.xlane.xlu0 %2559
    %v2561 = vsel %vm568, %v2551, 0.0
    %2562 = vadd.xlane.f32.xlu0 %v2561
    %v2563 = vpop.xlane.xlu0 %2562
    %v2564 = vsel %vm568, %v2552, 0.0
    %2565 = vadd.xlane.f32.xlu0 %v2564
    %v2566 = vpop.xlane.xlu0 %2565
    %v2567 = vsel %vm568, %v2553, 0.0
    %2568 = vadd.xlane.f32.xlu0 %v2567
    %v2569 = vpop.xlane.xlu0 %2568
    %v2570 = vsel %vm568, %v2554, 0.0
    %2571 = vadd.xlane.f32.xlu0 %v2570
    %v2572 = vpop.xlane.xlu0 %2571
    %v2573 = vsel %vm568, %v2555, 0.0
    %2574 = vadd.xlane.f32.xlu0 %v2573
    %v2575 = vpop.xlane.xlu0 %2574
    %v2576 = vsel %vm568, %v2556, 0.0
    %2577 = vadd.xlane.f32.xlu0 %v2576
    %v2578 = vpop.xlane.xlu0 %2577
    %v2579 = vsel %vm568, %v2557, 0.0
    %2580 = vadd.xlane.f32.xlu0 %v2579
    %v2581 = vpop.xlane.xlu0 %2580
    %v2582 = vmul.f32 %v2560, %v2533
    %v2583 = vmul.f32 %v2563, %v2533
    %v2584 = vmul.f32 %v2566, %v2533
    %v2585 = vmul.f32 %v2569, %v2533
    %v2586 = vmul.f32 %v2572, %v2533
    %v2587 = vmul.f32 %v2575, %v2533
    %v2588 = vmul.f32 %v2578, %v2533
    %v2589 = vmul.f32 %v2581, %v2533
    %v2590 = vadd.f32 %v2582, 1e-05
    %v2591 = vadd.f32 %v2583, 1e-05
    %v2592 = vadd.f32 %v2584, 1e-05
    %v2593 = vadd.f32 %v2585, 1e-05
    %v2594 = vadd.f32 %v2586, 1e-05
    %v2595 = vadd.f32 %v2587, 1e-05
    %v2596 = vadd.f32 %v2588, 1e-05
    %v2597 = vadd.f32 %v2589, 1e-05
    %v2598 = vrsqrt.pop %v2590
    %v2599 = vrsqrt.pop %v2591
    %v2600 = vrsqrt.pop %v2592
    %v2601 = vrsqrt.pop %v2593
    %v2602 = vrsqrt.pop %v2594
    %v2603 = vrsqrt.pop %v2595
    %v2604 = vrsqrt.pop %v2596
    %v2605 = vrsqrt.pop %v2597
    %v2606 = vmul.f32 %v2542, %v2598
    %v2607 = vmul.f32 %v2543, %v2599
    %v2608 = vmul.f32 %v2544, %v2600
    %v2609 = vmul.f32 %v2545, %v2601
    %v2610 = vmul.f32 %v2546, %v2602
    %v2611 = vmul.f32 %v2547, %v2603
    %v2612 = vmul.f32 %v2548, %v2604
    %v2613 = vmul.f32 %v2549, %v2605
    %v2614 = vld [vmem:[%s9] sm:$0x1]
    %v2616 = vlaneseq
    %v2617 = vshrl.u32 %v2616, 7
    %v2618 = vsub.s32 0, %v2617
    %v2619 = vrot.slane %v2614, %v2618
    %v2621 = vmul.f32 %v2606, %v2619
    %v2622 = vmul.f32 %v2607, %v2619
    %v2623 = vmul.f32 %v2608, %v2619
    %v2624 = vmul.f32 %v2609, %v2619
    %v2625 = vmul.f32 %v2610, %v2619
    %v2626 = vmul.f32 %v2611, %v2619
    %v2627 = vmul.f32 %v2612, %v2619
    %v2628 = vmul.f32 %v2613, %v2619
    %v2629 = vld [vmem:[%s10] sm:$0x1]
    %v2631 = vlaneseq
    %v2632 = vshrl.u32 %v2631, 7
    %v2633 = vsub.s32 0, %v2632
    %v2634 = vrot.slane %v2629, %v2633
    %v2636 = vadd.f32 %v2621, %v2634
    %v2637 = vadd.f32 %v2622, %v2634
    %v2638 = vadd.f32 %v2623, %v2634
    %v2639 = vadd.f32 %v2624, %v2634
    %v2640 = vadd.f32 %v2625, %v2634
    %v2641 = vadd.f32 %v2626, %v2634
    %v2642 = vadd.f32 %v2627, %v2634
    %v2643 = vadd.f32 %v2628, %v2634
    %v2644 = vld [vmem:[#allocation8] sm:$0xff]
    %v2645 = vld [vmem:[#allocation8 + $0x8] sm:$0xff]
    %v2646 = vld [vmem:[#allocation8 + $0x10] sm:$0xff]
    %v2647 = vld [vmem:[#allocation8 + $0x18] sm:$0xff]
    %v2648 = vld [vmem:[#allocation8 + $0x20] sm:$0xff]
    %v2649 = vld [vmem:[#allocation8 + $0x28] sm:$0xff]
    %v2650 = vld [vmem:[#allocation8 + $0x30] sm:$0xff]
    %v2651 = vld [vmem:[#allocation8 + $0x38] sm:$0xff]
    %v2652 = vld [vmem:[#allocation9] sm:$0x1]
    %v2654 = vlaneseq
    %v2655 = vshrl.u32 %v2654, 7
    %v2656 = vsub.s32 0, %v2655
    %v2657 = vrot.slane %v2652, %v2656
    %v2660 = vsel %vm568, %v2636, 0
    %v2663 = vsel %vm568, %v2637, 0
    %v2666 = vsel %vm568, %v2638, 0
    %v2669 = vsel %vm568, %v2639, 0
    %v2672 = vsel %vm568, %v2640, 0
    %v2675 = vsel %vm568, %v2641, 0
    %v2678 = vsel %vm568, %v2642, 0
    %v2681 = vsel %vm568, %v2643, 0
    %2683 = vmatprep.subr.mxu0 0.0
    %2684 = vmatpush1.msra.mxu0 %v2644
    %2685 = vmatprep.subr.mxu0 0.0
    %2686 = vmatpush1.msra.mxu0 %v2645
    %2687 = vmatprep.subr.mxu0 0.0
    %2688 = vmatpush1.msra.mxu0 %v2646
    %2689 = vmatprep.subr.mxu0 0.0
    %2690 = vmatpush1.msra.mxu0 %v2647
    %2691 = vmatprep.subr.mxu0 0.0
    %2692 = vmatpush1.msra.mxu0 %v2648
    %2693 = vmatprep.subr.mxu0 0.0
    %2694 = vmatpush1.msra.mxu0 %v2649
    %2695 = vmatprep.subr.mxu0 0.0
    %2696 = vmatpush1.msra.mxu0 %v2650
    %2697 = vmatprep.subr.mxu0 0.0
    %2698 = vmatpush1.msra.mxu0 %v2651
    %2699 = vmatprep.subr.mxu0 0.0
    %2700 = vmatpush1.msra.mxu0 0.0
    %2701 = vmatprep.subr.mxu0 0.0
    %2702 = vmatpush1.msra.mxu0 0.0
    %2703 = vmatprep.subr.mxu0 0.0
    %2704 = vmatpush1.msra.mxu0 0.0
    %2705 = vmatprep.subr.mxu0 0.0
    %2706 = vmatpush1.msra.mxu0 0.0
    %2707 = vmatprep.subr.mxu0 0.0
    %2708 = vmatpush1.msra.mxu0 0.0
    %2709 = vmatprep.subr.mxu0 0.0
    %2710 = vmatpush1.msra.mxu0 0.0
    %2711 = vmatprep.subr.mxu0 0.0
    %2712 = vmatpush1.msra.mxu0 0.0
    %2713 = vmatprep.subr.mxu0 0.0
    %2714 = vmatpush1.msra.mxu0 0.0
    %2715 = vmatprep.subr.mxu0 0.0
    %2716 = vmatpush1.msra.mxu0 0.0
    %2717 = vmatprep.subr.mxu0 0.0
    %2718 = vmatpush1.msra.mxu0 0.0
    %2719 = vmatprep.subr.mxu0 0.0
    %2720 = vmatpush1.msra.mxu0 0.0
    %2721 = vmatprep.subr.mxu0 0.0
    %2722 = vmatpush1.msra.mxu0 0.0
    %2723 = vmatprep.subr.mxu0 0.0
    %2724 = vmatpush1.msra.mxu0 0.0
    %2725 = vmatprep.subr.mxu0 0.0
    %2726 = vmatpush1.msra.mxu0 0.0
    %2727 = vmatprep.subr.mxu0 0.0
    %2728 = vmatpush1.msra.mxu0 0.0
    %2729 = vmatprep.subr.mxu0 0.0
    %2730 = vmatpush1.msra.mxu0 0.0
    %2731 = vmatprep.subr.mxu0 0.0
    %2732 = vmatpush1.msra.mxu0 0.0
    %2733 = vmatprep.subr.mxu0 0.0
    %2734 = vmatpush1.msra.mxu0 0.0
    %2735 = vmatprep.subr.mxu0 0.0
    %2736 = vmatpush1.msra.mxu0 0.0
    %2737 = vmatprep.subr.mxu0 0.0
    %2738 = vmatpush1.msra.mxu0 0.0
    %2739 = vmatprep.subr.mxu0 0.0
    %2740 = vmatpush1.msra.mxu0 0.0
    %2741 = vmatprep.subr.mxu0 0.0
    %2742 = vmatpush1.msra.mxu0 0.0
    %2743 = vmatprep.subr.mxu0 0.0
    %2744 = vmatpush1.msra.mxu0 0.0
    %2745 = vmatprep.subr.mxu0 0.0
    %2746 = vmatpush1.msra.mxu0 0.0
    %2747 = vmatprep.mubr.f32.mxu0 0.0
    %2748 = vmatmul.mubr.f32.gmra.mrb[0].mxu0 %v2660
    %v2749 = vpop.f32.mrb[0].mxu0
    %v2750 = vadd.f32 %v2657, %v2749
    %v2751 = vpop.f32.mrb[0].mxu0
    %2752 = vmatprep.mubr.f32.mxu0 0.0
    %2753 = vmatmul.mubr.f32.gmra.mrb[0].mxu0 %v2663
    %v2754 = vpop.f32.mrb[0].mxu0
    %v2755 = vadd.f32 %v2657, %v2754
    %v2756 = vpop.f32.mrb[0].mxu0
    %2757 = vmatprep.mubr.f32.mxu0 0.0
    %2758 = vmatmul.mubr.f32.gmra.mrb[0].mxu0 %v2666
    %v2759 = vpop.f32.mrb[0].mxu0
    %v2760 = vadd.f32 %v2657, %v2759
    %v2761 = vpop.f32.mrb[0].mxu0
    %2762 = vmatprep.mubr.f32.mxu0 0.0
    %2763 = vmatmul.mubr.f32.gmra.mrb[0].mxu0 %v2669
    %v2764 = vpop.f32.mrb[0].mxu0
    %v2765 = vadd.f32 %v2657, %v2764
    %v2766 = vpop.f32.mrb[0].mxu0
    %2767 = vmatprep.mubr.f32.mxu0 0.0
    %2768 = vmatmul.mubr.f32.gmra.mrb[0].mxu0 %v2672
    %v2769 = vpop.f32.mrb[0].mxu0
    %v2770 = vadd.f32 %v2657, %v2769
    %v2771 = vpop.f32.mrb[0].mxu0
    %2772 = vmatprep.mubr.f32.mxu0 0.0
    %2773 = vmatmul.mubr.f32.gmra.mrb[0].mxu0 %v2675
    %v2774 = vpop.f32.mrb[0].mxu0
    %v2775 = vadd.f32 %v2657, %v2774
    %v2776 = vpop.f32.mrb[0].mxu0
    %2777 = vmatprep.mubr.f32.mxu0 0.0
    %2778 = vmatmul.mubr.f32.gmra.mrb[0].mxu0 %v2678
    %v2779 = vpop.f32.mrb[0].mxu0
    %v2780 = vadd.f32 %v2657, %v2779
    %v2781 = vpop.f32.mrb[0].mxu0
    %2782 = vmatprep.mubr.f32.mxu0 0.0
    %2783 = vmatmul.mubr.f32.gmra.mrb[0].mxu0 %v2681
    %v2784 = vpop.f32.mrb[0].mxu0
    %v2785 = vadd.f32 %v2657, %v2784
    %v2786 = vpop.f32.mrb[0].mxu0
    %2787 = vdwg.mxu0
    %2788 = vst [vmem:[%s13] sm:$0xff] %v2750
    %2789 = vst [vmem:[%s13 + $0x8] sm:$0xff] %v2755
    %2790 = vst [vmem:[%s13 + $0x10] sm:$0xff] %v2760
    %2791 = vst [vmem:[%s13 + $0x18] sm:$0xff] %v2765
    %2792 = vst [vmem:[%s13 + $0x20] sm:$0xff] %v2770
    %2793 = vst [vmem:[%s13 + $0x28] sm:$0xff] %v2775
    %2794 = vst [vmem:[%s13 + $0x30] sm:$0xff] %v2780
    %2795 = vst [vmem:[%s13 + $0x38] sm:$0xff] %v2785
    // Predicated region
    $region70: #{model_forward.1} parent=1 // pred_check
      _
    $region71: #{model_forward.1} parent=1 // pred_check_branch
      %2797 = sbr.rel (0) target = $region73
    $region72: #{model_forward.1} parent=1 // pred_region
      _
    $region73: #{model_forward.1} parent=1 // pred_fallthru
      _
    // Predicated region
    $region74: #{model_forward.1} parent=1 // pred_check
      _
    $region75: #{model_forward.1} parent=1 // pred_check_branch
      %2799 = sbr.rel (0) target = $region77
    $region76: #{model_forward.1} parent=1 // pred_region
      _
    $region77: #{model_forward.1} parent=1 // pred_fallthru
      _
    %2800 = vsyncpa [#allocation5], 1
    %2801 = vsyncpa [#allocation7], 1
    %2802 = vsyncpa [#allocation10], 1

</llo_original>
